<compile_context>
chip_gen: v7x
topology: tpu7x:2x2x1
jax: 0.10.0
libtpu: 0.0.40
codegen_flags: <defaults>
</compile_context>

<pallas_src>
import math
import functools

import jax
import jax.numpy as jnp
from jax.experimental import pallas as pl
from jax.experimental.pallas import tpu as pltpu


def _layernorm(v, gamma, beta, eps=1e-5):
    mu = jnp.mean(v, axis=-1, keepdims=True)
    var = jnp.mean((v - mu) ** 2, axis=-1, keepdims=True)
    return (v - mu) * jax.lax.rsqrt(var + eps) * gamma + beta


def encoder_stack_kernel(num_heads, num_cells, batch, seq_len,
                         x_ref,        # (B*L, C)
                         wattn_ref,    # (NC, 4, C, C)   [Wq, Wk, Wv, Wo]
                         w1_ref,       # (NC, C, F)
                         w2_ref,       # (NC, F, C)
                         bias_ref,     # (NC, 9, C) [bq,bk,bv,bo,g1,be1,b2,g2,be2]
                         b1_ref,       # (NC, 1, F)
                         fin_ref,      # (2, C)  [final gamma; final beta]
                         o_ref):       # (B*L, C)
    H = num_heads
    B = batch
    L = seq_len

    y = x_ref[...]                     # (B*L, C)
    C = y.shape[-1]
    D = C // H
    scale = 1.0 / math.sqrt(D)

    for cell in range(num_cells):      # num_cells is small & static -> unrolled
        wq = wattn_ref[cell, 0]
        wk = wattn_ref[cell, 1]
        wv = wattn_ref[cell, 2]
        wo = wattn_ref[cell, 3]
        bvec = bias_ref[cell]          # (9, C)
        bq, bk, bv, bo = bvec[0:1], bvec[1:2], bvec[2:3], bvec[3:4]
        g1, be1 = bvec[4:5], bvec[5:6]
        b2 = bvec[6:7]
        g2, be2 = bvec[7:8], bvec[8:9]
        b1 = b1_ref[cell]              # (1, F)

        x_in = y

        # --- multi-head attention (QKV projections on the flattened batch) ---
        # 1/sqrt(D) folded into Q once.
        q = (jnp.dot(x_in, wq, preferred_element_type=jnp.float32) + bq) * scale
        k = jnp.dot(x_in, wk, preferred_element_type=jnp.float32) + bk
        v = jnp.dot(x_in, wv, preferred_element_type=jnp.float32) + bv

        # TODO(synk): optional attention mask (masked_fill) not exercised here (mask=None).

        z_rows = []
        for b in range(B):             # B is tiny & static
            rows = slice(b * L, (b + 1) * L)
            qh = jnp.stack([q[rows, h * D:(h + 1) * D] for h in range(H)], axis=0)
            kh = jnp.stack([k[rows, h * D:(h + 1) * D] for h in range(H)], axis=0)
            vh = jnp.stack([v[rows, h * D:(h + 1) * D] for h in range(H)], axis=0)

            # Batched per-head scores: (H, L, L)
            s = jnp.einsum('hld,hmd->hlm', qh, kh,
                           preferred_element_type=jnp.float32)

            # Softmax over the *head* axis (nn.Softmax(dim=1) in the reference).
            m = jnp.max(s, axis=0, keepdims=True)
            e = jnp.exp(s - m)
            a = e / jnp.sum(e, axis=0, keepdims=True)

            # Batched attention-weighted values: (H, L, D)
            zh = jnp.einsum('hlm,hmd->hld', a, vh,
                            preferred_element_type=jnp.float32)
            # (L, H*D) = concat over heads along channel
            z_rows.append(jnp.concatenate([zh[h] for h in range(H)], axis=1))

        z = jnp.concatenate(z_rows, axis=0)                      # (B*L, C)

        attn_out = jnp.dot(z, wo, preferred_element_type=jnp.float32) + bo

        # --- add & norm 1 (dropout = identity) ---
        y1 = _layernorm(attn_out + x_in, g1, be1)

        # --- feed-forward network ---
        hdn = jnp.maximum(
            jnp.dot(y1, w1_ref[cell], preferred_element_type=jnp.float32) + b1,
            0.0)
        ffn = jnp.dot(hdn, w2_ref[cell], preferred_element_type=jnp.float32) + b2

        # --- add & norm 2 + encoder-level residual: y = cell(y) + y ---
        y2 = _layernorm(ffn + y1, g2, be2)
        y = y2 + x_in

    # --- final LayerNorm of the encoder ---
    fin = fin_ref[...]                                           # (2, C)
    o_ref[...] = _layernorm(y, fin[0:1], fin[1:2])


def transformer_encoder(x, cell_params, final_gamma, final_beta, num_heads):
    """x: (B, L, C) float32.  cell_params: list of dicts with keys
    wq,bq,wk,bk,wv,bv,wo,bo,g1,be1,w1,b1,w2,b2,g2,be2 (weights as (in,out),
    vectors as (1,dim))."""
    B, L, C = x.shape
    NC = len(cell_params)
    F = cell_params[0]["w1"].shape[1]

    # Pack parameters into a few slabs (fewer DMA descriptors / BlockSpecs).
    w_attn = jnp.stack(
        [jnp.stack([p["wq"], p["wk"], p["wv"], p["wo"]], axis=0)
         for p in cell_params], axis=0)                          # (NC, 4, C, C)
    w1 = jnp.stack([p["w1"] for p in cell_params], axis=0)       # (NC, C, F)
    w2 = jnp.stack([p["w2"] for p in cell_params], axis=0)       # (NC, F, C)
    bias = jnp.stack(
        [jnp.concatenate([p["bq"], p["bk"], p["bv"], p["bo"],
                          p["g1"], p["be1"], p["b2"], p["g2"], p["be2"]],
                         axis=0)
         for p in cell_params], axis=0)                          # (NC, 9, C)
    b1 = jnp.stack([p["b1"] for p in cell_params], axis=0)       # (NC, 1, F)
    fin = jnp.concatenate([final_gamma, final_beta], axis=0)     # (2, C)

    x2d = x.reshape(B * L, C)

    kernel = functools.partial(encoder_stack_kernel, num_heads, NC, B, L)

    out2d = pl.pallas_call(
        kernel,
        out_shape=jax.ShapeDtypeStruct((B * L, C), jnp.float32),
        grid=(1,),
        in_specs=[
            pl.BlockSpec((B * L, C), lambda i: (0, 0)),
            pl.BlockSpec((NC, 4, C, C), lambda i: (0, 0, 0, 0)),
            pl.BlockSpec((NC, C, F), lambda i: (0, 0, 0)),
            pl.BlockSpec((NC, F, C), lambda i: (0, 0, 0)),
            pl.BlockSpec((NC, 9, C), lambda i: (0, 0, 0)),
            pl.BlockSpec((NC, 1, F), lambda i: (0, 0, 0)),
            pl.BlockSpec((2, C), lambda i: (0, 0)),
        ],
        out_specs=pl.BlockSpec((B * L, C), lambda i: (0, 0)),
        compiler_params=pltpu.CompilerParams(
            dimension_semantics=("arbitrary",)),
    )(x2d, w_attn, w1, w2, bias, b1, fin)

    return out2d.reshape(B, L, C)


if __name__ == "__main__":
    # Small shapes consistent with the module: input_dim=32, heads=4, ff=64, 2 cells.
    B, L, C = 2, 8, 32
    H, F, NUM_CELLS = 4, 64, 2

    key = jax.random.PRNGKey(0)
    key, xk = jax.random.split(key)
    x = jax.random.normal(xk, (B, L, C), jnp.float32)

    def init_linear(k, fin, fout):
        k1, k2 = jax.random.split(k)
        bound = 1.0 / math.sqrt(fin)
        w = jax.random.uniform(k1, (fin, fout), jnp.float32, -bound, bound)
        b = jax.random.uniform(k2, (1, fout), jnp.float32, -bound, bound)
        return w, b

    cell_params = []
    for _ in range(NUM_CELLS):
        key, *ks = jax.random.split(key, 7)
        p = {}
        p["wq"], p["bq"] = init_linear(ks[0], C, C)
        p["wk"], p["bk"] = init_linear(ks[1], C, C)
        p["wv"], p["bv"] = init_linear(ks[2], C, C)
        p["wo"], p["bo"] = init_linear(ks[3], C, C)
        p["w1"], p["b1"] = init_linear(ks[4], C, F)
        p["w2"], p["b2"] = init_linear(ks[5], F, C)
        # PyTorch LayerNorm default init: weight=1, bias=0
        p["g1"] = jnp.ones((1, C), jnp.float32)
        p["be1"] = jnp.zeros((1, C), jnp.float32)
        p["g2"] = jnp.ones((1, C), jnp.float32)
        p["be2"] = jnp.zeros((1, C), jnp.float32)
        cell_params.append(p)

    final_gamma = jnp.ones((1, C), jnp.float32)
    final_beta = jnp.zeros((1, C), jnp.float32)

    y = transformer_encoder(x, cell_params, final_gamma, final_beta, H)
    jax.block_until_ready(y)
    assert y.shape == (B, L, C) and y.dtype == jnp.float32
    assert bool(jnp.all(jnp.isfinite(y)))
    print("KERNEL_OK")
</pallas_src>

<mosaic_0001>
module attributes {stable_mosaic.version = 11 : i64} {
  func.func @encoder_stack_kernel(%arg0: i32, %arg1: memref<16x32xf32, #tpu.memory_space<vmem>>, %arg2: memref<2x4x32x32xf32, #tpu.memory_space<vmem>>, %arg3: memref<2x32x64xf32, #tpu.memory_space<vmem>>, %arg4: memref<2x64x32xf32, #tpu.memory_space<vmem>>, %arg5: memref<2x9x32xf32, #tpu.memory_space<vmem>>, %arg6: memref<2x1x64xf32, #tpu.memory_space<vmem>>, %arg7: memref<2x32xf32, #tpu.memory_space<vmem>>, %arg8: memref<16x32xf32, #tpu.memory_space<vmem>>) attributes {dimension_semantics = [#tpu.dimension_semantics<arbitrary>], iteration_bounds = array<i64: 1>, scalar_prefetch = 0 : i64, scratch_operands = 0 : i64, tpu.core_type = #tpu.core_type<tc>, window_params = [{pipeline_mode = #tpu.pipeline_mode<synchronous>, transform_indices = @transform_0, window_bounds = array<i64: 16, 32>}, {pipeline_mode = #tpu.pipeline_mode<synchronous>, transform_indices = @transform_1, window_bounds = array<i64: 2, 4, 32, 32>}, {pipeline_mode = #tpu.pipeline_mode<synchronous>, transform_indices = @transform_2, window_bounds = array<i64: 2, 32, 64>}, {pipeline_mode = #tpu.pipeline_mode<synchronous>, transform_indices = @transform_3, window_bounds = array<i64: 2, 64, 32>}, {pipeline_mode = #tpu.pipeline_mode<synchronous>, transform_indices = @transform_4, window_bounds = array<i64: 2, 9, 32>}, {pipeline_mode = #tpu.pipeline_mode<synchronous>, transform_indices = @transform_5, window_bounds = array<i64: 2, 1, 64>}, {pipeline_mode = #tpu.pipeline_mode<synchronous>, transform_indices = @transform_6, window_bounds = array<i64: 2, 32>}, {pipeline_mode = #tpu.pipeline_mode<synchronous>, transform_indices = @transform_7, window_bounds = array<i64: 16, 32>}]} {
    %c0 = arith.constant 0 : index
    %c0_0 = arith.constant 0 : index
    %0 = vector.load %arg1[%c0, %c0_0] : memref<16x32xf32, #tpu.memory_space<vmem>>, vector<16x32xf32>
    %c0_1 = arith.constant 0 : index
    %c0_2 = arith.constant 0 : index
    %c0_3 = arith.constant 0 : index
    %c0_4 = arith.constant 0 : index
    %1 = vector.load %arg2[%c0_1, %c0_2, %c0_3, %c0_4] : memref<2x4x32x32xf32, #tpu.memory_space<vmem>>, vector<1x1x32x32xf32>
    %2 = vector.shape_cast %1 : vector<1x1x32x32xf32> to vector<32x32xf32>
    %c0_5 = arith.constant 0 : index
    %c1 = arith.constant 1 : index
    %c0_6 = arith.constant 0 : index
    %c0_7 = arith.constant 0 : index
    %3 = vector.load %arg2[%c0_5, %c1, %c0_6, %c0_7] : memref<2x4x32x32xf32, #tpu.memory_space<vmem>>, vector<1x1x32x32xf32>
    %4 = vector.shape_cast %3 : vector<1x1x32x32xf32> to vector<32x32xf32>
    %c0_8 = arith.constant 0 : index
    %c2 = arith.constant 2 : index
    %c0_9 = arith.constant 0 : index
    %c0_10 = arith.constant 0 : index
    %5 = vector.load %arg2[%c0_8, %c2, %c0_9, %c0_10] : memref<2x4x32x32xf32, #tpu.memory_space<vmem>>, vector<1x1x32x32xf32>
    %6 = vector.shape_cast %5 : vector<1x1x32x32xf32> to vector<32x32xf32>
    %c0_11 = arith.constant 0 : index
    %c3 = arith.constant 3 : index
    %c0_12 = arith.constant 0 : index
    %c0_13 = arith.constant 0 : index
    %7 = vector.load %arg2[%c0_11, %c3, %c0_12, %c0_13] : memref<2x4x32x32xf32, #tpu.memory_space<vmem>>, vector<1x1x32x32xf32>
    %8 = vector.shape_cast %7 : vector<1x1x32x32xf32> to vector<32x32xf32>
    %c0_14 = arith.constant 0 : index
    %c0_15 = arith.constant 0 : index
    %c0_16 = arith.constant 0 : index
    %9 = vector.load %arg5[%c0_14, %c0_15, %c0_16] : memref<2x9x32xf32, #tpu.memory_space<vmem>>, vector<1x9x32xf32>
    %10 = vector.shape_cast %9 : vector<1x9x32xf32> to vector<9x32xf32>
    %11 = vector.extract_strided_slice %10 {offsets = [0, 0], sizes = [1, 32], strides = [1, 1]} : vector<9x32xf32> to vector<1x32xf32>
    %12 = vector.extract_strided_slice %10 {offsets = [1, 0], sizes = [1, 32], strides = [1, 1]} : vector<9x32xf32> to vector<1x32xf32>
    %13 = vector.extract_strided_slice %10 {offsets = [2, 0], sizes = [1, 32], strides = [1, 1]} : vector<9x32xf32> to vector<1x32xf32>
    %14 = vector.extract_strided_slice %10 {offsets = [3, 0], sizes = [1, 32], strides = [1, 1]} : vector<9x32xf32> to vector<1x32xf32>
    %15 = vector.extract_strided_slice %10 {offsets = [4, 0], sizes = [1, 32], strides = [1, 1]} : vector<9x32xf32> to vector<1x32xf32>
    %16 = vector.extract_strided_slice %10 {offsets = [5, 0], sizes = [1, 32], strides = [1, 1]} : vector<9x32xf32> to vector<1x32xf32>
    %17 = vector.extract_strided_slice %10 {offsets = [6, 0], sizes = [1, 32], strides = [1, 1]} : vector<9x32xf32> to vector<1x32xf32>
    %18 = vector.extract_strided_slice %10 {offsets = [7, 0], sizes = [1, 32], strides = [1, 1]} : vector<9x32xf32> to vector<1x32xf32>
    %19 = vector.extract_strided_slice %10 {offsets = [8, 0], sizes = [1, 32], strides = [1, 1]} : vector<9x32xf32> to vector<1x32xf32>
    %c0_17 = arith.constant 0 : index
    %c0_18 = arith.constant 0 : index
    %c0_19 = arith.constant 0 : index
    %20 = vector.load %arg6[%c0_17, %c0_18, %c0_19] : memref<2x1x64xf32, #tpu.memory_space<vmem>>, vector<1x1x64xf32>
    %21 = vector.shape_cast %20 : vector<1x1x64xf32> to vector<1x64xf32>
    %cst = arith.constant dense<0.000000e+00> : vector<16x32xf32>
    %22 = tpu.matmul %0, %2, %cst {dimension_numbers = #tpu.dot_dimension_numbers<[1], [0], [0], [1], [0, 0, 1, 1], [], []>} : vector<16x32xf32>, vector<32x32xf32>, vector<16x32xf32> -> vector<16x32xf32>
    %23 = vector.broadcast %11 : vector<1x32xf32> to vector<16x32xf32>
    %24 = arith.addf %22, %23 : vector<16x32xf32>
    %cst_20 = arith.constant 0.353553385 : f32
    %25 = vector.broadcast %cst_20 : f32 to vector<16x32xf32>
    %26 = arith.mulf %24, %25 : vector<16x32xf32>
    %cst_21 = arith.constant dense<0.000000e+00> : vector<16x32xf32>
    %27 = tpu.matmul %0, %4, %cst_21 {dimension_numbers = #tpu.dot_dimension_numbers<[1], [0], [0], [1], [0, 0, 1, 1], [], []>} : vector<16x32xf32>, vector<32x32xf32>, vector<16x32xf32> -> vector<16x32xf32>
    %28 = vector.broadcast %12 : vector<1x32xf32> to vector<16x32xf32>
    %29 = arith.addf %27, %28 : vector<16x32xf32>
    %cst_22 = arith.constant dense<0.000000e+00> : vector<16x32xf32>
    %30 = tpu.matmul %0, %6, %cst_22 {dimension_numbers = #tpu.dot_dimension_numbers<[1], [0], [0], [1], [0, 0, 1, 1], [], []>} : vector<16x32xf32>, vector<32x32xf32>, vector<16x32xf32> -> vector<16x32xf32>
    %31 = vector.broadcast %13 : vector<1x32xf32> to vector<16x32xf32>
    %32 = arith.addf %30, %31 : vector<16x32xf32>
    %33 = vector.extract_strided_slice %26 {offsets = [0, 0], sizes = [8, 8], strides = [1, 1]} : vector<16x32xf32> to vector<8x8xf32>
    %34 = vector.extract_strided_slice %26 {offsets = [0, 8], sizes = [8, 8], strides = [1, 1]} : vector<16x32xf32> to vector<8x8xf32>
    %35 = vector.extract_strided_slice %26 {offsets = [0, 16], sizes = [8, 8], strides = [1, 1]} : vector<16x32xf32> to vector<8x8xf32>
    %36 = vector.extract_strided_slice %26 {offsets = [0, 24], sizes = [8, 8], strides = [1, 1]} : vector<16x32xf32> to vector<8x8xf32>
    %37 = vector.shape_cast %33 : vector<8x8xf32> to vector<1x8x8xf32>
    %38 = vector.shape_cast %34 : vector<8x8xf32> to vector<1x8x8xf32>
    %39 = vector.shape_cast %35 : vector<8x8xf32> to vector<1x8x8xf32>
    %40 = vector.shape_cast %36 : vector<8x8xf32> to vector<1x8x8xf32>
    %41 = tpu.concatenate %37, %38, %39, %40 in 0 : vector<1x8x8xf32>, vector<1x8x8xf32>, vector<1x8x8xf32>, vector<1x8x8xf32> -> vector<4x8x8xf32>
    %42 = vector.extract_strided_slice %29 {offsets = [0, 0], sizes = [8, 8], strides = [1, 1]} : vector<16x32xf32> to vector<8x8xf32>
    %43 = vector.extract_strided_slice %29 {offsets = [0, 8], sizes = [8, 8], strides = [1, 1]} : vector<16x32xf32> to vector<8x8xf32>
    %44 = vector.extract_strided_slice %29 {offsets = [0, 16], sizes = [8, 8], strides = [1, 1]} : vector<16x32xf32> to vector<8x8xf32>
    %45 = vector.extract_strided_slice %29 {offsets = [0, 24], sizes = [8, 8], strides = [1, 1]} : vector<16x32xf32> to vector<8x8xf32>
    %46 = vector.shape_cast %42 : vector<8x8xf32> to vector<1x8x8xf32>
    %47 = vector.shape_cast %43 : vector<8x8xf32> to vector<1x8x8xf32>
    %48 = vector.shape_cast %44 : vector<8x8xf32> to vector<1x8x8xf32>
    %49 = vector.shape_cast %45 : vector<8x8xf32> to vector<1x8x8xf32>
    %50 = tpu.concatenate %46, %47, %48, %49 in 0 : vector<1x8x8xf32>, vector<1x8x8xf32>, vector<1x8x8xf32>, vector<1x8x8xf32> -> vector<4x8x8xf32>
    %51 = vector.extract_strided_slice %32 {offsets = [0, 0], sizes = [8, 8], strides = [1, 1]} : vector<16x32xf32> to vector<8x8xf32>
    %52 = vector.extract_strided_slice %32 {offsets = [0, 8], sizes = [8, 8], strides = [1, 1]} : vector<16x32xf32> to vector<8x8xf32>
    %53 = vector.extract_strided_slice %32 {offsets = [0, 16], sizes = [8, 8], strides = [1, 1]} : vector<16x32xf32> to vector<8x8xf32>
    %54 = vector.extract_strided_slice %32 {offsets = [0, 24], sizes = [8, 8], strides = [1, 1]} : vector<16x32xf32> to vector<8x8xf32>
    %55 = vector.shape_cast %51 : vector<8x8xf32> to vector<1x8x8xf32>
    %56 = vector.shape_cast %52 : vector<8x8xf32> to vector<1x8x8xf32>
    %57 = vector.shape_cast %53 : vector<8x8xf32> to vector<1x8x8xf32>
    %58 = vector.shape_cast %54 : vector<8x8xf32> to vector<1x8x8xf32>
    %59 = tpu.concatenate %55, %56, %57, %58 in 0 : vector<1x8x8xf32>, vector<1x8x8xf32>, vector<1x8x8xf32>, vector<1x8x8xf32> -> vector<4x8x8xf32>
    "tpu.trace_start"() <{level = 10 : i32, message = "hld,hmd->hlm"}> : () -> ()
    %cst_23 = arith.constant dense<0.000000e+00> : vector<4x8x8xf32>
    %60 = tpu.matmul %41, %50, %cst_23 {dimension_numbers = #tpu.dot_dimension_numbers<[2], [2], [1], [1], [0, 0, 0, 1, 1, 1], [0], [0]>} : vector<4x8x8xf32>, vector<4x8x8xf32>, vector<4x8x8xf32> -> vector<4x8x8xf32>
    "tpu.trace_stop"() : () -> ()
    %cst_24 = arith.constant dense<0xFF800000> : vector<8x8xf32>
    %61 = vector.multi_reduction <maximumf>, %60, %cst_24 [0] : vector<4x8x8xf32> to vector<8x8xf32>
    %62 = vector.shape_cast %61 : vector<8x8xf32> to vector<1x8x8xf32>
    %63 = vector.broadcast %62 : vector<1x8x8xf32> to vector<4x8x8xf32>
    %64 = arith.subf %60, %63 : vector<4x8x8xf32>
    %65 = math.exp %64 : vector<4x8x8xf32>
    %cst_25 = arith.constant dense<0.000000e+00> : vector<8x8xf32>
    %66 = vector.multi_reduction <add>, %65, %cst_25 [0] : vector<4x8x8xf32> to vector<8x8xf32>
    %67 = vector.shape_cast %66 : vector<8x8xf32> to vector<1x8x8xf32>
    %68 = vector.broadcast %67 : vector<1x8x8xf32> to vector<4x8x8xf32>
    %69 = arith.divf %65, %68 : vector<4x8x8xf32>
    "tpu.trace_start"() <{level = 10 : i32, message = "hlm,hmd->hld"}> : () -> ()
    %cst_26 = arith.constant dense<0.000000e+00> : vector<4x8x8xf32>
    %70 = tpu.matmul %69, %59, %cst_26 {dimension_numbers = #tpu.dot_dimension_numbers<[2], [1], [1], [2], [0, 0, 0, 1, 1, 2], [0], [0]>} : vector<4x8x8xf32>, vector<4x8x8xf32>, vector<4x8x8xf32> -> vector<4x8x8xf32>
    "tpu.trace_stop"() : () -> ()
    %71 = vector.extract_strided_slice %70 {offsets = [0, 0, 0], sizes = [1, 8, 8], strides = [1, 1, 1]} : vector<4x8x8xf32> to vector<1x8x8xf32>
    %72 = vector.shape_cast %71 : vector<1x8x8xf32> to vector<8x8xf32>
    %73 = vector.extract_strided_slice %70 {offsets = [1, 0, 0], sizes = [1, 8, 8], strides = [1, 1, 1]} : vector<4x8x8xf32> to vector<1x8x8xf32>
    %74 = vector.shape_cast %73 : vector<1x8x8xf32> to vector<8x8xf32>
    %75 = vector.extract_strided_slice %70 {offsets = [2, 0, 0], sizes = [1, 8, 8], strides = [1, 1, 1]} : vector<4x8x8xf32> to vector<1x8x8xf32>
    %76 = vector.shape_cast %75 : vector<1x8x8xf32> to vector<8x8xf32>
    %77 = vector.extract_strided_slice %70 {offsets = [3, 0, 0], sizes = [1, 8, 8], strides = [1, 1, 1]} : vector<4x8x8xf32> to vector<1x8x8xf32>
    %78 = vector.shape_cast %77 : vector<1x8x8xf32> to vector<8x8xf32>
    %79 = tpu.concatenate %72, %74, %76, %78 in 1 : vector<8x8xf32>, vector<8x8xf32>, vector<8x8xf32>, vector<8x8xf32> -> vector<8x32xf32>
    %80 = vector.extract_strided_slice %26 {offsets = [8, 0], sizes = [8, 8], strides = [1, 1]} : vector<16x32xf32> to vector<8x8xf32>
    %81 = vector.extract_strided_slice %26 {offsets = [8, 8], sizes = [8, 8], strides = [1, 1]} : vector<16x32xf32> to vector<8x8xf32>
    %82 = vector.extract_strided_slice %26 {offsets = [8, 16], sizes = [8, 8], strides = [1, 1]} : vector<16x32xf32> to vector<8x8xf32>
    %83 = vector.extract_strided_slice %26 {offsets = [8, 24], sizes = [8, 8], strides = [1, 1]} : vector<16x32xf32> to vector<8x8xf32>
    %84 = vector.shape_cast %80 : vector<8x8xf32> to vector<1x8x8xf32>
    %85 = vector.shape_cast %81 : vector<8x8xf32> to vector<1x8x8xf32>
    %86 = vector.shape_cast %82 : vector<8x8xf32> to vector<1x8x8xf32>
    %87 = vector.shape_cast %83 : vector<8x8xf32> to vector<1x8x8xf32>
    %88 = tpu.concatenate %84, %85, %86, %87 in 0 : vector<1x8x8xf32>, vector<1x8x8xf32>, vector<1x8x8xf32>, vector<1x8x8xf32> -> vector<4x8x8xf32>
    %89 = vector.extract_strided_slice %29 {offsets = [8, 0], sizes = [8, 8], strides = [1, 1]} : vector<16x32xf32> to vector<8x8xf32>
    %90 = vector.extract_strided_slice %29 {offsets = [8, 8], sizes = [8, 8], strides = [1, 1]} : vector<16x32xf32> to vector<8x8xf32>
    %91 = vector.extract_strided_slice %29 {offsets = [8, 16], sizes = [8, 8], strides = [1, 1]} : vector<16x32xf32> to vector<8x8xf32>
    %92 = vector.extract_strided_slice %29 {offsets = [8, 24], sizes = [8, 8], strides = [1, 1]} : vector<16x32xf32> to vector<8x8xf32>
    %93 = vector.shape_cast %89 : vector<8x8xf32> to vector<1x8x8xf32>
    %94 = vector.shape_cast %90 : vector<8x8xf32> to vector<1x8x8xf32>
    %95 = vector.shape_cast %91 : vector<8x8xf32> to vector<1x8x8xf32>
    %96 = vector.shape_cast %92 : vector<8x8xf32> to vector<1x8x8xf32>
    %97 = tpu.concatenate %93, %94, %95, %96 in 0 : vector<1x8x8xf32>, vector<1x8x8xf32>, vector<1x8x8xf32>, vector<1x8x8xf32> -> vector<4x8x8xf32>
    %98 = vector.extract_strided_slice %32 {offsets = [8, 0], sizes = [8, 8], strides = [1, 1]} : vector<16x32xf32> to vector<8x8xf32>
    %99 = vector.extract_strided_slice %32 {offsets = [8, 8], sizes = [8, 8], strides = [1, 1]} : vector<16x32xf32> to vector<8x8xf32>
    %100 = vector.extract_strided_slice %32 {offsets = [8, 16], sizes = [8, 8], strides = [1, 1]} : vector<16x32xf32> to vector<8x8xf32>
    %101 = vector.extract_strided_slice %32 {offsets = [8, 24], sizes = [8, 8], strides = [1, 1]} : vector<16x32xf32> to vector<8x8xf32>
    %102 = vector.shape_cast %98 : vector<8x8xf32> to vector<1x8x8xf32>
    %103 = vector.shape_cast %99 : vector<8x8xf32> to vector<1x8x8xf32>
    %104 = vector.shape_cast %100 : vector<8x8xf32> to vector<1x8x8xf32>
    %105 = vector.shape_cast %101 : vector<8x8xf32> to vector<1x8x8xf32>
    %106 = tpu.concatenate %102, %103, %104, %105 in 0 : vector<1x8x8xf32>, vector<1x8x8xf32>, vector<1x8x8xf32>, vector<1x8x8xf32> -> vector<4x8x8xf32>
    "tpu.trace_start"() <{level = 10 : i32, message = "hld,hmd->hlm"}> : () -> ()
    %cst_27 = arith.constant dense<0.000000e+00> : vector<4x8x8xf32>
    %107 = tpu.matmul %88, %97, %cst_27 {dimension_numbers = #tpu.dot_dimension_numbers<[2], [2], [1], [1], [0, 0, 0, 1, 1, 1], [0], [0]>} : vector<4x8x8xf32>, vector<4x8x8xf32>, vector<4x8x8xf32> -> vector<4x8x8xf32>
    "tpu.trace_stop"() : () -> ()
    %cst_28 = arith.constant dense<0xFF800000> : vector<8x8xf32>
    %108 = vector.multi_reduction <maximumf>, %107, %cst_28 [0] : vector<4x8x8xf32> to vector<8x8xf32>
    %109 = vector.shape_cast %108 : vector<8x8xf32> to vector<1x8x8xf32>
    %110 = vector.broadcast %109 : vector<1x8x8xf32> to vector<4x8x8xf32>
    %111 = arith.subf %107, %110 : vector<4x8x8xf32>
    %112 = math.exp %111 : vector<4x8x8xf32>
    %cst_29 = arith.constant dense<0.000000e+00> : vector<8x8xf32>
    %113 = vector.multi_reduction <add>, %112, %cst_29 [0] : vector<4x8x8xf32> to vector<8x8xf32>
    %114 = vector.shape_cast %113 : vector<8x8xf32> to vector<1x8x8xf32>
    %115 = vector.broadcast %114 : vector<1x8x8xf32> to vector<4x8x8xf32>
    %116 = arith.divf %112, %115 : vector<4x8x8xf32>
    "tpu.trace_start"() <{level = 10 : i32, message = "hlm,hmd->hld"}> : () -> ()
    %cst_30 = arith.constant dense<0.000000e+00> : vector<4x8x8xf32>
    %117 = tpu.matmul %116, %106, %cst_30 {dimension_numbers = #tpu.dot_dimension_numbers<[2], [1], [1], [2], [0, 0, 0, 1, 1, 2], [0], [0]>} : vector<4x8x8xf32>, vector<4x8x8xf32>, vector<4x8x8xf32> -> vector<4x8x8xf32>
    "tpu.trace_stop"() : () -> ()
    %118 = vector.extract_strided_slice %117 {offsets = [0, 0, 0], sizes = [1, 8, 8], strides = [1, 1, 1]} : vector<4x8x8xf32> to vector<1x8x8xf32>
    %119 = vector.shape_cast %118 : vector<1x8x8xf32> to vector<8x8xf32>
    %120 = vector.extract_strided_slice %117 {offsets = [1, 0, 0], sizes = [1, 8, 8], strides = [1, 1, 1]} : vector<4x8x8xf32> to vector<1x8x8xf32>
    %121 = vector.shape_cast %120 : vector<1x8x8xf32> to vector<8x8xf32>
    %122 = vector.extract_strided_slice %117 {offsets = [2, 0, 0], sizes = [1, 8, 8], strides = [1, 1, 1]} : vector<4x8x8xf32> to vector<1x8x8xf32>
    %123 = vector.shape_cast %122 : vector<1x8x8xf32> to vector<8x8xf32>
    %124 = vector.extract_strided_slice %117 {offsets = [3, 0, 0], sizes = [1, 8, 8], strides = [1, 1, 1]} : vector<4x8x8xf32> to vector<1x8x8xf32>
    %125 = vector.shape_cast %124 : vector<1x8x8xf32> to vector<8x8xf32>
    %126 = tpu.concatenate %119, %121, %123, %125 in 1 : vector<8x8xf32>, vector<8x8xf32>, vector<8x8xf32>, vector<8x8xf32> -> vector<8x32xf32>
    %127 = tpu.concatenate %79, %126 in 0 : vector<8x32xf32>, vector<8x32xf32> -> vector<16x32xf32>
    %cst_31 = arith.constant dense<0.000000e+00> : vector<16x32xf32>
    %128 = tpu.matmul %127, %8, %cst_31 {dimension_numbers = #tpu.dot_dimension_numbers<[1], [0], [0], [1], [0, 0, 1, 1], [], []>} : vector<16x32xf32>, vector<32x32xf32>, vector<16x32xf32> -> vector<16x32xf32>
    %129 = vector.broadcast %14 : vector<1x32xf32> to vector<16x32xf32>
    %130 = arith.addf %128, %129 : vector<16x32xf32>
    %131 = arith.addf %130, %0 : vector<16x32xf32>
    %cst_32 = arith.constant dense<0.000000e+00> : vector<16xf32>
    %132 = vector.multi_reduction <add>, %131, %cst_32 [1] : vector<16x32xf32> to vector<16xf32>
    %133 = vector.shape_cast %132 : vector<16xf32> to vector<16x1xf32>
    %cst_33 = arith.constant 3.200000e+01 : f32
    %134 = vector.broadcast %cst_33 : f32 to vector<16x1xf32>
    %135 = arith.divf %133, %134 : vector<16x1xf32>
    %136 = vector.broadcast %135 : vector<16x1xf32> to vector<16x32xf32>
    %137 = arith.subf %131, %136 : vector<16x32xf32>
    %138 = arith.mulf %137, %137 : vector<16x32xf32>
    %cst_34 = arith.constant dense<0.000000e+00> : vector<16xf32>
    %139 = vector.multi_reduction <add>, %138, %cst_34 [1] : vector<16x32xf32> to vector<16xf32>
    %140 = vector.shape_cast %139 : vector<16xf32> to vector<16x1xf32>
    %cst_35 = arith.constant 3.200000e+01 : f32
    %141 = vector.broadcast %cst_35 : f32 to vector<16x1xf32>
    %142 = arith.divf %140, %141 : vector<16x1xf32>
    %143 = vector.broadcast %135 : vector<16x1xf32> to vector<16x32xf32>
    %144 = arith.subf %131, %143 : vector<16x32xf32>
    %cst_36 = arith.constant 9.99999974E-6 : f32
    %145 = vector.broadcast %cst_36 : f32 to vector<16x1xf32>
    %146 = arith.addf %142, %145 : vector<16x1xf32>
    %147 = math.rsqrt %146 : vector<16x1xf32>
    %148 = vector.broadcast %147 : vector<16x1xf32> to vector<16x32xf32>
    %149 = arith.mulf %144, %148 : vector<16x32xf32>
    %150 = vector.broadcast %15 : vector<1x32xf32> to vector<16x32xf32>
    %151 = arith.mulf %149, %150 : vector<16x32xf32>
    %152 = vector.broadcast %16 : vector<1x32xf32> to vector<16x32xf32>
    %153 = arith.addf %151, %152 : vector<16x32xf32>
    %c0_37 = arith.constant 0 : index
    %c0_38 = arith.constant 0 : index
    %c0_39 = arith.constant 0 : index
    %154 = vector.load %arg3[%c0_37, %c0_38, %c0_39] : memref<2x32x64xf32, #tpu.memory_space<vmem>>, vector<1x32x64xf32>
    %155 = vector.shape_cast %154 : vector<1x32x64xf32> to vector<32x64xf32>
    %cst_40 = arith.constant dense<0.000000e+00> : vector<16x64xf32>
    %156 = tpu.matmul %153, %155, %cst_40 {dimension_numbers = #tpu.dot_dimension_numbers<[1], [0], [0], [1], [0, 0, 1, 1], [], []>} : vector<16x32xf32>, vector<32x64xf32>, vector<16x64xf32> -> vector<16x64xf32>
    %157 = vector.broadcast %21 : vector<1x64xf32> to vector<16x64xf32>
    %158 = arith.addf %156, %157 : vector<16x64xf32>
    %cst_41 = arith.constant 0.000000e+00 : f32
    %159 = vector.broadcast %cst_41 : f32 to vector<16x64xf32>
    %160 = arith.maximumf %158, %159 : vector<16x64xf32>
    %c0_42 = arith.constant 0 : index
    %c0_43 = arith.constant 0 : index
    %c0_44 = arith.constant 0 : index
    %161 = vector.load %arg4[%c0_42, %c0_43, %c0_44] : memref<2x64x32xf32, #tpu.memory_space<vmem>>, vector<1x64x32xf32>
    %162 = vector.shape_cast %161 : vector<1x64x32xf32> to vector<64x32xf32>
    %cst_45 = arith.constant dense<0.000000e+00> : vector<16x32xf32>
    %163 = tpu.matmul %160, %162, %cst_45 {dimension_numbers = #tpu.dot_dimension_numbers<[1], [0], [0], [1], [0, 0, 1, 1], [], []>} : vector<16x64xf32>, vector<64x32xf32>, vector<16x32xf32> -> vector<16x32xf32>
    %164 = vector.broadcast %17 : vector<1x32xf32> to vector<16x32xf32>
    %165 = arith.addf %163, %164 : vector<16x32xf32>
    %166 = arith.addf %165, %153 : vector<16x32xf32>
    %cst_46 = arith.constant dense<0.000000e+00> : vector<16xf32>
    %167 = vector.multi_reduction <add>, %166, %cst_46 [1] : vector<16x32xf32> to vector<16xf32>
    %168 = vector.shape_cast %167 : vector<16xf32> to vector<16x1xf32>
    %cst_47 = arith.constant 3.200000e+01 : f32
    %169 = vector.broadcast %cst_47 : f32 to vector<16x1xf32>
    %170 = arith.divf %168, %169 : vector<16x1xf32>
    %171 = vector.broadcast %170 : vector<16x1xf32> to vector<16x32xf32>
    %172 = arith.subf %166, %171 : vector<16x32xf32>
    %173 = arith.mulf %172, %172 : vector<16x32xf32>
    %cst_48 = arith.constant dense<0.000000e+00> : vector<16xf32>
    %174 = vector.multi_reduction <add>, %173, %cst_48 [1] : vector<16x32xf32> to vector<16xf32>
    %175 = vector.shape_cast %174 : vector<16xf32> to vector<16x1xf32>
    %cst_49 = arith.constant 3.200000e+01 : f32
    %176 = vector.broadcast %cst_49 : f32 to vector<16x1xf32>
    %177 = arith.divf %175, %176 : vector<16x1xf32>
    %178 = vector.broadcast %170 : vector<16x1xf32> to vector<16x32xf32>
    %179 = arith.subf %166, %178 : vector<16x32xf32>
    %cst_50 = arith.constant 9.99999974E-6 : f32
    %180 = vector.broadcast %cst_50 : f32 to vector<16x1xf32>
    %181 = arith.addf %177, %180 : vector<16x1xf32>
    %182 = math.rsqrt %181 : vector<16x1xf32>
    %183 = vector.broadcast %182 : vector<16x1xf32> to vector<16x32xf32>
    %184 = arith.mulf %179, %183 : vector<16x32xf32>
    %185 = vector.broadcast %18 : vector<1x32xf32> to vector<16x32xf32>
    %186 = arith.mulf %184, %185 : vector<16x32xf32>
    %187 = vector.broadcast %19 : vector<1x32xf32> to vector<16x32xf32>
    %188 = arith.addf %186, %187 : vector<16x32xf32>
    %189 = arith.addf %188, %0 : vector<16x32xf32>
    %c1_51 = arith.constant 1 : index
    %c0_52 = arith.constant 0 : index
    %c0_53 = arith.constant 0 : index
    %c0_54 = arith.constant 0 : index
    %190 = vector.load %arg2[%c1_51, %c0_52, %c0_53, %c0_54] : memref<2x4x32x32xf32, #tpu.memory_space<vmem>>, vector<1x1x32x32xf32>
    %191 = vector.shape_cast %190 : vector<1x1x32x32xf32> to vector<32x32xf32>
    %c1_55 = arith.constant 1 : index
    %c1_56 = arith.constant 1 : index
    %c0_57 = arith.constant 0 : index
    %c0_58 = arith.constant 0 : index
    %192 = vector.load %arg2[%c1_55, %c1_56, %c0_57, %c0_58] : memref<2x4x32x32xf32, #tpu.memory_space<vmem>>, vector<1x1x32x32xf32>
    %193 = vector.shape_cast %192 : vector<1x1x32x32xf32> to vector<32x32xf32>
    %c1_59 = arith.constant 1 : index
    %c2_60 = arith.constant 2 : index
    %c0_61 = arith.constant 0 : index
    %c0_62 = arith.constant 0 : index
    %194 = vector.load %arg2[%c1_59, %c2_60, %c0_61, %c0_62] : memref<2x4x32x32xf32, #tpu.memory_space<vmem>>, vector<1x1x32x32xf32>
    %195 = vector.shape_cast %194 : vector<1x1x32x32xf32> to vector<32x32xf32>
    %c1_63 = arith.constant 1 : index
    %c3_64 = arith.constant 3 : index
    %c0_65 = arith.constant 0 : index
    %c0_66 = arith.constant 0 : index
    %196 = vector.load %arg2[%c1_63, %c3_64, %c0_65, %c0_66] : memref<2x4x32x32xf32, #tpu.memory_space<vmem>>, vector<1x1x32x32xf32>
    %197 = vector.shape_cast %196 : vector<1x1x32x32xf32> to vector<32x32xf32>
    %c1_67 = arith.constant 1 : index
    %c0_68 = arith.constant 0 : index
    %c0_69 = arith.constant 0 : index
    %198 = vector.load %arg5[%c1_67, %c0_68, %c0_69] : memref<2x9x32xf32, #tpu.memory_space<vmem>>, vector<1x9x32xf32>
    %199 = vector.shape_cast %198 : vector<1x9x32xf32> to vector<9x32xf32>
    %200 = vector.extract_strided_slice %199 {offsets = [0, 0], sizes = [1, 32], strides = [1, 1]} : vector<9x32xf32> to vector<1x32xf32>
    %201 = vector.extract_strided_slice %199 {offsets = [1, 0], sizes = [1, 32], strides = [1, 1]} : vector<9x32xf32> to vector<1x32xf32>
    %202 = vector.extract_strided_slice %199 {offsets = [2, 0], sizes = [1, 32], strides = [1, 1]} : vector<9x32xf32> to vector<1x32xf32>
    %203 = vector.extract_strided_slice %199 {offsets = [3, 0], sizes = [1, 32], strides = [1, 1]} : vector<9x32xf32> to vector<1x32xf32>
    %204 = vector.extract_strided_slice %199 {offsets = [4, 0], sizes = [1, 32], strides = [1, 1]} : vector<9x32xf32> to vector<1x32xf32>
    %205 = vector.extract_strided_slice %199 {offsets = [5, 0], sizes = [1, 32], strides = [1, 1]} : vector<9x32xf32> to vector<1x32xf32>
    %206 = vector.extract_strided_slice %199 {offsets = [6, 0], sizes = [1, 32], strides = [1, 1]} : vector<9x32xf32> to vector<1x32xf32>
    %207 = vector.extract_strided_slice %199 {offsets = [7, 0], sizes = [1, 32], strides = [1, 1]} : vector<9x32xf32> to vector<1x32xf32>
    %208 = vector.extract_strided_slice %199 {offsets = [8, 0], sizes = [1, 32], strides = [1, 1]} : vector<9x32xf32> to vector<1x32xf32>
    %c1_70 = arith.constant 1 : index
    %c0_71 = arith.constant 0 : index
    %c0_72 = arith.constant 0 : index
    %209 = vector.load %arg6[%c1_70, %c0_71, %c0_72] : memref<2x1x64xf32, #tpu.memory_space<vmem>>, vector<1x1x64xf32>
    %210 = vector.shape_cast %209 : vector<1x1x64xf32> to vector<1x64xf32>
    %cst_73 = arith.constant dense<0.000000e+00> : vector<16x32xf32>
    %211 = tpu.matmul %189, %191, %cst_73 {dimension_numbers = #tpu.dot_dimension_numbers<[1], [0], [0], [1], [0, 0, 1, 1], [], []>} : vector<16x32xf32>, vector<32x32xf32>, vector<16x32xf32> -> vector<16x32xf32>
    %212 = vector.broadcast %200 : vector<1x32xf32> to vector<16x32xf32>
    %213 = arith.addf %211, %212 : vector<16x32xf32>
    %cst_74 = arith.constant 0.353553385 : f32
    %214 = vector.broadcast %cst_74 : f32 to vector<16x32xf32>
    %215 = arith.mulf %213, %214 : vector<16x32xf32>
    %cst_75 = arith.constant dense<0.000000e+00> : vector<16x32xf32>
    %216 = tpu.matmul %189, %193, %cst_75 {dimension_numbers = #tpu.dot_dimension_numbers<[1], [0], [0], [1], [0, 0, 1, 1], [], []>} : vector<16x32xf32>, vector<32x32xf32>, vector<16x32xf32> -> vector<16x32xf32>
    %217 = vector.broadcast %201 : vector<1x32xf32> to vector<16x32xf32>
    %218 = arith.addf %216, %217 : vector<16x32xf32>
    %cst_76 = arith.constant dense<0.000000e+00> : vector<16x32xf32>
    %219 = tpu.matmul %189, %195, %cst_76 {dimension_numbers = #tpu.dot_dimension_numbers<[1], [0], [0], [1], [0, 0, 1, 1], [], []>} : vector<16x32xf32>, vector<32x32xf32>, vector<16x32xf32> -> vector<16x32xf32>
    %220 = vector.broadcast %202 : vector<1x32xf32> to vector<16x32xf32>
    %221 = arith.addf %219, %220 : vector<16x32xf32>
    %222 = vector.extract_strided_slice %215 {offsets = [0, 0], sizes = [8, 8], strides = [1, 1]} : vector<16x32xf32> to vector<8x8xf32>
    %223 = vector.extract_strided_slice %215 {offsets = [0, 8], sizes = [8, 8], strides = [1, 1]} : vector<16x32xf32> to vector<8x8xf32>
    %224 = vector.extract_strided_slice %215 {offsets = [0, 16], sizes = [8, 8], strides = [1, 1]} : vector<16x32xf32> to vector<8x8xf32>
    %225 = vector.extract_strided_slice %215 {offsets = [0, 24], sizes = [8, 8], strides = [1, 1]} : vector<16x32xf32> to vector<8x8xf32>
    %226 = vector.shape_cast %222 : vector<8x8xf32> to vector<1x8x8xf32>
    %227 = vector.shape_cast %223 : vector<8x8xf32> to vector<1x8x8xf32>
    %228 = vector.shape_cast %224 : vector<8x8xf32> to vector<1x8x8xf32>
    %229 = vector.shape_cast %225 : vector<8x8xf32> to vector<1x8x8xf32>
    %230 = tpu.concatenate %226, %227, %228, %229 in 0 : vector<1x8x8xf32>, vector<1x8x8xf32>, vector<1x8x8xf32>, vector<1x8x8xf32> -> vector<4x8x8xf32>
    %231 = vector.extract_strided_slice %218 {offsets = [0, 0], sizes = [8, 8], strides = [1, 1]} : vector<16x32xf32> to vector<8x8xf32>
    %232 = vector.extract_strided_slice %218 {offsets = [0, 8], sizes = [8, 8], strides = [1, 1]} : vector<16x32xf32> to vector<8x8xf32>
    %233 = vector.extract_strided_slice %218 {offsets = [0, 16], sizes = [8, 8], strides = [1, 1]} : vector<16x32xf32> to vector<8x8xf32>
    %234 = vector.extract_strided_slice %218 {offsets = [0, 24], sizes = [8, 8], strides = [1, 1]} : vector<16x32xf32> to vector<8x8xf32>
    %235 = vector.shape_cast %231 : vector<8x8xf32> to vector<1x8x8xf32>
    %236 = vector.shape_cast %232 : vector<8x8xf32> to vector<1x8x8xf32>
    %237 = vector.shape_cast %233 : vector<8x8xf32> to vector<1x8x8xf32>
    %238 = vector.shape_cast %234 : vector<8x8xf32> to vector<1x8x8xf32>
    %239 = tpu.concatenate %235, %236, %237, %238 in 0 : vector<1x8x8xf32>, vector<1x8x8xf32>, vector<1x8x8xf32>, vector<1x8x8xf32> -> vector<4x8x8xf32>
    %240 = vector.extract_strided_slice %221 {offsets = [0, 0], sizes = [8, 8], strides = [1, 1]} : vector<16x32xf32> to vector<8x8xf32>
    %241 = vector.extract_strided_slice %221 {offsets = [0, 8], sizes = [8, 8], strides = [1, 1]} : vector<16x32xf32> to vector<8x8xf32>
    %242 = vector.extract_strided_slice %221 {offsets = [0, 16], sizes = [8, 8], strides = [1, 1]} : vector<16x32xf32> to vector<8x8xf32>
    %243 = vector.extract_strided_slice %221 {offsets = [0, 24], sizes = [8, 8], strides = [1, 1]} : vector<16x32xf32> to vector<8x8xf32>
    %244 = vector.shape_cast %240 : vector<8x8xf32> to vector<1x8x8xf32>
    %245 = vector.shape_cast %241 : vector<8x8xf32> to vector<1x8x8xf32>
    %246 = vector.shape_cast %242 : vector<8x8xf32> to vector<1x8x8xf32>
    %247 = vector.shape_cast %243 : vector<8x8xf32> to vector<1x8x8xf32>
    %248 = tpu.concatenate %244, %245, %246, %247 in 0 : vector<1x8x8xf32>, vector<1x8x8xf32>, vector<1x8x8xf32>, vector<1x8x8xf32> -> vector<4x8x8xf32>
    "tpu.trace_start"() <{level = 10 : i32, message = "hld,hmd->hlm"}> : () -> ()
    %cst_77 = arith.constant dense<0.000000e+00> : vector<4x8x8xf32>
    %249 = tpu.matmul %230, %239, %cst_77 {dimension_numbers = #tpu.dot_dimension_numbers<[2], [2], [1], [1], [0, 0, 0, 1, 1, 1], [0], [0]>} : vector<4x8x8xf32>, vector<4x8x8xf32>, vector<4x8x8xf32> -> vector<4x8x8xf32>
    "tpu.trace_stop"() : () -> ()
    %cst_78 = arith.constant dense<0xFF800000> : vector<8x8xf32>
    %250 = vector.multi_reduction <maximumf>, %249, %cst_78 [0] : vector<4x8x8xf32> to vector<8x8xf32>
    %251 = vector.shape_cast %250 : vector<8x8xf32> to vector<1x8x8xf32>
    %252 = vector.broadcast %251 : vector<1x8x8xf32> to vector<4x8x8xf32>
    %253 = arith.subf %249, %252 : vector<4x8x8xf32>
    %254 = math.exp %253 : vector<4x8x8xf32>
    %cst_79 = arith.constant dense<0.000000e+00> : vector<8x8xf32>
    %255 = vector.multi_reduction <add>, %254, %cst_79 [0] : vector<4x8x8xf32> to vector<8x8xf32>
    %256 = vector.shape_cast %255 : vector<8x8xf32> to vector<1x8x8xf32>
    %257 = vector.broadcast %256 : vector<1x8x8xf32> to vector<4x8x8xf32>
    %258 = arith.divf %254, %257 : vector<4x8x8xf32>
    "tpu.trace_start"() <{level = 10 : i32, message = "hlm,hmd->hld"}> : () -> ()
    %cst_80 = arith.constant dense<0.000000e+00> : vector<4x8x8xf32>
    %259 = tpu.matmul %258, %248, %cst_80 {dimension_numbers = #tpu.dot_dimension_numbers<[2], [1], [1], [2], [0, 0, 0, 1, 1, 2], [0], [0]>} : vector<4x8x8xf32>, vector<4x8x8xf32>, vector<4x8x8xf32> -> vector<4x8x8xf32>
    "tpu.trace_stop"() : () -> ()
    %260 = vector.extract_strided_slice %259 {offsets = [0, 0, 0], sizes = [1, 8, 8], strides = [1, 1, 1]} : vector<4x8x8xf32> to vector<1x8x8xf32>
    %261 = vector.shape_cast %260 : vector<1x8x8xf32> to vector<8x8xf32>
    %262 = vector.extract_strided_slice %259 {offsets = [1, 0, 0], sizes = [1, 8, 8], strides = [1, 1, 1]} : vector<4x8x8xf32> to vector<1x8x8xf32>
    %263 = vector.shape_cast %262 : vector<1x8x8xf32> to vector<8x8xf32>
    %264 = vector.extract_strided_slice %259 {offsets = [2, 0, 0], sizes = [1, 8, 8], strides = [1, 1, 1]} : vector<4x8x8xf32> to vector<1x8x8xf32>
    %265 = vector.shape_cast %264 : vector<1x8x8xf32> to vector<8x8xf32>
    %266 = vector.extract_strided_slice %259 {offsets = [3, 0, 0], sizes = [1, 8, 8], strides = [1, 1, 1]} : vector<4x8x8xf32> to vector<1x8x8xf32>
    %267 = vector.shape_cast %266 : vector<1x8x8xf32> to vector<8x8xf32>
    %268 = tpu.concatenate %261, %263, %265, %267 in 1 : vector<8x8xf32>, vector<8x8xf32>, vector<8x8xf32>, vector<8x8xf32> -> vector<8x32xf32>
    %269 = vector.extract_strided_slice %215 {offsets = [8, 0], sizes = [8, 8], strides = [1, 1]} : vector<16x32xf32> to vector<8x8xf32>
    %270 = vector.extract_strided_slice %215 {offsets = [8, 8], sizes = [8, 8], strides = [1, 1]} : vector<16x32xf32> to vector<8x8xf32>
    %271 = vector.extract_strided_slice %215 {offsets = [8, 16], sizes = [8, 8], strides = [1, 1]} : vector<16x32xf32> to vector<8x8xf32>
    %272 = vector.extract_strided_slice %215 {offsets = [8, 24], sizes = [8, 8], strides = [1, 1]} : vector<16x32xf32> to vector<8x8xf32>
    %273 = vector.shape_cast %269 : vector<8x8xf32> to vector<1x8x8xf32>
    %274 = vector.shape_cast %270 : vector<8x8xf32> to vector<1x8x8xf32>
    %275 = vector.shape_cast %271 : vector<8x8xf32> to vector<1x8x8xf32>
    %276 = vector.shape_cast %272 : vector<8x8xf32> to vector<1x8x8xf32>
    %277 = tpu.concatenate %273, %274, %275, %276 in 0 : vector<1x8x8xf32>, vector<1x8x8xf32>, vector<1x8x8xf32>, vector<1x8x8xf32> -> vector<4x8x8xf32>
    %278 = vector.extract_strided_slice %218 {offsets = [8, 0], sizes = [8, 8], strides = [1, 1]} : vector<16x32xf32> to vector<8x8xf32>
    %279 = vector.extract_strided_slice %218 {offsets = [8, 8], sizes = [8, 8], strides = [1, 1]} : vector<16x32xf32> to vector<8x8xf32>
    %280 = vector.extract_strided_slice %218 {offsets = [8, 16], sizes = [8, 8], strides = [1, 1]} : vector<16x32xf32> to vector<8x8xf32>
    %281 = vector.extract_strided_slice %218 {offsets = [8, 24], sizes = [8, 8], strides = [1, 1]} : vector<16x32xf32> to vector<8x8xf32>
    %282 = vector.shape_cast %278 : vector<8x8xf32> to vector<1x8x8xf32>
    %283 = vector.shape_cast %279 : vector<8x8xf32> to vector<1x8x8xf32>
    %284 = vector.shape_cast %280 : vector<8x8xf32> to vector<1x8x8xf32>
    %285 = vector.shape_cast %281 : vector<8x8xf32> to vector<1x8x8xf32>
    %286 = tpu.concatenate %282, %283, %284, %285 in 0 : vector<1x8x8xf32>, vector<1x8x8xf32>, vector<1x8x8xf32>, vector<1x8x8xf32> -> vector<4x8x8xf32>
    %287 = vector.extract_strided_slice %221 {offsets = [8, 0], sizes = [8, 8], strides = [1, 1]} : vector<16x32xf32> to vector<8x8xf32>
    %288 = vector.extract_strided_slice %221 {offsets = [8, 8], sizes = [8, 8], strides = [1, 1]} : vector<16x32xf32> to vector<8x8xf32>
    %289 = vector.extract_strided_slice %221 {offsets = [8, 16], sizes = [8, 8], strides = [1, 1]} : vector<16x32xf32> to vector<8x8xf32>
    %290 = vector.extract_strided_slice %221 {offsets = [8, 24], sizes = [8, 8], strides = [1, 1]} : vector<16x32xf32> to vector<8x8xf32>
    %291 = vector.shape_cast %287 : vector<8x8xf32> to vector<1x8x8xf32>
    %292 = vector.shape_cast %288 : vector<8x8xf32> to vector<1x8x8xf32>
    %293 = vector.shape_cast %289 : vector<8x8xf32> to vector<1x8x8xf32>
    %294 = vector.shape_cast %290 : vector<8x8xf32> to vector<1x8x8xf32>
    %295 = tpu.concatenate %291, %292, %293, %294 in 0 : vector<1x8x8xf32>, vector<1x8x8xf32>, vector<1x8x8xf32>, vector<1x8x8xf32> -> vector<4x8x8xf32>
    "tpu.trace_start"() <{level = 10 : i32, message = "hld,hmd->hlm"}> : () -> ()
    %cst_81 = arith.constant dense<0.000000e+00> : vector<4x8x8xf32>
    %296 = tpu.matmul %277, %286, %cst_81 {dimension_numbers = #tpu.dot_dimension_numbers<[2], [2], [1], [1], [0, 0, 0, 1, 1, 1], [0], [0]>} : vector<4x8x8xf32>, vector<4x8x8xf32>, vector<4x8x8xf32> -> vector<4x8x8xf32>
    "tpu.trace_stop"() : () -> ()
    %cst_82 = arith.constant dense<0xFF800000> : vector<8x8xf32>
    %297 = vector.multi_reduction <maximumf>, %296, %cst_82 [0] : vector<4x8x8xf32> to vector<8x8xf32>
    %298 = vector.shape_cast %297 : vector<8x8xf32> to vector<1x8x8xf32>
    %299 = vector.broadcast %298 : vector<1x8x8xf32> to vector<4x8x8xf32>
    %300 = arith.subf %296, %299 : vector<4x8x8xf32>
    %301 = math.exp %300 : vector<4x8x8xf32>
    %cst_83 = arith.constant dense<0.000000e+00> : vector<8x8xf32>
    %302 = vector.multi_reduction <add>, %301, %cst_83 [0] : vector<4x8x8xf32> to vector<8x8xf32>
    %303 = vector.shape_cast %302 : vector<8x8xf32> to vector<1x8x8xf32>
    %304 = vector.broadcast %303 : vector<1x8x8xf32> to vector<4x8x8xf32>
    %305 = arith.divf %301, %304 : vector<4x8x8xf32>
    "tpu.trace_start"() <{level = 10 : i32, message = "hlm,hmd->hld"}> : () -> ()
    %cst_84 = arith.constant dense<0.000000e+00> : vector<4x8x8xf32>
    %306 = tpu.matmul %305, %295, %cst_84 {dimension_numbers = #tpu.dot_dimension_numbers<[2], [1], [1], [2], [0, 0, 0, 1, 1, 2], [0], [0]>} : vector<4x8x8xf32>, vector<4x8x8xf32>, vector<4x8x8xf32> -> vector<4x8x8xf32>
    "tpu.trace_stop"() : () -> ()
    %307 = vector.extract_strided_slice %306 {offsets = [0, 0, 0], sizes = [1, 8, 8], strides = [1, 1, 1]} : vector<4x8x8xf32> to vector<1x8x8xf32>
    %308 = vector.shape_cast %307 : vector<1x8x8xf32> to vector<8x8xf32>
    %309 = vector.extract_strided_slice %306 {offsets = [1, 0, 0], sizes = [1, 8, 8], strides = [1, 1, 1]} : vector<4x8x8xf32> to vector<1x8x8xf32>
    %310 = vector.shape_cast %309 : vector<1x8x8xf32> to vector<8x8xf32>
    %311 = vector.extract_strided_slice %306 {offsets = [2, 0, 0], sizes = [1, 8, 8], strides = [1, 1, 1]} : vector<4x8x8xf32> to vector<1x8x8xf32>
    %312 = vector.shape_cast %311 : vector<1x8x8xf32> to vector<8x8xf32>
    %313 = vector.extract_strided_slice %306 {offsets = [3, 0, 0], sizes = [1, 8, 8], strides = [1, 1, 1]} : vector<4x8x8xf32> to vector<1x8x8xf32>
    %314 = vector.shape_cast %313 : vector<1x8x8xf32> to vector<8x8xf32>
    %315 = tpu.concatenate %308, %310, %312, %314 in 1 : vector<8x8xf32>, vector<8x8xf32>, vector<8x8xf32>, vector<8x8xf32> -> vector<8x32xf32>
    %316 = tpu.concatenate %268, %315 in 0 : vector<8x32xf32>, vector<8x32xf32> -> vector<16x32xf32>
    %cst_85 = arith.constant dense<0.000000e+00> : vector<16x32xf32>
    %317 = tpu.matmul %316, %197, %cst_85 {dimension_numbers = #tpu.dot_dimension_numbers<[1], [0], [0], [1], [0, 0, 1, 1], [], []>} : vector<16x32xf32>, vector<32x32xf32>, vector<16x32xf32> -> vector<16x32xf32>
    %318 = vector.broadcast %203 : vector<1x32xf32> to vector<16x32xf32>
    %319 = arith.addf %317, %318 : vector<16x32xf32>
    %320 = arith.addf %319, %189 : vector<16x32xf32>
    %cst_86 = arith.constant dense<0.000000e+00> : vector<16xf32>
    %321 = vector.multi_reduction <add>, %320, %cst_86 [1] : vector<16x32xf32> to vector<16xf32>
    %322 = vector.shape_cast %321 : vector<16xf32> to vector<16x1xf32>
    %cst_87 = arith.constant 3.200000e+01 : f32
    %323 = vector.broadcast %cst_87 : f32 to vector<16x1xf32>
    %324 = arith.divf %322, %323 : vector<16x1xf32>
    %325 = vector.broadcast %324 : vector<16x1xf32> to vector<16x32xf32>
    %326 = arith.subf %320, %325 : vector<16x32xf32>
    %327 = arith.mulf %326, %326 : vector<16x32xf32>
    %cst_88 = arith.constant dense<0.000000e+00> : vector<16xf32>
    %328 = vector.multi_reduction <add>, %327, %cst_88 [1] : vector<16x32xf32> to vector<16xf32>
    %329 = vector.shape_cast %328 : vector<16xf32> to vector<16x1xf32>
    %cst_89 = arith.constant 3.200000e+01 : f32
    %330 = vector.broadcast %cst_89 : f32 to vector<16x1xf32>
    %331 = arith.divf %329, %330 : vector<16x1xf32>
    %332 = vector.broadcast %324 : vector<16x1xf32> to vector<16x32xf32>
    %333 = arith.subf %320, %332 : vector<16x32xf32>
    %cst_90 = arith.constant 9.99999974E-6 : f32
    %334 = vector.broadcast %cst_90 : f32 to vector<16x1xf32>
    %335 = arith.addf %331, %334 : vector<16x1xf32>
    %336 = math.rsqrt %335 : vector<16x1xf32>
    %337 = vector.broadcast %336 : vector<16x1xf32> to vector<16x32xf32>
    %338 = arith.mulf %333, %337 : vector<16x32xf32>
    %339 = vector.broadcast %204 : vector<1x32xf32> to vector<16x32xf32>
    %340 = arith.mulf %338, %339 : vector<16x32xf32>
    %341 = vector.broadcast %205 : vector<1x32xf32> to vector<16x32xf32>
    %342 = arith.addf %340, %341 : vector<16x32xf32>
    %c1_91 = arith.constant 1 : index
    %c0_92 = arith.constant 0 : index
    %c0_93 = arith.constant 0 : index
    %343 = vector.load %arg3[%c1_91, %c0_92, %c0_93] : memref<2x32x64xf32, #tpu.memory_space<vmem>>, vector<1x32x64xf32>
    %344 = vector.shape_cast %343 : vector<1x32x64xf32> to vector<32x64xf32>
    %cst_94 = arith.constant dense<0.000000e+00> : vector<16x64xf32>
    %345 = tpu.matmul %342, %344, %cst_94 {dimension_numbers = #tpu.dot_dimension_numbers<[1], [0], [0], [1], [0, 0, 1, 1], [], []>} : vector<16x32xf32>, vector<32x64xf32>, vector<16x64xf32> -> vector<16x64xf32>
    %346 = vector.broadcast %210 : vector<1x64xf32> to vector<16x64xf32>
    %347 = arith.addf %345, %346 : vector<16x64xf32>
    %cst_95 = arith.constant 0.000000e+00 : f32
    %348 = vector.broadcast %cst_95 : f32 to vector<16x64xf32>
    %349 = arith.maximumf %347, %348 : vector<16x64xf32>
    %c1_96 = arith.constant 1 : index
    %c0_97 = arith.constant 0 : index
    %c0_98 = arith.constant 0 : index
    %350 = vector.load %arg4[%c1_96, %c0_97, %c0_98] : memref<2x64x32xf32, #tpu.memory_space<vmem>>, vector<1x64x32xf32>
    %351 = vector.shape_cast %350 : vector<1x64x32xf32> to vector<64x32xf32>
    %cst_99 = arith.constant dense<0.000000e+00> : vector<16x32xf32>
    %352 = tpu.matmul %349, %351, %cst_99 {dimension_numbers = #tpu.dot_dimension_numbers<[1], [0], [0], [1], [0, 0, 1, 1], [], []>} : vector<16x64xf32>, vector<64x32xf32>, vector<16x32xf32> -> vector<16x32xf32>
    %353 = vector.broadcast %206 : vector<1x32xf32> to vector<16x32xf32>
    %354 = arith.addf %352, %353 : vector<16x32xf32>
    %355 = arith.addf %354, %342 : vector<16x32xf32>
    %cst_100 = arith.constant dense<0.000000e+00> : vector<16xf32>
    %356 = vector.multi_reduction <add>, %355, %cst_100 [1] : vector<16x32xf32> to vector<16xf32>
    %357 = vector.shape_cast %356 : vector<16xf32> to vector<16x1xf32>
    %cst_101 = arith.constant 3.200000e+01 : f32
    %358 = vector.broadcast %cst_101 : f32 to vector<16x1xf32>
    %359 = arith.divf %357, %358 : vector<16x1xf32>
    %360 = vector.broadcast %359 : vector<16x1xf32> to vector<16x32xf32>
    %361 = arith.subf %355, %360 : vector<16x32xf32>
    %362 = arith.mulf %361, %361 : vector<16x32xf32>
    %cst_102 = arith.constant dense<0.000000e+00> : vector<16xf32>
    %363 = vector.multi_reduction <add>, %362, %cst_102 [1] : vector<16x32xf32> to vector<16xf32>
    %364 = vector.shape_cast %363 : vector<16xf32> to vector<16x1xf32>
    %cst_103 = arith.constant 3.200000e+01 : f32
    %365 = vector.broadcast %cst_103 : f32 to vector<16x1xf32>
    %366 = arith.divf %364, %365 : vector<16x1xf32>
    %367 = vector.broadcast %359 : vector<16x1xf32> to vector<16x32xf32>
    %368 = arith.subf %355, %367 : vector<16x32xf32>
    %cst_104 = arith.constant 9.99999974E-6 : f32
    %369 = vector.broadcast %cst_104 : f32 to vector<16x1xf32>
    %370 = arith.addf %366, %369 : vector<16x1xf32>
    %371 = math.rsqrt %370 : vector<16x1xf32>
    %372 = vector.broadcast %371 : vector<16x1xf32> to vector<16x32xf32>
    %373 = arith.mulf %368, %372 : vector<16x32xf32>
    %374 = vector.broadcast %207 : vector<1x32xf32> to vector<16x32xf32>
    %375 = arith.mulf %373, %374 : vector<16x32xf32>
    %376 = vector.broadcast %208 : vector<1x32xf32> to vector<16x32xf32>
    %377 = arith.addf %375, %376 : vector<16x32xf32>
    %378 = arith.addf %377, %189 : vector<16x32xf32>
    %c0_105 = arith.constant 0 : index
    %c0_106 = arith.constant 0 : index
    %379 = vector.load %arg7[%c0_105, %c0_106] : memref<2x32xf32, #tpu.memory_space<vmem>>, vector<2x32xf32>
    %380 = vector.extract_strided_slice %379 {offsets = [0, 0], sizes = [1, 32], strides = [1, 1]} : vector<2x32xf32> to vector<1x32xf32>
    %381 = vector.extract_strided_slice %379 {offsets = [1, 0], sizes = [1, 32], strides = [1, 1]} : vector<2x32xf32> to vector<1x32xf32>
    %cst_107 = arith.constant dense<0.000000e+00> : vector<16xf32>
    %382 = vector.multi_reduction <add>, %378, %cst_107 [1] : vector<16x32xf32> to vector<16xf32>
    %383 = vector.shape_cast %382 : vector<16xf32> to vector<16x1xf32>
    %cst_108 = arith.constant 3.200000e+01 : f32
    %384 = vector.broadcast %cst_108 : f32 to vector<16x1xf32>
    %385 = arith.divf %383, %384 : vector<16x1xf32>
    %386 = vector.broadcast %385 : vector<16x1xf32> to vector<16x32xf32>
    %387 = arith.subf %378, %386 : vector<16x32xf32>
    %388 = arith.mulf %387, %387 : vector<16x32xf32>
    %cst_109 = arith.constant dense<0.000000e+00> : vector<16xf32>
    %389 = vector.multi_reduction <add>, %388, %cst_109 [1] : vector<16x32xf32> to vector<16xf32>
    %390 = vector.shape_cast %389 : vector<16xf32> to vector<16x1xf32>
    %cst_110 = arith.constant 3.200000e+01 : f32
    %391 = vector.broadcast %cst_110 : f32 to vector<16x1xf32>
    %392 = arith.divf %390, %391 : vector<16x1xf32>
    %393 = vector.broadcast %385 : vector<16x1xf32> to vector<16x32xf32>
    %394 = arith.subf %378, %393 : vector<16x32xf32>
    %cst_111 = arith.constant 9.99999974E-6 : f32
    %395 = vector.broadcast %cst_111 : f32 to vector<16x1xf32>
    %396 = arith.addf %392, %395 : vector<16x1xf32>
    %397 = math.rsqrt %396 : vector<16x1xf32>
    %398 = vector.broadcast %397 : vector<16x1xf32> to vector<16x32xf32>
    %399 = arith.mulf %394, %398 : vector<16x32xf32>
    %400 = vector.broadcast %380 : vector<1x32xf32> to vector<16x32xf32>
    %401 = arith.mulf %399, %400 : vector<16x32xf32>
    %402 = vector.broadcast %381 : vector<1x32xf32> to vector<16x32xf32>
    %403 = arith.addf %401, %402 : vector<16x32xf32>
    %c0_112 = arith.constant 0 : index
    %c0_113 = arith.constant 0 : index
    %404 = vector.load %arg8[%c0_112, %c0_113] : memref<16x32xf32, #tpu.memory_space<vmem>>, vector<16x32xf32>
    tpu.vector_store %arg8[%c0_112, %c0_113], %403 {strides = array<i32>} : memref<16x32xf32, #tpu.memory_space<vmem>>, vector<16x32xf32>,
    return
  }
  func.func @transform_0(%arg0: i32) -> (i32, i32) {
    %c0_i32 = arith.constant 0 : i32
    %c0_i32_0 = arith.constant 0 : i32
    %c0_i32_1 = arith.constant 0 : i32
    return %c0_i32, %c0_i32_0 : i32, i32
  }
  func.func @transform_1(%arg0: i32) -> (i32, i32, i32, i32) {
    %c0_i32 = arith.constant 0 : i32
    %c0_i32_0 = arith.constant 0 : i32
    %c0_i32_1 = arith.constant 0 : i32
    %c0_i32_2 = arith.constant 0 : i32
    %c0_i32_3 = arith.constant 0 : i32
    return %c0_i32, %c0_i32_0, %c0_i32_1, %c0_i32_2 : i32, i32, i32, i32
  }
  func.func @transform_2(%arg0: i32) -> (i32, i32, i32) {
    %c0_i32 = arith.constant 0 : i32
    %c0_i32_0 = arith.constant 0 : i32
    %c0_i32_1 = arith.constant 0 : i32
    %c0_i32_2 = arith.constant 0 : i32
    return %c0_i32, %c0_i32_0, %c0_i32_1 : i32, i32, i32
  }
  func.func @transform_3(%arg0: i32) -> (i32, i32, i32) {
    %c0_i32 = arith.constant 0 : i32
    %c0_i32_0 = arith.constant 0 : i32
    %c0_i32_1 = arith.constant 0 : i32
    %c0_i32_2 = arith.constant 0 : i32
    return %c0_i32, %c0_i32_0, %c0_i32_1 : i32, i32, i32
  }
  func.func @transform_4(%arg0: i32) -> (i32, i32, i32) {
    %c0_i32 = arith.constant 0 : i32
    %c0_i32_0 = arith.constant 0 : i32
    %c0_i32_1 = arith.constant 0 : i32
    %c0_i32_2 = arith.constant 0 : i32
    return %c0_i32, %c0_i32_0, %c0_i32_1 : i32, i32, i32
  }
  func.func @transform_5(%arg0: i32) -> (i32, i32, i32) {
    %c0_i32 = arith.constant 0 : i32
    %c0_i32_0 = arith.constant 0 : i32
    %c0_i32_1 = arith.constant 0 : i32
    %c0_i32_2 = arith.constant 0 : i32
    return %c0_i32, %c0_i32_0, %c0_i32_1 : i32, i32, i32
  }
  func.func @transform_6(%arg0: i32) -> (i32, i32) {
    %c0_i32 = arith.constant 0 : i32
    %c0_i32_0 = arith.constant 0 : i32
    %c0_i32_1 = arith.constant 0 : i32
    return %c0_i32, %c0_i32_0 : i32, i32
  }
  func.func @transform_7(%arg0: i32) -> (i32, i32) {
    %c0_i32 = arith.constant 0 : i32
    %c0_i32_0 = arith.constant 0 : i32
    %c0_i32_1 = arith.constant 0 : i32
    return %c0_i32, %c0_i32_0 : i32, i32
  }
}

</mosaic_0001>

<llo_original>
// kernel: tpu_custom_call.1
$region0: #{tpu_custom_call.1}
  #allocation0 [shape = 'u32[]', space=smem, size = 0x4, offset = 0x4, fixed_abs, tag = 'smem constant byte address 0x4 - core index']
  #allocation1 [shape = 'u32[144,128]{1,0:T(1,128)}', space=vmem, size = 0x12000, scoped, tag = 'internal scratch']
  %s0 = inlined_call_operand.vmem [shape: f32[16,32], index: 0, kind: input, shape index: {}]
  %s1 = inlined_call_operand.hbm [shape: f32[2,4,32,32], index: 1, kind: input, shape index: {}]
  %s2 = inlined_call_operand.vmem [shape: f32[2,32,64], index: 2, kind: input, shape index: {}]
  %s3 = inlined_call_operand.vmem [shape: f32[2,64,32], index: 3, kind: input, shape index: {}]
  %s4 = inlined_call_operand.vmem [shape: f32[2,9,32], index: 4, kind: input, shape index: {}]
  %s5 = inlined_call_operand.vmem [shape: f32[2,1,64], index: 5, kind: input, shape index: {}]
  %s6 = inlined_call_operand.vmem [shape: f32[2,32], index: 6, kind: input, shape index: {}]
  %s7 = inlined_call_operand.hbm [shape: f32[16,32], index: 7, kind: output, shape index: {}]
  %s8 = sld [smem:[#allocation0]]
  $region42: #{tpu_custom_call.1} parent=0
    _
  %s10 = ssub.s32 1, %s8
  %s11 = scalar_select 0, %s10, %s8
  $region1: #{tpu_custom_call.1} parent=0
    #allocation2 [shape = 'u8[131072]{0}', space=vmem, size = 0x20000, scoped, tag = 'input window, operand 1, single buffered']
    #allocation3 [shape = 's32[1]{0}', space=sflag, size = 0x4, scoped, tag = 'scoped memory for tpu_custom_call.1']
    #allocation4 [shape = 's32[1]{0}', space=sflag, size = 0x4, scoped, tag = 'scoped memory for tpu_custom_call.1']
    #allocation5 [shape = 'u8[8192]{0}', space=vmem, size = 0x2000, scoped, tag = 'output window, operand 0, single buffered']
    %12 = vsyncpa [#allocation3], 0
    %13 = vsyncpa [#allocation4], 0
    // Predicated region
    $region2: #{tpu_custom_call.1} parent=1 // pred_check
      _
    $region3: #{tpu_custom_call.1} parent=1 // pred_check_branch
      %15 = sbr.rel (0) target = $region5
    $region4: #{tpu_custom_call.1} parent=1 // pred_region
      _
    $region5: #{tpu_custom_call.1} parent=1 // pred_fallthru
      _
    // Predicated region
    $region6: #{tpu_custom_call.1} parent=1 // pred_check
      _
    $region7: #{tpu_custom_call.1} parent=1 // pred_check_branch
      %17 = sbr.rel (0) target = $region9
    $region8: #{tpu_custom_call.1} parent=1 // pred_region
      %s19 = ssub.s32 4096, 4096
      %20 = vsyncadd [#allocation3], %s19
      %s21 = sshll.u32 [#allocation2], 4
      %s22 = int_to_ptr.vmem [resolvable:$true] %s21
      %27 = dma.hbm_to_vmem [thread:$0]  %s1, 4096, %s22, [#allocation3], 128, 128, 8
    $region9: #{tpu_custom_call.1} parent=1 // pred_fallthru
      _
    // Predicated region
    $region10: #{tpu_custom_call.1} parent=1 // pred_check
      _
    $region11: #{tpu_custom_call.1} parent=1 // pred_check_branch
      %29 = sbr.rel (0) target = $region13
    $region12: #{tpu_custom_call.1} parent=1 // pred_region
      _
    $region13: #{tpu_custom_call.1} parent=1 // pred_fallthru
      _
    // Predicated region
    $region14: #{tpu_custom_call.1} parent=1 // pred_check
      _
    $region15: #{tpu_custom_call.1} parent=1 // pred_check_branch
      %31 = sbr.rel (0) target = $region17
    $region16: #{tpu_custom_call.1} parent=1 // pred_region
      _
    $region17: #{tpu_custom_call.1} parent=1 // pred_fallthru
      _
    // Predicated region
    $region18: #{tpu_custom_call.1} parent=1 // pred_check
      _
    $region19: #{tpu_custom_call.1} parent=1 // pred_check_branch
      %33 = sbr.rel (0) target = $region21
    $region20: #{tpu_custom_call.1} parent=1 // pred_region
      _
    $region21: #{tpu_custom_call.1} parent=1 // pred_fallthru
      _
    // Predicated region
    $region22: #{tpu_custom_call.1} parent=1 // pred_check
      _
    $region23: #{tpu_custom_call.1} parent=1 // pred_check_branch
      %35 = sbr.rel (0) target = $region25
    $region24: #{tpu_custom_call.1} parent=1 // pred_region
      _
    $region25: #{tpu_custom_call.1} parent=1 // pred_fallthru
      _
    // Predicated region
    $region26: #{tpu_custom_call.1} parent=1 // pred_check
      _
    $region27: #{tpu_custom_call.1} parent=1 // pred_check_branch
      %37 = sbr.rel (0) target = $region29
    $region28: #{tpu_custom_call.1} parent=1 // pred_region
      _
    $region29: #{tpu_custom_call.1} parent=1 // pred_fallthru
      _
    // Predicated region
    $region30: #{tpu_custom_call.1} parent=1 // pred_check
      _
    $region31: #{tpu_custom_call.1} parent=1 // pred_check_branch
      %39 = sbr.rel (0) target = $region33
    $region32: #{tpu_custom_call.1} parent=1 // pred_region
      %40 = dma.done [#allocation3], 4096
    $region33: #{tpu_custom_call.1} parent=1 // pred_fallthru
      _
    %v41 = vld [vmem:[%s0] sm:$0xff]
    %v42 = vld [vmem:[%s0 + $0x8] sm:$0xff]
    %v43 = vld [vmem:[#allocation2] sm:$0xff]
    %v44 = vld [vmem:[#allocation2 + $0x8] sm:$0xff]
    %v45 = vld [vmem:[#allocation2 + $0x10] sm:$0xff]
    %v46 = vld [vmem:[#allocation2 + $0x18] sm:$0xff]
    %s47 = scalar_lea.vmem [#allocation2], 32
    %v48 = vld [vmem:[%s47] sm:$0xff]
    %v49 = vld [vmem:[%s47 + $0x8] sm:$0xff]
    %v50 = vld [vmem:[%s47 + $0x10] sm:$0xff]
    %v51 = vld [vmem:[%s47 + $0x18] sm:$0xff]
    %s52 = scalar_lea.vmem [#allocation2], 64
    %v53 = vld [vmem:[%s52] sm:$0xff]
    %v54 = vld [vmem:[%s52 + $0x8] sm:$0xff]
    %v55 = vld [vmem:[%s52 + $0x10] sm:$0xff]
    %v56 = vld [vmem:[%s52 + $0x18] sm:$0xff]
    %s57 = scalar_lea.vmem [#allocation2], 96
    %v58 = vld [vmem:[%s57] sm:$0xff]
    %v59 = vld [vmem:[%s57 + $0x8] sm:$0xff]
    %v60 = vld [vmem:[%s57 + $0x10] sm:$0xff]
    %v61 = vld [vmem:[%s57 + $0x18] sm:$0xff]
    %v62 = vld [vmem:[%s4] sm:$0xff]
    %v63 = vld [vmem:[%s4 + $0x8] sm:$0x1]
    %v64 = vld [vmem:[%s5] sm:$0x1]
    %v65 = vlaneseq
    %v66 = vshrl.u32 %v65, 7
    %v67 = vsub.s32 0, %v66
    %v68 = vrot.slane %v62, %v67
    %vm69 = vcmask 261120
    %v71 = vsel %vm69, %v41, 0
    %v74 = vsel %vm69, %v42, 0
    %76 = vmatprep.subr.mxu0 0.0
    %77 = vmatpush1.msra.mxu0 %v43
    %78 = vmatprep.subr.mxu0 0.0
    %79 = vmatpush1.msra.mxu0 %v44
    %80 = vmatprep.subr.mxu0 0.0
    %81 = vmatpush1.msra.mxu0 %v45
    %82 = vmatprep.subr.mxu0 0.0
    %83 = vmatpush1.msra.mxu0 %v46
    %84 = vmatprep.subr.mxu0 0.0
    %85 = vmatpush1.msra.mxu0 0.0
    %86 = vmatprep.subr.mxu0 0.0
    %87 = vmatpush1.msra.mxu0 0.0
    %88 = vmatprep.subr.mxu0 0.0
    %89 = vmatpush1.msra.mxu0 0.0
    %90 = vmatprep.subr.mxu0 0.0
    %91 = vmatpush1.msra.mxu0 0.0
    %92 = vmatprep.subr.mxu0 0.0
    %93 = vmatpush1.msra.mxu0 0.0
    %94 = vmatprep.subr.mxu0 0.0
    %95 = vmatpush1.msra.mxu0 0.0
    %96 = vmatprep.subr.mxu0 0.0
    %97 = vmatpush1.msra.mxu0 0.0
    %98 = vmatprep.subr.mxu0 0.0
    %99 = vmatpush1.msra.mxu0 0.0
    %100 = vmatprep.subr.mxu0 0.0
    %101 = vmatpush1.msra.mxu0 0.0
    %102 = vmatprep.subr.mxu0 0.0
    %103 = vmatpush1.msra.mxu0 0.0
    %104 = vmatprep.subr.mxu0 0.0
    %105 = vmatpush1.msra.mxu0 0.0
    %106 = vmatprep.subr.mxu0 0.0
    %107 = vmatpush1.msra.mxu0 0.0
    %108 = vmatprep.subr.mxu0 0.0
    %109 = vmatpush1.msra.mxu0 0.0
    %110 = vmatprep.subr.mxu0 0.0
    %111 = vmatpush1.msra.mxu0 0.0
    %112 = vmatprep.subr.mxu0 0.0
    %113 = vmatpush1.msra.mxu0 0.0
    %114 = vmatprep.subr.mxu0 0.0
    %115 = vmatpush1.msra.mxu0 0.0
    %116 = vmatprep.subr.mxu0 0.0
    %117 = vmatpush1.msra.mxu0 0.0
    %118 = vmatprep.subr.mxu0 0.0
    %119 = vmatpush1.msra.mxu0 0.0
    %120 = vmatprep.subr.mxu0 0.0
    %121 = vmatpush1.msra.mxu0 0.0
    %122 = vmatprep.subr.mxu0 0.0
    %123 = vmatpush1.msra.mxu0 0.0
    %124 = vmatprep.subr.mxu0 0.0
    %125 = vmatpush1.msra.mxu0 0.0
    %126 = vmatprep.subr.mxu0 0.0
    %127 = vmatpush1.msra.mxu0 0.0
    %128 = vmatprep.subr.mxu0 0.0
    %129 = vmatpush1.msra.mxu0 0.0
    %130 = vmatprep.subr.mxu0 0.0
    %131 = vmatpush1.msra.mxu0 0.0
    %132 = vmatprep.subr.mxu0 0.0
    %133 = vmatpush1.msra.mxu0 0.0
    %134 = vmatprep.subr.mxu0 0.0
    %135 = vmatpush1.msra.mxu0 0.0
    %136 = vmatprep.subr.mxu0 0.0
    %137 = vmatpush1.msra.mxu0 0.0
    %138 = vmatprep.subr.mxu0 0.0
    %139 = vmatpush1.msra.mxu0 0.0
    %140 = vmatprep.mubr.f32.mxu0 0.0
    %141 = vmatmul.mubr.f32.gmra.mrb[0].mxu0 %v71
    %v142 = vpop.f32.mrb[0].mxu0
    %v143 = vadd.f32 %v68, %v142
    %v144 = vpop.f32.mrb[0].mxu0
    %145 = vmatprep.mubr.f32.mxu0 0.0
    %146 = vmatmul.mubr.f32.gmra.mrb[0].mxu0 %v74
    %v147 = vpop.f32.mrb[0].mxu0
    %v148 = vadd.f32 %v68, %v147
    %v149 = vpop.f32.mrb[0].mxu0
    %150 = vdwg.mxu0
    %v151 = vmul.f32 %v143, 0.35355338
    %v152 = vmul.f32 %v148, 0.35355338
    %v153 = vlaneseq
    %v154 = vshrl.u32 %v153, 7
    %v155 = vsub.s32 1, %v154
    %v156 = vrot.slane %v62, %v155
    %157 = vmatprep.subr.mxu0 0.0
    %158 = vmatpush1.msra.mxu0 %v48
    %159 = vmatprep.subr.mxu0 0.0
    %160 = vmatpush1.msra.mxu0 %v49
    %161 = vmatprep.subr.mxu0 0.0
    %162 = vmatpush1.msra.mxu0 %v50
    %163 = vmatprep.subr.mxu0 0.0
    %164 = vmatpush1.msra.mxu0 %v51
    %165 = vmatprep.subr.mxu0 0.0
    %166 = vmatpush1.msra.mxu0 0.0
    %167 = vmatprep.subr.mxu0 0.0
    %168 = vmatpush1.msra.mxu0 0.0
    %169 = vmatprep.subr.mxu0 0.0
    %170 = vmatpush1.msra.mxu0 0.0
    %171 = vmatprep.subr.mxu0 0.0
    %172 = vmatpush1.msra.mxu0 0.0
    %173 = vmatprep.subr.mxu0 0.0
    %174 = vmatpush1.msra.mxu0 0.0
    %175 = vmatprep.subr.mxu0 0.0
    %176 = vmatpush1.msra.mxu0 0.0
    %177 = vmatprep.subr.mxu0 0.0
    %178 = vmatpush1.msra.mxu0 0.0
    %179 = vmatprep.subr.mxu0 0.0
    %180 = vmatpush1.msra.mxu0 0.0
    %181 = vmatprep.subr.mxu0 0.0
    %182 = vmatpush1.msra.mxu0 0.0
    %183 = vmatprep.subr.mxu0 0.0
    %184 = vmatpush1.msra.mxu0 0.0
    %185 = vmatprep.subr.mxu0 0.0
    %186 = vmatpush1.msra.mxu0 0.0
    %187 = vmatprep.subr.mxu0 0.0
    %188 = vmatpush1.msra.mxu0 0.0
    %189 = vmatprep.subr.mxu0 0.0
    %190 = vmatpush1.msra.mxu0 0.0
    %191 = vmatprep.subr.mxu0 0.0
    %192 = vmatpush1.msra.mxu0 0.0
    %193 = vmatprep.subr.mxu0 0.0
    %194 = vmatpush1.msra.mxu0 0.0
    %195 = vmatprep.subr.mxu0 0.0
    %196 = vmatpush1.msra.mxu0 0.0
    %197 = vmatprep.subr.mxu0 0.0
    %198 = vmatpush1.msra.mxu0 0.0
    %199 = vmatprep.subr.mxu0 0.0
    %200 = vmatpush1.msra.mxu0 0.0
    %201 = vmatprep.subr.mxu0 0.0
    %202 = vmatpush1.msra.mxu0 0.0
    %203 = vmatprep.subr.mxu0 0.0
    %204 = vmatpush1.msra.mxu0 0.0
    %205 = vmatprep.subr.mxu0 0.0
    %206 = vmatpush1.msra.mxu0 0.0
    %207 = vmatprep.subr.mxu0 0.0
    %208 = vmatpush1.msra.mxu0 0.0
    %209 = vmatprep.subr.mxu0 0.0
    %210 = vmatpush1.msra.mxu0 0.0
    %211 = vmatprep.subr.mxu0 0.0
    %212 = vmatpush1.msra.mxu0 0.0
    %213 = vmatprep.subr.mxu0 0.0
    %214 = vmatpush1.msra.mxu0 0.0
    %215 = vmatprep.subr.mxu0 0.0
    %216 = vmatpush1.msra.mxu0 0.0
    %217 = vmatprep.subr.mxu0 0.0
    %218 = vmatpush1.msra.mxu0 0.0
    %219 = vmatprep.subr.mxu0 0.0
    %220 = vmatpush1.msra.mxu0 0.0
    %221 = vmatprep.mubr.f32.mxu0 0.0
    %222 = vmatmul.mubr.f32.gmra.mrb[0].mxu0 %v71
    %v223 = vpop.f32.mrb[0].mxu0
    %v224 = vadd.f32 %v156, %v223
    %v225 = vpop.f32.mrb[0].mxu0
    %226 = vmatprep.mubr.f32.mxu0 0.0
    %227 = vmatmul.mubr.f32.gmra.mrb[0].mxu0 %v74
    %v228 = vpop.f32.mrb[0].mxu0
    %v229 = vadd.f32 %v156, %v228
    %v230 = vpop.f32.mrb[0].mxu0
    %231 = vdwg.mxu0
    %v232 = vlaneseq
    %v233 = vshrl.u32 %v232, 7
    %v234 = vsub.s32 2, %v233
    %v235 = vrot.slane %v62, %v234
    %236 = vmatprep.subr.mxu0 0.0
    %237 = vmatpush1.msra.mxu0 %v53
    %238 = vmatprep.subr.mxu0 0.0
    %239 = vmatpush1.msra.mxu0 %v54
    %240 = vmatprep.subr.mxu0 0.0
    %241 = vmatpush1.msra.mxu0 %v55
    %242 = vmatprep.subr.mxu0 0.0
    %243 = vmatpush1.msra.mxu0 %v56
    %244 = vmatprep.subr.mxu0 0.0
    %245 = vmatpush1.msra.mxu0 0.0
    %246 = vmatprep.subr.mxu0 0.0
    %247 = vmatpush1.msra.mxu0 0.0
    %248 = vmatprep.subr.mxu0 0.0
    %249 = vmatpush1.msra.mxu0 0.0
    %250 = vmatprep.subr.mxu0 0.0
    %251 = vmatpush1.msra.mxu0 0.0
    %252 = vmatprep.subr.mxu0 0.0
    %253 = vmatpush1.msra.mxu0 0.0
    %254 = vmatprep.subr.mxu0 0.0
    %255 = vmatpush1.msra.mxu0 0.0
    %256 = vmatprep.subr.mxu0 0.0
    %257 = vmatpush1.msra.mxu0 0.0
    %258 = vmatprep.subr.mxu0 0.0
    %259 = vmatpush1.msra.mxu0 0.0
    %260 = vmatprep.subr.mxu0 0.0
    %261 = vmatpush1.msra.mxu0 0.0
    %262 = vmatprep.subr.mxu0 0.0
    %263 = vmatpush1.msra.mxu0 0.0
    %264 = vmatprep.subr.mxu0 0.0
    %265 = vmatpush1.msra.mxu0 0.0
    %266 = vmatprep.subr.mxu0 0.0
    %267 = vmatpush1.msra.mxu0 0.0
    %268 = vmatprep.subr.mxu0 0.0
    %269 = vmatpush1.msra.mxu0 0.0
    %270 = vmatprep.subr.mxu0 0.0
    %271 = vmatpush1.msra.mxu0 0.0
    %272 = vmatprep.subr.mxu0 0.0
    %273 = vmatpush1.msra.mxu0 0.0
    %274 = vmatprep.subr.mxu0 0.0
    %275 = vmatpush1.msra.mxu0 0.0
    %276 = vmatprep.subr.mxu0 0.0
    %277 = vmatpush1.msra.mxu0 0.0
    %278 = vmatprep.subr.mxu0 0.0
    %279 = vmatpush1.msra.mxu0 0.0
    %280 = vmatprep.subr.mxu0 0.0
    %281 = vmatpush1.msra.mxu0 0.0
    %282 = vmatprep.subr.mxu0 0.0
    %283 = vmatpush1.msra.mxu0 0.0
    %284 = vmatprep.subr.mxu0 0.0
    %285 = vmatpush1.msra.mxu0 0.0
    %286 = vmatprep.subr.mxu0 0.0
    %287 = vmatpush1.msra.mxu0 0.0
    %288 = vmatprep.subr.mxu0 0.0
    %289 = vmatpush1.msra.mxu0 0.0
    %290 = vmatprep.subr.mxu0 0.0
    %291 = vmatpush1.msra.mxu0 0.0
    %292 = vmatprep.subr.mxu0 0.0
    %293 = vmatpush1.msra.mxu0 0.0
    %294 = vmatprep.subr.mxu0 0.0
    %295 = vmatpush1.msra.mxu0 0.0
    %296 = vmatprep.subr.mxu0 0.0
    %297 = vmatpush1.msra.mxu0 0.0
    %298 = vmatprep.subr.mxu0 0.0
    %299 = vmatpush1.msra.mxu0 0.0
    %300 = vmatprep.mubr.f32.mxu0 0.0
    %301 = vmatmul.mubr.f32.gmra.mrb[0].mxu0 %v71
    %v302 = vpop.f32.mrb[0].mxu0
    %v303 = vadd.f32 %v235, %v302
    %v304 = vpop.f32.mrb[0].mxu0
    %305 = vmatprep.mubr.f32.mxu0 0.0
    %306 = vmatmul.mubr.f32.gmra.mrb[0].mxu0 %v74
    %v307 = vpop.f32.mrb[0].mxu0
    %v308 = vadd.f32 %v235, %v307
    %v309 = vpop.f32.mrb[0].mxu0
    %310 = vdwg.mxu0
    %312 = vrot.lane.b32.xlu0 %v151, 120
    %v313 = vpop.permute.xlu0 %312
    %314 = vrot.lane.b32.xlu0 %v151, 112
    %v315 = vpop.permute.xlu0 %314
    %316 = vrot.lane.b32.xlu0 %v151, 104
    %v317 = vpop.permute.xlu0 %316
    %319 = vrot.lane.b32.xlu0 %v224, 120
    %v320 = vpop.permute.xlu0 %319
    %321 = vrot.lane.b32.xlu0 %v224, 112
    %v322 = vpop.permute.xlu0 %321
    %323 = vrot.lane.b32.xlu0 %v224, 104
    %v324 = vpop.permute.xlu0 %323
    %326 = vrot.lane.b32.xlu0 %v303, 120
    %v327 = vpop.permute.xlu0 %326
    %329 = vrot.lane.b32.xlu0 %v303, 112
    %v330 = vpop.permute.xlu0 %329
    %332 = vrot.lane.b32.xlu0 %v303, 104
    %v333 = vpop.permute.xlu0 %332
    %vm335 = vcmask 64512
    %v336 = vsel %vm335, %v151, 0
    %v338 = vsel %vm335, %v224, 0
    %340 = vmatprep.subr.mxu0 0.0
    %341 = vmatpush1.xpose.msra.mxu0 %v338
    %342 = vmatprep.subr.mxu0 0.0
    %343 = vmatpush1.xpose.msra.mxu0 0.0
    %344 = vmatprep.subr.mxu0 0.0
    %345 = vmatpush1.xpose.msra.mxu0 0.0
    %346 = vmatprep.subr.mxu0 0.0
    %347 = vmatpush1.xpose.msra.mxu0 0.0
    %348 = vmatprep.subr.mxu0 0.0
    %349 = vmatpush1.xpose.msra.mxu0 0.0
    %350 = vmatprep.subr.mxu0 0.0
    %351 = vmatpush1.xpose.msra.mxu0 0.0
    %352 = vmatprep.subr.mxu0 0.0
    %353 = vmatpush1.xpose.msra.mxu0 0.0
    %354 = vmatprep.subr.mxu0 0.0
    %355 = vmatpush1.xpose.msra.mxu0 0.0
    %356 = vmatprep.subr.mxu0 0.0
    %357 = vmatpush1.xpose.msra.mxu0 0.0
    %358 = vmatprep.subr.mxu0 0.0
    %359 = vmatpush1.xpose.msra.mxu0 0.0
    %360 = vmatprep.subr.mxu0 0.0
    %361 = vmatpush1.xpose.msra.mxu0 0.0
    %362 = vmatprep.subr.mxu0 0.0
    %363 = vmatpush1.xpose.msra.mxu0 0.0
    %364 = vmatprep.subr.mxu0 0.0
    %365 = vmatpush1.xpose.msra.mxu0 0.0
    %366 = vmatprep.subr.mxu0 0.0
    %367 = vmatpush1.xpose.msra.mxu0 0.0
    %368 = vmatprep.subr.mxu0 0.0
    %369 = vmatpush1.xpose.msra.mxu0 0.0
    %370 = vmatprep.subr.mxu0 0.0
    %371 = vmatpush1.xpose.msra.mxu0 0.0
    %372 = vmatprep.subr.mxu0 0.0
    %373 = vmatpush1.xpose.msra.mxu0 0.0
    %374 = vmatprep.subr.mxu0 0.0
    %375 = vmatpush1.xpose.msra.mxu0 0.0
    %376 = vmatprep.subr.mxu0 0.0
    %377 = vmatpush1.xpose.msra.mxu0 0.0
    %378 = vmatprep.subr.mxu0 0.0
    %379 = vmatpush1.xpose.msra.mxu0 0.0
    %380 = vmatprep.subr.mxu0 0.0
    %381 = vmatpush1.xpose.msra.mxu0 0.0
    %382 = vmatprep.subr.mxu0 0.0
    %383 = vmatpush1.xpose.msra.mxu0 0.0
    %384 = vmatprep.subr.mxu0 0.0
    %385 = vmatpush1.xpose.msra.mxu0 0.0
    %386 = vmatprep.subr.mxu0 0.0
    %387 = vmatpush1.xpose.msra.mxu0 0.0
    %388 = vmatprep.subr.mxu0 0.0
    %389 = vmatpush1.xpose.msra.mxu0 0.0
    %390 = vmatprep.subr.mxu0 0.0
    %391 = vmatpush1.xpose.msra.mxu0 0.0
    %392 = vmatprep.subr.mxu0 0.0
    %393 = vmatpush1.xpose.msra.mxu0 0.0
    %394 = vmatprep.subr.mxu0 0.0
    %395 = vmatpush1.xpose.msra.mxu0 0.0
    %396 = vmatprep.subr.mxu0 0.0
    %397 = vmatpush1.xpose.msra.mxu0 0.0
    %398 = vmatprep.subr.mxu0 0.0
    %399 = vmatpush1.xpose.msra.mxu0 0.0
    %400 = vmatprep.subr.mxu0 0.0
    %401 = vmatpush1.xpose.msra.mxu0 0.0
    %402 = vmatprep.subr.mxu0 0.0
    %403 = vmatpush1.xpose.msra.mxu0 0.0
    %404 = vmatprep.mubr.f32.mxu0 0.0
    %405 = vmatmul.mubr.f32.gmra.mrb[0].mxu0 %v336
    %v406 = vpop.f32.mrb[0].mxu0
    %v407 = vadd.f32 0.0, %v406
    %v408 = vpop.f32.mrb[0].mxu0
    %409 = vdwg.mxu0
    %v410 = vsel %vm335, %v313, 0
    %v412 = vsel %vm335, %v320, 0
    %414 = vmatprep.subr.mxu0 0.0
    %415 = vmatpush1.xpose.msra.mxu0 %v412
    %416 = vmatprep.subr.mxu0 0.0
    %417 = vmatpush1.xpose.msra.mxu0 0.0
    %418 = vmatprep.subr.mxu0 0.0
    %419 = vmatpush1.xpose.msra.mxu0 0.0
    %420 = vmatprep.subr.mxu0 0.0
    %421 = vmatpush1.xpose.msra.mxu0 0.0
    %422 = vmatprep.subr.mxu0 0.0
    %423 = vmatpush1.xpose.msra.mxu0 0.0
    %424 = vmatprep.subr.mxu0 0.0
    %425 = vmatpush1.xpose.msra.mxu0 0.0
    %426 = vmatprep.subr.mxu0 0.0
    %427 = vmatpush1.xpose.msra.mxu0 0.0
    %428 = vmatprep.subr.mxu0 0.0
    %429 = vmatpush1.xpose.msra.mxu0 0.0
    %430 = vmatprep.subr.mxu0 0.0
    %431 = vmatpush1.xpose.msra.mxu0 0.0
    %432 = vmatprep.subr.mxu0 0.0
    %433 = vmatpush1.xpose.msra.mxu0 0.0
    %434 = vmatprep.subr.mxu0 0.0
    %435 = vmatpush1.xpose.msra.mxu0 0.0
    %436 = vmatprep.subr.mxu0 0.0
    %437 = vmatpush1.xpose.msra.mxu0 0.0
    %438 = vmatprep.subr.mxu0 0.0
    %439 = vmatpush1.xpose.msra.mxu0 0.0
    %440 = vmatprep.subr.mxu0 0.0
    %441 = vmatpush1.xpose.msra.mxu0 0.0
    %442 = vmatprep.subr.mxu0 0.0
    %443 = vmatpush1.xpose.msra.mxu0 0.0
    %444 = vmatprep.subr.mxu0 0.0
    %445 = vmatpush1.xpose.msra.mxu0 0.0
    %446 = vmatprep.subr.mxu0 0.0
    %447 = vmatpush1.xpose.msra.mxu0 0.0
    %448 = vmatprep.subr.mxu0 0.0
    %449 = vmatpush1.xpose.msra.mxu0 0.0
    %450 = vmatprep.subr.mxu0 0.0
    %451 = vmatpush1.xpose.msra.mxu0 0.0
    %452 = vmatprep.subr.mxu0 0.0
    %453 = vmatpush1.xpose.msra.mxu0 0.0
    %454 = vmatprep.subr.mxu0 0.0
    %455 = vmatpush1.xpose.msra.mxu0 0.0
    %456 = vmatprep.subr.mxu0 0.0
    %457 = vmatpush1.xpose.msra.mxu0 0.0
    %458 = vmatprep.subr.mxu0 0.0
    %459 = vmatpush1.xpose.msra.mxu0 0.0
    %460 = vmatprep.subr.mxu0 0.0
    %461 = vmatpush1.xpose.msra.mxu0 0.0
    %462 = vmatprep.subr.mxu0 0.0
    %463 = vmatpush1.xpose.msra.mxu0 0.0
    %464 = vmatprep.subr.mxu0 0.0
    %465 = vmatpush1.xpose.msra.mxu0 0.0
    %466 = vmatprep.subr.mxu0 0.0
    %467 = vmatpush1.xpose.msra.mxu0 0.0
    %468 = vmatprep.subr.mxu0 0.0
    %469 = vmatpush1.xpose.msra.mxu0 0.0
    %470 = vmatprep.subr.mxu0 0.0
    %471 = vmatpush1.xpose.msra.mxu0 0.0
    %472 = vmatprep.subr.mxu0 0.0
    %473 = vmatpush1.xpose.msra.mxu0 0.0
    %474 = vmatprep.subr.mxu0 0.0
    %475 = vmatpush1.xpose.msra.mxu0 0.0
    %476 = vmatprep.subr.mxu0 0.0
    %477 = vmatpush1.xpose.msra.mxu0 0.0
    %478 = vmatprep.mubr.f32.mxu0 0.0
    %479 = vmatmul.mubr.f32.gmra.mrb[0].mxu0 %v410
    %v480 = vpop.f32.mrb[0].mxu0
    %v481 = vadd.f32 0.0, %v480
    %v482 = vpop.f32.mrb[0].mxu0
    %483 = vdwg.mxu0
    %v484 = vsel %vm335, %v315, 0
    %v486 = vsel %vm335, %v322, 0
    %488 = vmatprep.subr.mxu0 0.0
    %489 = vmatpush1.xpose.msra.mxu0 %v486
    %490 = vmatprep.subr.mxu0 0.0
    %491 = vmatpush1.xpose.msra.mxu0 0.0
    %492 = vmatprep.subr.mxu0 0.0
    %493 = vmatpush1.xpose.msra.mxu0 0.0
    %494 = vmatprep.subr.mxu0 0.0
    %495 = vmatpush1.xpose.msra.mxu0 0.0
    %496 = vmatprep.subr.mxu0 0.0
    %497 = vmatpush1.xpose.msra.mxu0 0.0
    %498 = vmatprep.subr.mxu0 0.0
    %499 = vmatpush1.xpose.msra.mxu0 0.0
    %500 = vmatprep.subr.mxu0 0.0
    %501 = vmatpush1.xpose.msra.mxu0 0.0
    %502 = vmatprep.subr.mxu0 0.0
    %503 = vmatpush1.xpose.msra.mxu0 0.0
    %504 = vmatprep.subr.mxu0 0.0
    %505 = vmatpush1.xpose.msra.mxu0 0.0
    %506 = vmatprep.subr.mxu0 0.0
    %507 = vmatpush1.xpose.msra.mxu0 0.0
    %508 = vmatprep.subr.mxu0 0.0
    %509 = vmatpush1.xpose.msra.mxu0 0.0
    %510 = vmatprep.subr.mxu0 0.0
    %511 = vmatpush1.xpose.msra.mxu0 0.0
    %512 = vmatprep.subr.mxu0 0.0
    %513 = vmatpush1.xpose.msra.mxu0 0.0
    %514 = vmatprep.subr.mxu0 0.0
    %515 = vmatpush1.xpose.msra.mxu0 0.0
    %516 = vmatprep.subr.mxu0 0.0
    %517 = vmatpush1.xpose.msra.mxu0 0.0
    %518 = vmatprep.subr.mxu0 0.0
    %519 = vmatpush1.xpose.msra.mxu0 0.0
    %520 = vmatprep.subr.mxu0 0.0
    %521 = vmatpush1.xpose.msra.mxu0 0.0
    %522 = vmatprep.subr.mxu0 0.0
    %523 = vmatpush1.xpose.msra.mxu0 0.0
    %524 = vmatprep.subr.mxu0 0.0
    %525 = vmatpush1.xpose.msra.mxu0 0.0
    %526 = vmatprep.subr.mxu0 0.0
    %527 = vmatpush1.xpose.msra.mxu0 0.0
    %528 = vmatprep.subr.mxu0 0.0
    %529 = vmatpush1.xpose.msra.mxu0 0.0
    %530 = vmatprep.subr.mxu0 0.0
    %531 = vmatpush1.xpose.msra.mxu0 0.0
    %532 = vmatprep.subr.mxu0 0.0
    %533 = vmatpush1.xpose.msra.mxu0 0.0
    %534 = vmatprep.subr.mxu0 0.0
    %535 = vmatpush1.xpose.msra.mxu0 0.0
    %536 = vmatprep.subr.mxu0 0.0
    %537 = vmatpush1.xpose.msra.mxu0 0.0
    %538 = vmatprep.subr.mxu0 0.0
    %539 = vmatpush1.xpose.msra.mxu0 0.0
    %540 = vmatprep.subr.mxu0 0.0
    %541 = vmatpush1.xpose.msra.mxu0 0.0
    %542 = vmatprep.subr.mxu0 0.0
    %543 = vmatpush1.xpose.msra.mxu0 0.0
    %544 = vmatprep.subr.mxu0 0.0
    %545 = vmatpush1.xpose.msra.mxu0 0.0
    %546 = vmatprep.subr.mxu0 0.0
    %547 = vmatpush1.xpose.msra.mxu0 0.0
    %548 = vmatprep.subr.mxu0 0.0
    %549 = vmatpush1.xpose.msra.mxu0 0.0
    %550 = vmatprep.subr.mxu0 0.0
    %551 = vmatpush1.xpose.msra.mxu0 0.0
    %552 = vmatprep.mubr.f32.mxu0 0.0
    %553 = vmatmul.mubr.f32.gmra.mrb[0].mxu0 %v484
    %v554 = vpop.f32.mrb[0].mxu0
    %v555 = vadd.f32 0.0, %v554
    %v556 = vpop.f32.mrb[0].mxu0
    %557 = vdwg.mxu0
    %v558 = vsel %vm335, %v317, 0
    %v560 = vsel %vm335, %v324, 0
    %562 = vmatprep.subr.mxu0 0.0
    %563 = vmatpush1.xpose.msra.mxu0 %v560
    %564 = vmatprep.subr.mxu0 0.0
    %565 = vmatpush1.xpose.msra.mxu0 0.0
    %566 = vmatprep.subr.mxu0 0.0
    %567 = vmatpush1.xpose.msra.mxu0 0.0
    %568 = vmatprep.subr.mxu0 0.0
    %569 = vmatpush1.xpose.msra.mxu0 0.0
    %570 = vmatprep.subr.mxu0 0.0
    %571 = vmatpush1.xpose.msra.mxu0 0.0
    %572 = vmatprep.subr.mxu0 0.0
    %573 = vmatpush1.xpose.msra.mxu0 0.0
    %574 = vmatprep.subr.mxu0 0.0
    %575 = vmatpush1.xpose.msra.mxu0 0.0
    %576 = vmatprep.subr.mxu0 0.0
    %577 = vmatpush1.xpose.msra.mxu0 0.0
    %578 = vmatprep.subr.mxu0 0.0
    %579 = vmatpush1.xpose.msra.mxu0 0.0
    %580 = vmatprep.subr.mxu0 0.0
    %581 = vmatpush1.xpose.msra.mxu0 0.0
    %582 = vmatprep.subr.mxu0 0.0
    %583 = vmatpush1.xpose.msra.mxu0 0.0
    %584 = vmatprep.subr.mxu0 0.0
    %585 = vmatpush1.xpose.msra.mxu0 0.0
    %586 = vmatprep.subr.mxu0 0.0
    %587 = vmatpush1.xpose.msra.mxu0 0.0
    %588 = vmatprep.subr.mxu0 0.0
    %589 = vmatpush1.xpose.msra.mxu0 0.0
    %590 = vmatprep.subr.mxu0 0.0
    %591 = vmatpush1.xpose.msra.mxu0 0.0
    %592 = vmatprep.subr.mxu0 0.0
    %593 = vmatpush1.xpose.msra.mxu0 0.0
    %594 = vmatprep.subr.mxu0 0.0
    %595 = vmatpush1.xpose.msra.mxu0 0.0
    %596 = vmatprep.subr.mxu0 0.0
    %597 = vmatpush1.xpose.msra.mxu0 0.0
    %598 = vmatprep.subr.mxu0 0.0
    %599 = vmatpush1.xpose.msra.mxu0 0.0
    %600 = vmatprep.subr.mxu0 0.0
    %601 = vmatpush1.xpose.msra.mxu0 0.0
    %602 = vmatprep.subr.mxu0 0.0
    %603 = vmatpush1.xpose.msra.mxu0 0.0
    %604 = vmatprep.subr.mxu0 0.0
    %605 = vmatpush1.xpose.msra.mxu0 0.0
    %606 = vmatprep.subr.mxu0 0.0
    %607 = vmatpush1.xpose.msra.mxu0 0.0
    %608 = vmatprep.subr.mxu0 0.0
    %609 = vmatpush1.xpose.msra.mxu0 0.0
    %610 = vmatprep.subr.mxu0 0.0
    %611 = vmatpush1.xpose.msra.mxu0 0.0
    %612 = vmatprep.subr.mxu0 0.0
    %613 = vmatpush1.xpose.msra.mxu0 0.0
    %614 = vmatprep.subr.mxu0 0.0
    %615 = vmatpush1.xpose.msra.mxu0 0.0
    %616 = vmatprep.subr.mxu0 0.0
    %617 = vmatpush1.xpose.msra.mxu0 0.0
    %618 = vmatprep.subr.mxu0 0.0
    %619 = vmatpush1.xpose.msra.mxu0 0.0
    %620 = vmatprep.subr.mxu0 0.0
    %621 = vmatpush1.xpose.msra.mxu0 0.0
    %622 = vmatprep.subr.mxu0 0.0
    %623 = vmatpush1.xpose.msra.mxu0 0.0
    %624 = vmatprep.subr.mxu0 0.0
    %625 = vmatpush1.xpose.msra.mxu0 0.0
    %626 = vmatprep.mubr.f32.mxu0 0.0
    %627 = vmatmul.mubr.f32.gmra.mrb[0].mxu0 %v558
    %v628 = vpop.f32.mrb[0].mxu0
    %v629 = vadd.f32 0.0, %v628
    %v630 = vpop.f32.mrb[0].mxu0
    %631 = vdwg.mxu0
    %v632 = vsel %vm335, %v407, -inf
    %v633 = vsel %vm335, %v481, -inf
    %v634 = vsel %vm335, %v555, -inf
    %v635 = vsel %vm335, %v629, -inf
    %v636 = vmax.f32 %v632, %v633
    %v637 = vmax.f32 %v634, %v635
    %v638 = vmax.f32 %v636, %v637
    %v639 = vsub.f32 %v407, %v638
    %v640 = vsub.f32 %v481, %v638
    %v641 = vsub.f32 %v555, %v638
    %v642 = vsub.f32 %v629, %v638
    %v643 = vmul.f32 %v639, 1.442695
    %v644 = vpow.pop %v643
    %v645 = vmul.f32 %v640, 1.442695
    %v646 = vpow.pop %v645
    %v647 = vmul.f32 %v641, 1.442695
    %v648 = vpow.pop %v647
    %v649 = vmul.f32 %v642, 1.442695
    %v650 = vpow.pop %v649
    %v651 = vsel %vm335, %v644, 0.0
    %v652 = vsel %vm335, %v646, 0.0
    %v653 = vadd.f32 %v651, %v652
    %v654 = vsel %vm335, %v648, 0.0
    %v655 = vadd.f32 %v653, %v654
    %v656 = vsel %vm335, %v650, 0.0
    %v657 = vadd.f32 %v655, %v656
    %v658 = vrcp.pop %v657
    %v659 = vmul.f32 %v644, %v658
    %v660 = vmul.f32 %v646, %v658
    %v661 = vmul.f32 %v648, %v658
    %v662 = vmul.f32 %v650, %v658
    %v664 = vsel %vm335, %v659, 0
    %666 = vmatprep.subr.mxu0 0.0
    %667 = vmatpush1.msra.mxu0 %v303
    %668 = vmatprep.subr.mxu0 0.0
    %669 = vmatpush1.msra.mxu0 0.0
    %670 = vmatprep.subr.mxu0 0.0
    %671 = vmatpush1.msra.mxu0 0.0
    %672 = vmatprep.subr.mxu0 0.0
    %673 = vmatpush1.msra.mxu0 0.0
    %674 = vmatprep.subr.mxu0 0.0
    %675 = vmatpush1.msra.mxu0 0.0
    %676 = vmatprep.subr.mxu0 0.0
    %677 = vmatpush1.msra.mxu0 0.0
    %678 = vmatprep.subr.mxu0 0.0
    %679 = vmatpush1.msra.mxu0 0.0
    %680 = vmatprep.subr.mxu0 0.0
    %681 = vmatpush1.msra.mxu0 0.0
    %682 = vmatprep.subr.mxu0 0.0
    %683 = vmatpush1.msra.mxu0 0.0
    %684 = vmatprep.subr.mxu0 0.0
    %685 = vmatpush1.msra.mxu0 0.0
    %686 = vmatprep.subr.mxu0 0.0
    %687 = vmatpush1.msra.mxu0 0.0
    %688 = vmatprep.subr.mxu0 0.0
    %689 = vmatpush1.msra.mxu0 0.0
    %690 = vmatprep.subr.mxu0 0.0
    %691 = vmatpush1.msra.mxu0 0.0
    %692 = vmatprep.subr.mxu0 0.0
    %693 = vmatpush1.msra.mxu0 0.0
    %694 = vmatprep.subr.mxu0 0.0
    %695 = vmatpush1.msra.mxu0 0.0
    %696 = vmatprep.subr.mxu0 0.0
    %697 = vmatpush1.msra.mxu0 0.0
    %698 = vmatprep.subr.mxu0 0.0
    %699 = vmatpush1.msra.mxu0 0.0
    %700 = vmatprep.subr.mxu0 0.0
    %701 = vmatpush1.msra.mxu0 0.0
    %702 = vmatprep.subr.mxu0 0.0
    %703 = vmatpush1.msra.mxu0 0.0
    %704 = vmatprep.subr.mxu0 0.0
    %705 = vmatpush1.msra.mxu0 0.0
    %706 = vmatprep.subr.mxu0 0.0
    %707 = vmatpush1.msra.mxu0 0.0
    %708 = vmatprep.subr.mxu0 0.0
    %709 = vmatpush1.msra.mxu0 0.0
    %710 = vmatprep.subr.mxu0 0.0
    %711 = vmatpush1.msra.mxu0 0.0
    %712 = vmatprep.subr.mxu0 0.0
    %713 = vmatpush1.msra.mxu0 0.0
    %714 = vmatprep.subr.mxu0 0.0
    %715 = vmatpush1.msra.mxu0 0.0
    %716 = vmatprep.subr.mxu0 0.0
    %717 = vmatpush1.msra.mxu0 0.0
    %718 = vmatprep.subr.mxu0 0.0
    %719 = vmatpush1.msra.mxu0 0.0
    %720 = vmatprep.subr.mxu0 0.0
    %721 = vmatpush1.msra.mxu0 0.0
    %722 = vmatprep.subr.mxu0 0.0
    %723 = vmatpush1.msra.mxu0 0.0
    %724 = vmatprep.subr.mxu0 0.0
    %725 = vmatpush1.msra.mxu0 0.0
    %726 = vmatprep.subr.mxu0 0.0
    %727 = vmatpush1.msra.mxu0 0.0
    %728 = vmatprep.subr.mxu0 0.0
    %729 = vmatpush1.msra.mxu0 0.0
    %730 = vmatprep.mubr.f32.mxu0 0.0
    %731 = vmatmul.mubr.f32.gmra.mrb[0].mxu0 %v664
    %v732 = vpop.f32.mrb[0].mxu0
    %v733 = vadd.f32 0.0, %v732
    %v734 = vpop.f32.mrb[0].mxu0
    %735 = vdwg.mxu0
    %v737 = vsel %vm335, %v660, 0
    %739 = vmatprep.subr.mxu0 0.0
    %740 = vmatpush1.msra.mxu0 %v327
    %741 = vmatprep.subr.mxu0 0.0
    %742 = vmatpush1.msra.mxu0 0.0
    %743 = vmatprep.subr.mxu0 0.0
    %744 = vmatpush1.msra.mxu0 0.0
    %745 = vmatprep.subr.mxu0 0.0
    %746 = vmatpush1.msra.mxu0 0.0
    %747 = vmatprep.subr.mxu0 0.0
    %748 = vmatpush1.msra.mxu0 0.0
    %749 = vmatprep.subr.mxu0 0.0
    %750 = vmatpush1.msra.mxu0 0.0
    %751 = vmatprep.subr.mxu0 0.0
    %752 = vmatpush1.msra.mxu0 0.0
    %753 = vmatprep.subr.mxu0 0.0
    %754 = vmatpush1.msra.mxu0 0.0
    %755 = vmatprep.subr.mxu0 0.0
    %756 = vmatpush1.msra.mxu0 0.0
    %757 = vmatprep.subr.mxu0 0.0
    %758 = vmatpush1.msra.mxu0 0.0
    %759 = vmatprep.subr.mxu0 0.0
    %760 = vmatpush1.msra.mxu0 0.0
    %761 = vmatprep.subr.mxu0 0.0
    %762 = vmatpush1.msra.mxu0 0.0
    %763 = vmatprep.subr.mxu0 0.0
    %764 = vmatpush1.msra.mxu0 0.0
    %765 = vmatprep.subr.mxu0 0.0
    %766 = vmatpush1.msra.mxu0 0.0
    %767 = vmatprep.subr.mxu0 0.0
    %768 = vmatpush1.msra.mxu0 0.0
    %769 = vmatprep.subr.mxu0 0.0
    %770 = vmatpush1.msra.mxu0 0.0
    %771 = vmatprep.subr.mxu0 0.0
    %772 = vmatpush1.msra.mxu0 0.0
    %773 = vmatprep.subr.mxu0 0.0
    %774 = vmatpush1.msra.mxu0 0.0
    %775 = vmatprep.subr.mxu0 0.0
    %776 = vmatpush1.msra.mxu0 0.0
    %777 = vmatprep.subr.mxu0 0.0
    %778 = vmatpush1.msra.mxu0 0.0
    %779 = vmatprep.subr.mxu0 0.0
    %780 = vmatpush1.msra.mxu0 0.0
    %781 = vmatprep.subr.mxu0 0.0
    %782 = vmatpush1.msra.mxu0 0.0
    %783 = vmatprep.subr.mxu0 0.0
    %784 = vmatpush1.msra.mxu0 0.0
    %785 = vmatprep.subr.mxu0 0.0
    %786 = vmatpush1.msra.mxu0 0.0
    %787 = vmatprep.subr.mxu0 0.0
    %788 = vmatpush1.msra.mxu0 0.0
    %789 = vmatprep.subr.mxu0 0.0
    %790 = vmatpush1.msra.mxu0 0.0
    %791 = vmatprep.subr.mxu0 0.0
    %792 = vmatpush1.msra.mxu0 0.0
    %793 = vmatprep.subr.mxu0 0.0
    %794 = vmatpush1.msra.mxu0 0.0
    %795 = vmatprep.subr.mxu0 0.0
    %796 = vmatpush1.msra.mxu0 0.0
    %797 = vmatprep.subr.mxu0 0.0
    %798 = vmatpush1.msra.mxu0 0.0
    %799 = vmatprep.subr.mxu0 0.0
    %800 = vmatpush1.msra.mxu0 0.0
    %801 = vmatprep.subr.mxu0 0.0
    %802 = vmatpush1.msra.mxu0 0.0
    %803 = vmatprep.mubr.f32.mxu0 0.0
    %804 = vmatmul.mubr.f32.gmra.mrb[0].mxu0 %v737
    %v805 = vpop.f32.mrb[0].mxu0
    %v806 = vadd.f32 0.0, %v805
    %v807 = vpop.f32.mrb[0].mxu0
    %808 = vdwg.mxu0
    %v810 = vsel %vm335, %v661, 0
    %812 = vmatprep.subr.mxu0 0.0
    %813 = vmatpush1.msra.mxu0 %v330
    %814 = vmatprep.subr.mxu0 0.0
    %815 = vmatpush1.msra.mxu0 0.0
    %816 = vmatprep.subr.mxu0 0.0
    %817 = vmatpush1.msra.mxu0 0.0
    %818 = vmatprep.subr.mxu0 0.0
    %819 = vmatpush1.msra.mxu0 0.0
    %820 = vmatprep.subr.mxu0 0.0
    %821 = vmatpush1.msra.mxu0 0.0
    %822 = vmatprep.subr.mxu0 0.0
    %823 = vmatpush1.msra.mxu0 0.0
    %824 = vmatprep.subr.mxu0 0.0
    %825 = vmatpush1.msra.mxu0 0.0
    %826 = vmatprep.subr.mxu0 0.0
    %827 = vmatpush1.msra.mxu0 0.0
    %828 = vmatprep.subr.mxu0 0.0
    %829 = vmatpush1.msra.mxu0 0.0
    %830 = vmatprep.subr.mxu0 0.0
    %831 = vmatpush1.msra.mxu0 0.0
    %832 = vmatprep.subr.mxu0 0.0
    %833 = vmatpush1.msra.mxu0 0.0
    %834 = vmatprep.subr.mxu0 0.0
    %835 = vmatpush1.msra.mxu0 0.0
    %836 = vmatprep.subr.mxu0 0.0
    %837 = vmatpush1.msra.mxu0 0.0
    %838 = vmatprep.subr.mxu0 0.0
    %839 = vmatpush1.msra.mxu0 0.0
    %840 = vmatprep.subr.mxu0 0.0
    %841 = vmatpush1.msra.mxu0 0.0
    %842 = vmatprep.subr.mxu0 0.0
    %843 = vmatpush1.msra.mxu0 0.0
    %844 = vmatprep.subr.mxu0 0.0
    %845 = vmatpush1.msra.mxu0 0.0
    %846 = vmatprep.subr.mxu0 0.0
    %847 = vmatpush1.msra.mxu0 0.0
    %848 = vmatprep.subr.mxu0 0.0
    %849 = vmatpush1.msra.mxu0 0.0
    %850 = vmatprep.subr.mxu0 0.0
    %851 = vmatpush1.msra.mxu0 0.0
    %852 = vmatprep.subr.mxu0 0.0
    %853 = vmatpush1.msra.mxu0 0.0
    %854 = vmatprep.subr.mxu0 0.0
    %855 = vmatpush1.msra.mxu0 0.0
    %856 = vmatprep.subr.mxu0 0.0
    %857 = vmatpush1.msra.mxu0 0.0
    %858 = vmatprep.subr.mxu0 0.0
    %859 = vmatpush1.msra.mxu0 0.0
    %860 = vmatprep.subr.mxu0 0.0
    %861 = vmatpush1.msra.mxu0 0.0
    %862 = vmatprep.subr.mxu0 0.0
    %863 = vmatpush1.msra.mxu0 0.0
    %864 = vmatprep.subr.mxu0 0.0
    %865 = vmatpush1.msra.mxu0 0.0
    %866 = vmatprep.subr.mxu0 0.0
    %867 = vmatpush1.msra.mxu0 0.0
    %868 = vmatprep.subr.mxu0 0.0
    %869 = vmatpush1.msra.mxu0 0.0
    %870 = vmatprep.subr.mxu0 0.0
    %871 = vmatpush1.msra.mxu0 0.0
    %872 = vmatprep.subr.mxu0 0.0
    %873 = vmatpush1.msra.mxu0 0.0
    %874 = vmatprep.subr.mxu0 0.0
    %875 = vmatpush1.msra.mxu0 0.0
    %876 = vmatprep.mubr.f32.mxu0 0.0
    %877 = vmatmul.mubr.f32.gmra.mrb[0].mxu0 %v810
    %v878 = vpop.f32.mrb[0].mxu0
    %v879 = vadd.f32 0.0, %v878
    %v880 = vpop.f32.mrb[0].mxu0
    %881 = vdwg.mxu0
    %v883 = vsel %vm335, %v662, 0
    %885 = vmatprep.subr.mxu0 0.0
    %886 = vmatpush1.msra.mxu0 %v333
    %887 = vmatprep.subr.mxu0 0.0
    %888 = vmatpush1.msra.mxu0 0.0
    %889 = vmatprep.subr.mxu0 0.0
    %890 = vmatpush1.msra.mxu0 0.0
    %891 = vmatprep.subr.mxu0 0.0
    %892 = vmatpush1.msra.mxu0 0.0
    %893 = vmatprep.subr.mxu0 0.0
    %894 = vmatpush1.msra.mxu0 0.0
    %895 = vmatprep.subr.mxu0 0.0
    %896 = vmatpush1.msra.mxu0 0.0
    %897 = vmatprep.subr.mxu0 0.0
    %898 = vmatpush1.msra.mxu0 0.0
    %899 = vmatprep.subr.mxu0 0.0
    %900 = vmatpush1.msra.mxu0 0.0
    %901 = vmatprep.subr.mxu0 0.0
    %902 = vmatpush1.msra.mxu0 0.0
    %903 = vmatprep.subr.mxu0 0.0
    %904 = vmatpush1.msra.mxu0 0.0
    %905 = vmatprep.subr.mxu0 0.0
    %906 = vmatpush1.msra.mxu0 0.0
    %907 = vmatprep.subr.mxu0 0.0
    %908 = vmatpush1.msra.mxu0 0.0
    %909 = vmatprep.subr.mxu0 0.0
    %910 = vmatpush1.msra.mxu0 0.0
    %911 = vmatprep.subr.mxu0 0.0
    %912 = vmatpush1.msra.mxu0 0.0
    %913 = vmatprep.subr.mxu0 0.0
    %914 = vmatpush1.msra.mxu0 0.0
    %915 = vmatprep.subr.mxu0 0.0
    %916 = vmatpush1.msra.mxu0 0.0
    %917 = vmatprep.subr.mxu0 0.0
    %918 = vmatpush1.msra.mxu0 0.0
    %919 = vmatprep.subr.mxu0 0.0
    %920 = vmatpush1.msra.mxu0 0.0
    %921 = vmatprep.subr.mxu0 0.0
    %922 = vmatpush1.msra.mxu0 0.0
    %923 = vmatprep.subr.mxu0 0.0
    %924 = vmatpush1.msra.mxu0 0.0
    %925 = vmatprep.subr.mxu0 0.0
    %926 = vmatpush1.msra.mxu0 0.0
    %927 = vmatprep.subr.mxu0 0.0
    %928 = vmatpush1.msra.mxu0 0.0
    %929 = vmatprep.subr.mxu0 0.0
    %930 = vmatpush1.msra.mxu0 0.0
    %931 = vmatprep.subr.mxu0 0.0
    %932 = vmatpush1.msra.mxu0 0.0
    %933 = vmatprep.subr.mxu0 0.0
    %934 = vmatpush1.msra.mxu0 0.0
    %935 = vmatprep.subr.mxu0 0.0
    %936 = vmatpush1.msra.mxu0 0.0
    %937 = vmatprep.subr.mxu0 0.0
    %938 = vmatpush1.msra.mxu0 0.0
    %939 = vmatprep.subr.mxu0 0.0
    %940 = vmatpush1.msra.mxu0 0.0
    %941 = vmatprep.subr.mxu0 0.0
    %942 = vmatpush1.msra.mxu0 0.0
    %943 = vmatprep.subr.mxu0 0.0
    %944 = vmatpush1.msra.mxu0 0.0
    %945 = vmatprep.subr.mxu0 0.0
    %946 = vmatpush1.msra.mxu0 0.0
    %947 = vmatprep.subr.mxu0 0.0
    %948 = vmatpush1.msra.mxu0 0.0
    %949 = vmatprep.mubr.f32.mxu0 0.0
    %950 = vmatmul.mubr.f32.gmra.mrb[0].mxu0 %v883
    %v951 = vpop.f32.mrb[0].mxu0
    %v952 = vadd.f32 0.0, %v951
    %v953 = vpop.f32.mrb[0].mxu0
    %954 = vdwg.mxu0
    %956 = vrot.lane.b32.xlu0 %v806, 8
    %v957 = vpop.permute.xlu0 %956
    %960 = vrot.lane.b32.xlu0 %v879, 16
    %v961 = vpop.permute.xlu0 %960
    %964 = vrot.lane.b32.xlu0 %v952, 24
    %v965 = vpop.permute.xlu0 %964
    %v967 = vsel %vm335, %v733, %v957
    %vm968 = vcmask 130048
    %v969 = vsel %vm968, %v967, %v961
    %vm970 = vcmask 195584
    %v971 = vsel %vm970, %v969, %v965
    %973 = vrot.lane.b32.xlu0 %v152, 120
    %v974 = vpop.permute.xlu0 %973
    %975 = vrot.lane.b32.xlu0 %v152, 112
    %v976 = vpop.permute.xlu0 %975
    %977 = vrot.lane.b32.xlu0 %v152, 104
    %v978 = vpop.permute.xlu0 %977
    %980 = vrot.lane.b32.xlu0 %v229, 120
    %v981 = vpop.permute.xlu0 %980
    %982 = vrot.lane.b32.xlu0 %v229, 112
    %v983 = vpop.permute.xlu0 %982
    %984 = vrot.lane.b32.xlu0 %v229, 104
    %v985 = vpop.permute.xlu0 %984
    %987 = vrot.lane.b32.xlu0 %v308, 120
    %v988 = vpop.permute.xlu0 %987
    %990 = vrot.lane.b32.xlu0 %v308, 112
    %v991 = vpop.permute.xlu0 %990
    %993 = vrot.lane.b32.xlu0 %v308, 104
    %v994 = vpop.permute.xlu0 %993
    %v996 = vsel %vm335, %v152, 0
    %v998 = vsel %vm335, %v229, 0
    %1000 = vmatprep.subr.mxu0 0.0
    %1001 = vmatpush1.xpose.msra.mxu0 %v998
    %1002 = vmatprep.subr.mxu0 0.0
    %1003 = vmatpush1.xpose.msra.mxu0 0.0
    %1004 = vmatprep.subr.mxu0 0.0
    %1005 = vmatpush1.xpose.msra.mxu0 0.0
    %1006 = vmatprep.subr.mxu0 0.0
    %1007 = vmatpush1.xpose.msra.mxu0 0.0
    %1008 = vmatprep.subr.mxu0 0.0
    %1009 = vmatpush1.xpose.msra.mxu0 0.0
    %1010 = vmatprep.subr.mxu0 0.0
    %1011 = vmatpush1.xpose.msra.mxu0 0.0
    %1012 = vmatprep.subr.mxu0 0.0
    %1013 = vmatpush1.xpose.msra.mxu0 0.0
    %1014 = vmatprep.subr.mxu0 0.0
    %1015 = vmatpush1.xpose.msra.mxu0 0.0
    %1016 = vmatprep.subr.mxu0 0.0
    %1017 = vmatpush1.xpose.msra.mxu0 0.0
    %1018 = vmatprep.subr.mxu0 0.0
    %1019 = vmatpush1.xpose.msra.mxu0 0.0
    %1020 = vmatprep.subr.mxu0 0.0
    %1021 = vmatpush1.xpose.msra.mxu0 0.0
    %1022 = vmatprep.subr.mxu0 0.0
    %1023 = vmatpush1.xpose.msra.mxu0 0.0
    %1024 = vmatprep.subr.mxu0 0.0
    %1025 = vmatpush1.xpose.msra.mxu0 0.0
    %1026 = vmatprep.subr.mxu0 0.0
    %1027 = vmatpush1.xpose.msra.mxu0 0.0
    %1028 = vmatprep.subr.mxu0 0.0
    %1029 = vmatpush1.xpose.msra.mxu0 0.0
    %1030 = vmatprep.subr.mxu0 0.0
    %1031 = vmatpush1.xpose.msra.mxu0 0.0
    %1032 = vmatprep.subr.mxu0 0.0
    %1033 = vmatpush1.xpose.msra.mxu0 0.0
    %1034 = vmatprep.subr.mxu0 0.0
    %1035 = vmatpush1.xpose.msra.mxu0 0.0
    %1036 = vmatprep.subr.mxu0 0.0
    %1037 = vmatpush1.xpose.msra.mxu0 0.0
    %1038 = vmatprep.subr.mxu0 0.0
    %1039 = vmatpush1.xpose.msra.mxu0 0.0
    %1040 = vmatprep.subr.mxu0 0.0
    %1041 = vmatpush1.xpose.msra.mxu0 0.0
    %1042 = vmatprep.subr.mxu0 0.0
    %1043 = vmatpush1.xpose.msra.mxu0 0.0
    %1044 = vmatprep.subr.mxu0 0.0
    %1045 = vmatpush1.xpose.msra.mxu0 0.0
    %1046 = vmatprep.subr.mxu0 0.0
    %1047 = vmatpush1.xpose.msra.mxu0 0.0
    %1048 = vmatprep.subr.mxu0 0.0
    %1049 = vmatpush1.xpose.msra.mxu0 0.0
    %1050 = vmatprep.subr.mxu0 0.0
    %1051 = vmatpush1.xpose.msra.mxu0 0.0
    %1052 = vmatprep.subr.mxu0 0.0
    %1053 = vmatpush1.xpose.msra.mxu0 0.0
    %1054 = vmatprep.subr.mxu0 0.0
    %1055 = vmatpush1.xpose.msra.mxu0 0.0
    %1056 = vmatprep.subr.mxu0 0.0
    %1057 = vmatpush1.xpose.msra.mxu0 0.0
    %1058 = vmatprep.subr.mxu0 0.0
    %1059 = vmatpush1.xpose.msra.mxu0 0.0
    %1060 = vmatprep.subr.mxu0 0.0
    %1061 = vmatpush1.xpose.msra.mxu0 0.0
    %1062 = vmatprep.subr.mxu0 0.0
    %1063 = vmatpush1.xpose.msra.mxu0 0.0
    %1064 = vmatprep.mubr.f32.mxu0 0.0
    %1065 = vmatmul.mubr.f32.gmra.mrb[0].mxu0 %v996
    %v1066 = vpop.f32.mrb[0].mxu0
    %v1067 = vadd.f32 0.0, %v1066
    %v1068 = vpop.f32.mrb[0].mxu0
    %1069 = vdwg.mxu0
    %v1070 = vsel %vm335, %v974, 0
    %v1072 = vsel %vm335, %v981, 0
    %1074 = vmatprep.subr.mxu0 0.0
    %1075 = vmatpush1.xpose.msra.mxu0 %v1072
    %1076 = vmatprep.subr.mxu0 0.0
    %1077 = vmatpush1.xpose.msra.mxu0 0.0
    %1078 = vmatprep.subr.mxu0 0.0
    %1079 = vmatpush1.xpose.msra.mxu0 0.0
    %1080 = vmatprep.subr.mxu0 0.0
    %1081 = vmatpush1.xpose.msra.mxu0 0.0
    %1082 = vmatprep.subr.mxu0 0.0
    %1083 = vmatpush1.xpose.msra.mxu0 0.0
    %1084 = vmatprep.subr.mxu0 0.0
    %1085 = vmatpush1.xpose.msra.mxu0 0.0
    %1086 = vmatprep.subr.mxu0 0.0
    %1087 = vmatpush1.xpose.msra.mxu0 0.0
    %1088 = vmatprep.subr.mxu0 0.0
    %1089 = vmatpush1.xpose.msra.mxu0 0.0
    %1090 = vmatprep.subr.mxu0 0.0
    %1091 = vmatpush1.xpose.msra.mxu0 0.0
    %1092 = vmatprep.subr.mxu0 0.0
    %1093 = vmatpush1.xpose.msra.mxu0 0.0
    %1094 = vmatprep.subr.mxu0 0.0
    %1095 = vmatpush1.xpose.msra.mxu0 0.0
    %1096 = vmatprep.subr.mxu0 0.0
    %1097 = vmatpush1.xpose.msra.mxu0 0.0
    %1098 = vmatprep.subr.mxu0 0.0
    %1099 = vmatpush1.xpose.msra.mxu0 0.0
    %1100 = vmatprep.subr.mxu0 0.0
    %1101 = vmatpush1.xpose.msra.mxu0 0.0
    %1102 = vmatprep.subr.mxu0 0.0
    %1103 = vmatpush1.xpose.msra.mxu0 0.0
    %1104 = vmatprep.subr.mxu0 0.0
    %1105 = vmatpush1.xpose.msra.mxu0 0.0
    %1106 = vmatprep.subr.mxu0 0.0
    %1107 = vmatpush1.xpose.msra.mxu0 0.0
    %1108 = vmatprep.subr.mxu0 0.0
    %1109 = vmatpush1.xpose.msra.mxu0 0.0
    %1110 = vmatprep.subr.mxu0 0.0
    %1111 = vmatpush1.xpose.msra.mxu0 0.0
    %1112 = vmatprep.subr.mxu0 0.0
    %1113 = vmatpush1.xpose.msra.mxu0 0.0
    %1114 = vmatprep.subr.mxu0 0.0
    %1115 = vmatpush1.xpose.msra.mxu0 0.0
    %1116 = vmatprep.subr.mxu0 0.0
    %1117 = vmatpush1.xpose.msra.mxu0 0.0
    %1118 = vmatprep.subr.mxu0 0.0
    %1119 = vmatpush1.xpose.msra.mxu0 0.0
    %1120 = vmatprep.subr.mxu0 0.0
    %1121 = vmatpush1.xpose.msra.mxu0 0.0
    %1122 = vmatprep.subr.mxu0 0.0
    %1123 = vmatpush1.xpose.msra.mxu0 0.0
    %1124 = vmatprep.subr.mxu0 0.0
    %1125 = vmatpush1.xpose.msra.mxu0 0.0
    %1126 = vmatprep.subr.mxu0 0.0
    %1127 = vmatpush1.xpose.msra.mxu0 0.0
    %1128 = vmatprep.subr.mxu0 0.0
    %1129 = vmatpush1.xpose.msra.mxu0 0.0
    %1130 = vmatprep.subr.mxu0 0.0
    %1131 = vmatpush1.xpose.msra.mxu0 0.0
    %1132 = vmatprep.subr.mxu0 0.0
    %1133 = vmatpush1.xpose.msra.mxu0 0.0
    %1134 = vmatprep.subr.mxu0 0.0
    %1135 = vmatpush1.xpose.msra.mxu0 0.0
    %1136 = vmatprep.subr.mxu0 0.0
    %1137 = vmatpush1.xpose.msra.mxu0 0.0
    %1138 = vmatprep.mubr.f32.mxu0 0.0
    %1139 = vmatmul.mubr.f32.gmra.mrb[0].mxu0 %v1070
    %v1140 = vpop.f32.mrb[0].mxu0
    %v1141 = vadd.f32 0.0, %v1140
    %v1142 = vpop.f32.mrb[0].mxu0
    %1143 = vdwg.mxu0
    %v1144 = vsel %vm335, %v976, 0
    %v1146 = vsel %vm335, %v983, 0
    %1148 = vmatprep.subr.mxu0 0.0
    %1149 = vmatpush1.xpose.msra.mxu0 %v1146
    %1150 = vmatprep.subr.mxu0 0.0
    %1151 = vmatpush1.xpose.msra.mxu0 0.0
    %1152 = vmatprep.subr.mxu0 0.0
    %1153 = vmatpush1.xpose.msra.mxu0 0.0
    %1154 = vmatprep.subr.mxu0 0.0
    %1155 = vmatpush1.xpose.msra.mxu0 0.0
    %1156 = vmatprep.subr.mxu0 0.0
    %1157 = vmatpush1.xpose.msra.mxu0 0.0
    %1158 = vmatprep.subr.mxu0 0.0
    %1159 = vmatpush1.xpose.msra.mxu0 0.0
    %1160 = vmatprep.subr.mxu0 0.0
    %1161 = vmatpush1.xpose.msra.mxu0 0.0
    %1162 = vmatprep.subr.mxu0 0.0
    %1163 = vmatpush1.xpose.msra.mxu0 0.0
    %1164 = vmatprep.subr.mxu0 0.0
    %1165 = vmatpush1.xpose.msra.mxu0 0.0
    %1166 = vmatprep.subr.mxu0 0.0
    %1167 = vmatpush1.xpose.msra.mxu0 0.0
    %1168 = vmatprep.subr.mxu0 0.0
    %1169 = vmatpush1.xpose.msra.mxu0 0.0
    %1170 = vmatprep.subr.mxu0 0.0
    %1171 = vmatpush1.xpose.msra.mxu0 0.0
    %1172 = vmatprep.subr.mxu0 0.0
    %1173 = vmatpush1.xpose.msra.mxu0 0.0
    %1174 = vmatprep.subr.mxu0 0.0
    %1175 = vmatpush1.xpose.msra.mxu0 0.0
    %1176 = vmatprep.subr.mxu0 0.0
    %1177 = vmatpush1.xpose.msra.mxu0 0.0
    %1178 = vmatprep.subr.mxu0 0.0
    %1179 = vmatpush1.xpose.msra.mxu0 0.0
    %1180 = vmatprep.subr.mxu0 0.0
    %1181 = vmatpush1.xpose.msra.mxu0 0.0
    %1182 = vmatprep.subr.mxu0 0.0
    %1183 = vmatpush1.xpose.msra.mxu0 0.0
    %1184 = vmatprep.subr.mxu0 0.0
    %1185 = vmatpush1.xpose.msra.mxu0 0.0
    %1186 = vmatprep.subr.mxu0 0.0
    %1187 = vmatpush1.xpose.msra.mxu0 0.0
    %1188 = vmatprep.subr.mxu0 0.0
    %1189 = vmatpush1.xpose.msra.mxu0 0.0
    %1190 = vmatprep.subr.mxu0 0.0
    %1191 = vmatpush1.xpose.msra.mxu0 0.0
    %1192 = vmatprep.subr.mxu0 0.0
    %1193 = vmatpush1.xpose.msra.mxu0 0.0
    %1194 = vmatprep.subr.mxu0 0.0
    %1195 = vmatpush1.xpose.msra.mxu0 0.0
    %1196 = vmatprep.subr.mxu0 0.0
    %1197 = vmatpush1.xpose.msra.mxu0 0.0
    %1198 = vmatprep.subr.mxu0 0.0
    %1199 = vmatpush1.xpose.msra.mxu0 0.0
    %1200 = vmatprep.subr.mxu0 0.0
    %1201 = vmatpush1.xpose.msra.mxu0 0.0
    %1202 = vmatprep.subr.mxu0 0.0
    %1203 = vmatpush1.xpose.msra.mxu0 0.0
    %1204 = vmatprep.subr.mxu0 0.0
    %1205 = vmatpush1.xpose.msra.mxu0 0.0
    %1206 = vmatprep.subr.mxu0 0.0
    %1207 = vmatpush1.xpose.msra.mxu0 0.0
    %1208 = vmatprep.subr.mxu0 0.0
    %1209 = vmatpush1.xpose.msra.mxu0 0.0
    %1210 = vmatprep.subr.mxu0 0.0
    %1211 = vmatpush1.xpose.msra.mxu0 0.0
    %1212 = vmatprep.mubr.f32.mxu0 0.0
    %1213 = vmatmul.mubr.f32.gmra.mrb[0].mxu0 %v1144
    %v1214 = vpop.f32.mrb[0].mxu0
    %v1215 = vadd.f32 0.0, %v1214
    %v1216 = vpop.f32.mrb[0].mxu0
    %1217 = vdwg.mxu0
    %v1218 = vsel %vm335, %v978, 0
    %v1220 = vsel %vm335, %v985, 0
    %1222 = vmatprep.subr.mxu0 0.0
    %1223 = vmatpush1.xpose.msra.mxu0 %v1220
    %1224 = vmatprep.subr.mxu0 0.0
    %1225 = vmatpush1.xpose.msra.mxu0 0.0
    %1226 = vmatprep.subr.mxu0 0.0
    %1227 = vmatpush1.xpose.msra.mxu0 0.0
    %1228 = vmatprep.subr.mxu0 0.0
    %1229 = vmatpush1.xpose.msra.mxu0 0.0
    %1230 = vmatprep.subr.mxu0 0.0
    %1231 = vmatpush1.xpose.msra.mxu0 0.0
    %1232 = vmatprep.subr.mxu0 0.0
    %1233 = vmatpush1.xpose.msra.mxu0 0.0
    %1234 = vmatprep.subr.mxu0 0.0
    %1235 = vmatpush1.xpose.msra.mxu0 0.0
    %1236 = vmatprep.subr.mxu0 0.0
    %1237 = vmatpush1.xpose.msra.mxu0 0.0
    %1238 = vmatprep.subr.mxu0 0.0
    %1239 = vmatpush1.xpose.msra.mxu0 0.0
    %1240 = vmatprep.subr.mxu0 0.0
    %1241 = vmatpush1.xpose.msra.mxu0 0.0
    %1242 = vmatprep.subr.mxu0 0.0
    %1243 = vmatpush1.xpose.msra.mxu0 0.0
    %1244 = vmatprep.subr.mxu0 0.0
    %1245 = vmatpush1.xpose.msra.mxu0 0.0
    %1246 = vmatprep.subr.mxu0 0.0
    %1247 = vmatpush1.xpose.msra.mxu0 0.0
    %1248 = vmatprep.subr.mxu0 0.0
    %1249 = vmatpush1.xpose.msra.mxu0 0.0
    %1250 = vmatprep.subr.mxu0 0.0
    %1251 = vmatpush1.xpose.msra.mxu0 0.0
    %1252 = vmatprep.subr.mxu0 0.0
    %1253 = vmatpush1.xpose.msra.mxu0 0.0
    %1254 = vmatprep.subr.mxu0 0.0
    %1255 = vmatpush1.xpose.msra.mxu0 0.0
    %1256 = vmatprep.subr.mxu0 0.0
    %1257 = vmatpush1.xpose.msra.mxu0 0.0
    %1258 = vmatprep.subr.mxu0 0.0
    %1259 = vmatpush1.xpose.msra.mxu0 0.0
    %1260 = vmatprep.subr.mxu0 0.0
    %1261 = vmatpush1.xpose.msra.mxu0 0.0
    %1262 = vmatprep.subr.mxu0 0.0
    %1263 = vmatpush1.xpose.msra.mxu0 0.0
    %1264 = vmatprep.subr.mxu0 0.0
    %1265 = vmatpush1.xpose.msra.mxu0 0.0
    %1266 = vmatprep.subr.mxu0 0.0
    %1267 = vmatpush1.xpose.msra.mxu0 0.0
    %1268 = vmatprep.subr.mxu0 0.0
    %1269 = vmatpush1.xpose.msra.mxu0 0.0
    %1270 = vmatprep.subr.mxu0 0.0
    %1271 = vmatpush1.xpose.msra.mxu0 0.0
    %1272 = vmatprep.subr.mxu0 0.0
    %1273 = vmatpush1.xpose.msra.mxu0 0.0
    %1274 = vmatprep.subr.mxu0 0.0
    %1275 = vmatpush1.xpose.msra.mxu0 0.0
    %1276 = vmatprep.subr.mxu0 0.0
    %1277 = vmatpush1.xpose.msra.mxu0 0.0
    %1278 = vmatprep.subr.mxu0 0.0
    %1279 = vmatpush1.xpose.msra.mxu0 0.0
    %1280 = vmatprep.subr.mxu0 0.0
    %1281 = vmatpush1.xpose.msra.mxu0 0.0
    %1282 = vmatprep.subr.mxu0 0.0
    %1283 = vmatpush1.xpose.msra.mxu0 0.0
    %1284 = vmatprep.subr.mxu0 0.0
    %1285 = vmatpush1.xpose.msra.mxu0 0.0
    %1286 = vmatprep.mubr.f32.mxu0 0.0
    %1287 = vmatmul.mubr.f32.gmra.mrb[0].mxu0 %v1218
    %v1288 = vpop.f32.mrb[0].mxu0
    %v1289 = vadd.f32 0.0, %v1288
    %v1290 = vpop.f32.mrb[0].mxu0
    %1291 = vdwg.mxu0
    %v1292 = vsel %vm335, %v1067, -inf
    %v1293 = vsel %vm335, %v1141, -inf
    %v1294 = vsel %vm335, %v1215, -inf
    %v1295 = vsel %vm335, %v1289, -inf
    %v1296 = vmax.f32 %v1292, %v1293
    %v1297 = vmax.f32 %v1294, %v1295
    %v1298 = vmax.f32 %v1296, %v1297
    %v1299 = vsub.f32 %v1067, %v1298
    %v1300 = vsub.f32 %v1141, %v1298
    %v1301 = vsub.f32 %v1215, %v1298
    %v1302 = vsub.f32 %v1289, %v1298
    %v1303 = vmul.f32 %v1299, 1.442695
    %v1304 = vpow.pop %v1303
    %v1305 = vmul.f32 %v1300, 1.442695
    %v1306 = vpow.pop %v1305
    %v1307 = vmul.f32 %v1301, 1.442695
    %v1308 = vpow.pop %v1307
    %v1309 = vmul.f32 %v1302, 1.442695
    %v1310 = vpow.pop %v1309
    %v1311 = vsel %vm335, %v1304, 0.0
    %v1312 = vsel %vm335, %v1306, 0.0
    %v1313 = vadd.f32 %v1311, %v1312
    %v1314 = vsel %vm335, %v1308, 0.0
    %v1315 = vadd.f32 %v1313, %v1314
    %v1316 = vsel %vm335, %v1310, 0.0
    %v1317 = vadd.f32 %v1315, %v1316
    %v1318 = vrcp.pop %v1317
    %v1319 = vmul.f32 %v1304, %v1318
    %v1320 = vmul.f32 %v1306, %v1318
    %v1321 = vmul.f32 %v1308, %v1318
    %v1322 = vmul.f32 %v1310, %v1318
    %v1324 = vsel %vm335, %v1319, 0
    %1326 = vmatprep.subr.mxu0 0.0
    %1327 = vmatpush1.msra.mxu0 %v308
    %1328 = vmatprep.subr.mxu0 0.0
    %1329 = vmatpush1.msra.mxu0 0.0
    %1330 = vmatprep.subr.mxu0 0.0
    %1331 = vmatpush1.msra.mxu0 0.0
    %1332 = vmatprep.subr.mxu0 0.0
    %1333 = vmatpush1.msra.mxu0 0.0
    %1334 = vmatprep.subr.mxu0 0.0
    %1335 = vmatpush1.msra.mxu0 0.0
    %1336 = vmatprep.subr.mxu0 0.0
    %1337 = vmatpush1.msra.mxu0 0.0
    %1338 = vmatprep.subr.mxu0 0.0
    %1339 = vmatpush1.msra.mxu0 0.0
    %1340 = vmatprep.subr.mxu0 0.0
    %1341 = vmatpush1.msra.mxu0 0.0
    %1342 = vmatprep.subr.mxu0 0.0
    %1343 = vmatpush1.msra.mxu0 0.0
    %1344 = vmatprep.subr.mxu0 0.0
    %1345 = vmatpush1.msra.mxu0 0.0
    %1346 = vmatprep.subr.mxu0 0.0
    %1347 = vmatpush1.msra.mxu0 0.0
    %1348 = vmatprep.subr.mxu0 0.0
    %1349 = vmatpush1.msra.mxu0 0.0
    %1350 = vmatprep.subr.mxu0 0.0
    %1351 = vmatpush1.msra.mxu0 0.0
    %1352 = vmatprep.subr.mxu0 0.0
    %1353 = vmatpush1.msra.mxu0 0.0
    %1354 = vmatprep.subr.mxu0 0.0
    %1355 = vmatpush1.msra.mxu0 0.0
    %1356 = vmatprep.subr.mxu0 0.0
    %1357 = vmatpush1.msra.mxu0 0.0
    %1358 = vmatprep.subr.mxu0 0.0
    %1359 = vmatpush1.msra.mxu0 0.0
    %1360 = vmatprep.subr.mxu0 0.0
    %1361 = vmatpush1.msra.mxu0 0.0
    %1362 = vmatprep.subr.mxu0 0.0
    %1363 = vmatpush1.msra.mxu0 0.0
    %1364 = vmatprep.subr.mxu0 0.0
    %1365 = vmatpush1.msra.mxu0 0.0
    %1366 = vmatprep.subr.mxu0 0.0
    %1367 = vmatpush1.msra.mxu0 0.0
    %1368 = vmatprep.subr.mxu0 0.0
    %1369 = vmatpush1.msra.mxu0 0.0
    %1370 = vmatprep.subr.mxu0 0.0
    %1371 = vmatpush1.msra.mxu0 0.0
    %1372 = vmatprep.subr.mxu0 0.0
    %1373 = vmatpush1.msra.mxu0 0.0
    %1374 = vmatprep.subr.mxu0 0.0
    %1375 = vmatpush1.msra.mxu0 0.0
    %1376 = vmatprep.subr.mxu0 0.0
    %1377 = vmatpush1.msra.mxu0 0.0
    %1378 = vmatprep.subr.mxu0 0.0
    %1379 = vmatpush1.msra.mxu0 0.0
    %1380 = vmatprep.subr.mxu0 0.0
    %1381 = vmatpush1.msra.mxu0 0.0
    %1382 = vmatprep.subr.mxu0 0.0
    %1383 = vmatpush1.msra.mxu0 0.0
    %1384 = vmatprep.subr.mxu0 0.0
    %1385 = vmatpush1.msra.mxu0 0.0
    %1386 = vmatprep.subr.mxu0 0.0
    %1387 = vmatpush1.msra.mxu0 0.0
    %1388 = vmatprep.subr.mxu0 0.0
    %1389 = vmatpush1.msra.mxu0 0.0
    %1390 = vmatprep.mubr.f32.mxu0 0.0
    %1391 = vmatmul.mubr.f32.gmra.mrb[0].mxu0 %v1324
    %v1392 = vpop.f32.mrb[0].mxu0
    %v1393 = vadd.f32 0.0, %v1392
    %v1394 = vpop.f32.mrb[0].mxu0
    %1395 = vdwg.mxu0
    %v1397 = vsel %vm335, %v1320, 0
    %1399 = vmatprep.subr.mxu0 0.0
    %1400 = vmatpush1.msra.mxu0 %v988
    %1401 = vmatprep.subr.mxu0 0.0
    %1402 = vmatpush1.msra.mxu0 0.0
    %1403 = vmatprep.subr.mxu0 0.0
    %1404 = vmatpush1.msra.mxu0 0.0
    %1405 = vmatprep.subr.mxu0 0.0
    %1406 = vmatpush1.msra.mxu0 0.0
    %1407 = vmatprep.subr.mxu0 0.0
    %1408 = vmatpush1.msra.mxu0 0.0
    %1409 = vmatprep.subr.mxu0 0.0
    %1410 = vmatpush1.msra.mxu0 0.0
    %1411 = vmatprep.subr.mxu0 0.0
    %1412 = vmatpush1.msra.mxu0 0.0
    %1413 = vmatprep.subr.mxu0 0.0
    %1414 = vmatpush1.msra.mxu0 0.0
    %1415 = vmatprep.subr.mxu0 0.0
    %1416 = vmatpush1.msra.mxu0 0.0
    %1417 = vmatprep.subr.mxu0 0.0
    %1418 = vmatpush1.msra.mxu0 0.0
    %1419 = vmatprep.subr.mxu0 0.0
    %1420 = vmatpush1.msra.mxu0 0.0
    %1421 = vmatprep.subr.mxu0 0.0
    %1422 = vmatpush1.msra.mxu0 0.0
    %1423 = vmatprep.subr.mxu0 0.0
    %1424 = vmatpush1.msra.mxu0 0.0
    %1425 = vmatprep.subr.mxu0 0.0
    %1426 = vmatpush1.msra.mxu0 0.0
    %1427 = vmatprep.subr.mxu0 0.0
    %1428 = vmatpush1.msra.mxu0 0.0
    %1429 = vmatprep.subr.mxu0 0.0
    %1430 = vmatpush1.msra.mxu0 0.0
    %1431 = vmatprep.subr.mxu0 0.0
    %1432 = vmatpush1.msra.mxu0 0.0
    %1433 = vmatprep.subr.mxu0 0.0
    %1434 = vmatpush1.msra.mxu0 0.0
    %1435 = vmatprep.subr.mxu0 0.0
    %1436 = vmatpush1.msra.mxu0 0.0
    %1437 = vmatprep.subr.mxu0 0.0
    %1438 = vmatpush1.msra.mxu0 0.0
    %1439 = vmatprep.subr.mxu0 0.0
    %1440 = vmatpush1.msra.mxu0 0.0
    %1441 = vmatprep.subr.mxu0 0.0
    %1442 = vmatpush1.msra.mxu0 0.0
    %1443 = vmatprep.subr.mxu0 0.0
    %1444 = vmatpush1.msra.mxu0 0.0
    %1445 = vmatprep.subr.mxu0 0.0
    %1446 = vmatpush1.msra.mxu0 0.0
    %1447 = vmatprep.subr.mxu0 0.0
    %1448 = vmatpush1.msra.mxu0 0.0
    %1449 = vmatprep.subr.mxu0 0.0
    %1450 = vmatpush1.msra.mxu0 0.0
    %1451 = vmatprep.subr.mxu0 0.0
    %1452 = vmatpush1.msra.mxu0 0.0
    %1453 = vmatprep.subr.mxu0 0.0
    %1454 = vmatpush1.msra.mxu0 0.0
    %1455 = vmatprep.subr.mxu0 0.0
    %1456 = vmatpush1.msra.mxu0 0.0
    %1457 = vmatprep.subr.mxu0 0.0
    %1458 = vmatpush1.msra.mxu0 0.0
    %1459 = vmatprep.subr.mxu0 0.0
    %1460 = vmatpush1.msra.mxu0 0.0
    %1461 = vmatprep.subr.mxu0 0.0
    %1462 = vmatpush1.msra.mxu0 0.0
    %1463 = vmatprep.mubr.f32.mxu0 0.0
    %1464 = vmatmul.mubr.f32.gmra.mrb[0].mxu0 %v1397
    %v1465 = vpop.f32.mrb[0].mxu0
    %v1466 = vadd.f32 0.0, %v1465
    %v1467 = vpop.f32.mrb[0].mxu0
    %1468 = vdwg.mxu0
    %v1470 = vsel %vm335, %v1321, 0
    %1472 = vmatprep.subr.mxu0 0.0
    %1473 = vmatpush1.msra.mxu0 %v991
    %1474 = vmatprep.subr.mxu0 0.0
    %1475 = vmatpush1.msra.mxu0 0.0
    %1476 = vmatprep.subr.mxu0 0.0
    %1477 = vmatpush1.msra.mxu0 0.0
    %1478 = vmatprep.subr.mxu0 0.0
    %1479 = vmatpush1.msra.mxu0 0.0
    %1480 = vmatprep.subr.mxu0 0.0
    %1481 = vmatpush1.msra.mxu0 0.0
    %1482 = vmatprep.subr.mxu0 0.0
    %1483 = vmatpush1.msra.mxu0 0.0
    %1484 = vmatprep.subr.mxu0 0.0
    %1485 = vmatpush1.msra.mxu0 0.0
    %1486 = vmatprep.subr.mxu0 0.0
    %1487 = vmatpush1.msra.mxu0 0.0
    %1488 = vmatprep.subr.mxu0 0.0
    %1489 = vmatpush1.msra.mxu0 0.0
    %1490 = vmatprep.subr.mxu0 0.0
    %1491 = vmatpush1.msra.mxu0 0.0
    %1492 = vmatprep.subr.mxu0 0.0
    %1493 = vmatpush1.msra.mxu0 0.0
    %1494 = vmatprep.subr.mxu0 0.0
    %1495 = vmatpush1.msra.mxu0 0.0
    %1496 = vmatprep.subr.mxu0 0.0
    %1497 = vmatpush1.msra.mxu0 0.0
    %1498 = vmatprep.subr.mxu0 0.0
    %1499 = vmatpush1.msra.mxu0 0.0
    %1500 = vmatprep.subr.mxu0 0.0
    %1501 = vmatpush1.msra.mxu0 0.0
    %1502 = vmatprep.subr.mxu0 0.0
    %1503 = vmatpush1.msra.mxu0 0.0
    %1504 = vmatprep.subr.mxu0 0.0
    %1505 = vmatpush1.msra.mxu0 0.0
    %1506 = vmatprep.subr.mxu0 0.0
    %1507 = vmatpush1.msra.mxu0 0.0
    %1508 = vmatprep.subr.mxu0 0.0
    %1509 = vmatpush1.msra.mxu0 0.0
    %1510 = vmatprep.subr.mxu0 0.0
    %1511 = vmatpush1.msra.mxu0 0.0
    %1512 = vmatprep.subr.mxu0 0.0
    %1513 = vmatpush1.msra.mxu0 0.0
    %1514 = vmatprep.subr.mxu0 0.0
    %1515 = vmatpush1.msra.mxu0 0.0
    %1516 = vmatprep.subr.mxu0 0.0
    %1517 = vmatpush1.msra.mxu0 0.0
    %1518 = vmatprep.subr.mxu0 0.0
    %1519 = vmatpush1.msra.mxu0 0.0
    %1520 = vmatprep.subr.mxu0 0.0
    %1521 = vmatpush1.msra.mxu0 0.0
    %1522 = vmatprep.subr.mxu0 0.0
    %1523 = vmatpush1.msra.mxu0 0.0
    %1524 = vmatprep.subr.mxu0 0.0
    %1525 = vmatpush1.msra.mxu0 0.0
    %1526 = vmatprep.subr.mxu0 0.0
    %1527 = vmatpush1.msra.mxu0 0.0
    %1528 = vmatprep.subr.mxu0 0.0
    %1529 = vmatpush1.msra.mxu0 0.0
    %1530 = vmatprep.subr.mxu0 0.0
    %1531 = vmatpush1.msra.mxu0 0.0
    %1532 = vmatprep.subr.mxu0 0.0
    %1533 = vmatpush1.msra.mxu0 0.0
    %1534 = vmatprep.subr.mxu0 0.0
    %1535 = vmatpush1.msra.mxu0 0.0
    %1536 = vmatprep.mubr.f32.mxu0 0.0
    %1537 = vmatmul.mubr.f32.gmra.mrb[0].mxu0 %v1470
    %v1538 = vpop.f32.mrb[0].mxu0
    %v1539 = vadd.f32 0.0, %v1538
    %v1540 = vpop.f32.mrb[0].mxu0
    %1541 = vdwg.mxu0
    %v1543 = vsel %vm335, %v1322, 0
    %1545 = vmatprep.subr.mxu0 0.0
    %1546 = vmatpush1.msra.mxu0 %v994
    %1547 = vmatprep.subr.mxu0 0.0
    %1548 = vmatpush1.msra.mxu0 0.0
    %1549 = vmatprep.subr.mxu0 0.0
    %1550 = vmatpush1.msra.mxu0 0.0
    %1551 = vmatprep.subr.mxu0 0.0
    %1552 = vmatpush1.msra.mxu0 0.0
    %1553 = vmatprep.subr.mxu0 0.0
    %1554 = vmatpush1.msra.mxu0 0.0
    %1555 = vmatprep.subr.mxu0 0.0
    %1556 = vmatpush1.msra.mxu0 0.0
    %1557 = vmatprep.subr.mxu0 0.0
    %1558 = vmatpush1.msra.mxu0 0.0
    %1559 = vmatprep.subr.mxu0 0.0
    %1560 = vmatpush1.msra.mxu0 0.0
    %1561 = vmatprep.subr.mxu0 0.0
    %1562 = vmatpush1.msra.mxu0 0.0
    %1563 = vmatprep.subr.mxu0 0.0
    %1564 = vmatpush1.msra.mxu0 0.0
    %1565 = vmatprep.subr.mxu0 0.0
    %1566 = vmatpush1.msra.mxu0 0.0
    %1567 = vmatprep.subr.mxu0 0.0
    %1568 = vmatpush1.msra.mxu0 0.0
    %1569 = vmatprep.subr.mxu0 0.0
    %1570 = vmatpush1.msra.mxu0 0.0
    %1571 = vmatprep.subr.mxu0 0.0
    %1572 = vmatpush1.msra.mxu0 0.0
    %1573 = vmatprep.subr.mxu0 0.0
    %1574 = vmatpush1.msra.mxu0 0.0
    %1575 = vmatprep.subr.mxu0 0.0
    %1576 = vmatpush1.msra.mxu0 0.0
    %1577 = vmatprep.subr.mxu0 0.0
    %1578 = vmatpush1.msra.mxu0 0.0
    %1579 = vmatprep.subr.mxu0 0.0
    %1580 = vmatpush1.msra.mxu0 0.0
    %1581 = vmatprep.subr.mxu0 0.0
    %1582 = vmatpush1.msra.mxu0 0.0
    %1583 = vmatprep.subr.mxu0 0.0
    %1584 = vmatpush1.msra.mxu0 0.0
    %1585 = vmatprep.subr.mxu0 0.0
    %1586 = vmatpush1.msra.mxu0 0.0
    %1587 = vmatprep.subr.mxu0 0.0
    %1588 = vmatpush1.msra.mxu0 0.0
    %1589 = vmatprep.subr.mxu0 0.0
    %1590 = vmatpush1.msra.mxu0 0.0
    %1591 = vmatprep.subr.mxu0 0.0
    %1592 = vmatpush1.msra.mxu0 0.0
    %1593 = vmatprep.subr.mxu0 0.0
    %1594 = vmatpush1.msra.mxu0 0.0
    %1595 = vmatprep.subr.mxu0 0.0
    %1596 = vmatpush1.msra.mxu0 0.0
    %1597 = vmatprep.subr.mxu0 0.0
    %1598 = vmatpush1.msra.mxu0 0.0
    %1599 = vmatprep.subr.mxu0 0.0
    %1600 = vmatpush1.msra.mxu0 0.0
    %1601 = vmatprep.subr.mxu0 0.0
    %1602 = vmatpush1.msra.mxu0 0.0
    %1603 = vmatprep.subr.mxu0 0.0
    %1604 = vmatpush1.msra.mxu0 0.0
    %1605 = vmatprep.subr.mxu0 0.0
    %1606 = vmatpush1.msra.mxu0 0.0
    %1607 = vmatprep.subr.mxu0 0.0
    %1608 = vmatpush1.msra.mxu0 0.0
    %1609 = vmatprep.mubr.f32.mxu0 0.0
    %1610 = vmatmul.mubr.f32.gmra.mrb[0].mxu0 %v1543
    %v1611 = vpop.f32.mrb[0].mxu0
    %v1612 = vadd.f32 0.0, %v1611
    %v1613 = vpop.f32.mrb[0].mxu0
    %1614 = vdwg.mxu0
    %1616 = vrot.lane.b32.xlu0 %v1466, 8
    %v1617 = vpop.permute.xlu0 %1616
    %1620 = vrot.lane.b32.xlu0 %v1539, 16
    %v1621 = vpop.permute.xlu0 %1620
    %1624 = vrot.lane.b32.xlu0 %v1612, 24
    %v1625 = vpop.permute.xlu0 %1624
    %v1627 = vsel %vm335, %v1393, %v1617
    %v1628 = vsel %vm968, %v1627, %v1621
    %v1629 = vsel %vm970, %v1628, %v1625
    %v1630 = vlaneseq
    %v1631 = vshrl.u32 %v1630, 7
    %v1632 = vsub.s32 3, %v1631
    %v1633 = vrot.slane %v62, %v1632
    %v1635 = vsel %vm69, %v971, 0
    %v1638 = vsel %vm69, %v1629, 0
    %1640 = vmatprep.subr.mxu0 0.0
    %1641 = vmatpush1.msra.mxu0 %v58
    %1642 = vmatprep.subr.mxu0 0.0
    %1643 = vmatpush1.msra.mxu0 %v59
    %1644 = vmatprep.subr.mxu0 0.0
    %1645 = vmatpush1.msra.mxu0 %v60
    %1646 = vmatprep.subr.mxu0 0.0
    %1647 = vmatpush1.msra.mxu0 %v61
    %1648 = vmatprep.subr.mxu0 0.0
    %1649 = vmatpush1.msra.mxu0 0.0
    %1650 = vmatprep.subr.mxu0 0.0
    %1651 = vmatpush1.msra.mxu0 0.0
    %1652 = vmatprep.subr.mxu0 0.0
    %1653 = vmatpush1.msra.mxu0 0.0
    %1654 = vmatprep.subr.mxu0 0.0
    %1655 = vmatpush1.msra.mxu0 0.0
    %1656 = vmatprep.subr.mxu0 0.0
    %1657 = vmatpush1.msra.mxu0 0.0
    %1658 = vmatprep.subr.mxu0 0.0
    %1659 = vmatpush1.msra.mxu0 0.0
    %1660 = vmatprep.subr.mxu0 0.0
    %1661 = vmatpush1.msra.mxu0 0.0
    %1662 = vmatprep.subr.mxu0 0.0
    %1663 = vmatpush1.msra.mxu0 0.0
    %1664 = vmatprep.subr.mxu0 0.0
    %1665 = vmatpush1.msra.mxu0 0.0
    %1666 = vmatprep.subr.mxu0 0.0
    %1667 = vmatpush1.msra.mxu0 0.0
    %1668 = vmatprep.subr.mxu0 0.0
    %1669 = vmatpush1.msra.mxu0 0.0
    %1670 = vmatprep.subr.mxu0 0.0
    %1671 = vmatpush1.msra.mxu0 0.0
    %1672 = vmatprep.subr.mxu0 0.0
    %1673 = vmatpush1.msra.mxu0 0.0
    %1674 = vmatprep.subr.mxu0 0.0
    %1675 = vmatpush1.msra.mxu0 0.0
    %1676 = vmatprep.subr.mxu0 0.0
    %1677 = vmatpush1.msra.mxu0 0.0
    %1678 = vmatprep.subr.mxu0 0.0
    %1679 = vmatpush1.msra.mxu0 0.0
    %1680 = vmatprep.subr.mxu0 0.0
    %1681 = vmatpush1.msra.mxu0 0.0
    %1682 = vmatprep.subr.mxu0 0.0
    %1683 = vmatpush1.msra.mxu0 0.0
    %1684 = vmatprep.subr.mxu0 0.0
    %1685 = vmatpush1.msra.mxu0 0.0
    %1686 = vmatprep.subr.mxu0 0.0
    %1687 = vmatpush1.msra.mxu0 0.0
    %1688 = vmatprep.subr.mxu0 0.0
    %1689 = vmatpush1.msra.mxu0 0.0
    %1690 = vmatprep.subr.mxu0 0.0
    %1691 = vmatpush1.msra.mxu0 0.0
    %1692 = vmatprep.subr.mxu0 0.0
    %1693 = vmatpush1.msra.mxu0 0.0
    %1694 = vmatprep.subr.mxu0 0.0
    %1695 = vmatpush1.msra.mxu0 0.0
    %1696 = vmatprep.subr.mxu0 0.0
    %1697 = vmatpush1.msra.mxu0 0.0
    %1698 = vmatprep.subr.mxu0 0.0
    %1699 = vmatpush1.msra.mxu0 0.0
    %1700 = vmatprep.subr.mxu0 0.0
    %1701 = vmatpush1.msra.mxu0 0.0
    %1702 = vmatprep.subr.mxu0 0.0
    %1703 = vmatpush1.msra.mxu0 0.0
    %1704 = vmatprep.mubr.f32.mxu0 0.0
    %1705 = vmatmul.mubr.f32.gmra.mrb[0].mxu0 %v1635
    %v1706 = vpop.f32.mrb[0].mxu0
    %v1707 = vadd.f32 %v1633, %v1706
    %v1708 = vpop.f32.mrb[0].mxu0
    %1709 = vmatprep.mubr.f32.mxu0 0.0
    %1710 = vmatmul.mubr.f32.gmra.mrb[0].mxu0 %v1638
    %v1711 = vpop.f32.mrb[0].mxu0
    %v1712 = vadd.f32 %v1633, %v1711
    %v1713 = vpop.f32.mrb[0].mxu0
    %1714 = vdwg.mxu0
    %v1715 = vadd.f32 %v1707, %v41
    %v1716 = vadd.f32 %v1712, %v42
    %v1717 = vsel %vm69, %v1715, 0.0
    %1718 = vadd.xlane.f32.xlu0 %v1717
    %v1719 = vpop.xlane.xlu0 %1718
    %v1720 = vsel %vm69, %v1716, 0.0
    %1721 = vadd.xlane.f32.xlu0 %v1720
    %v1722 = vpop.xlane.xlu0 %1721
    %v1723 = vrcp.pop 32.0
    %v1724 = vmul.f32 %v1719, %v1723
    %v1725 = vmul.f32 %v1722, %v1723
    %v1726 = vsub.f32 %v1715, %v1724
    %v1727 = vsub.f32 %v1716, %v1725
    %v1728 = vmul.f32 %v1726, %v1726
    %v1729 = vmul.f32 %v1727, %v1727
    %v1730 = vsel %vm69, %v1728, 0.0
    %1731 = vadd.xlane.f32.xlu0 %v1730
    %v1732 = vpop.xlane.xlu0 %1731
    %v1733 = vsel %vm69, %v1729, 0.0
    %1734 = vadd.xlane.f32.xlu0 %v1733
    %v1735 = vpop.xlane.xlu0 %1734
    %v1736 = vmul.f32 %v1732, %v1723
    %v1737 = vmul.f32 %v1735, %v1723
    %v1738 = vadd.f32 %v1736, 1e-05
    %v1739 = vadd.f32 %v1737, 1e-05
    %v1740 = vrsqrt.pop %v1738
    %v1741 = vrsqrt.pop %v1739
    %v1742 = vmul.f32 %v1726, %v1740
    %v1743 = vmul.f32 %v1727, %v1741
    %v1744 = vlaneseq
    %v1745 = vshrl.u32 %v1744, 7
    %v1746 = vsub.s32 4, %v1745
    %v1747 = vrot.slane %v62, %v1746
    %v1748 = vmul.f32 %v1742, %v1747
    %v1749 = vmul.f32 %v1743, %v1747
    %v1750 = vlaneseq
    %v1751 = vshrl.u32 %v1750, 7
    %v1752 = vsub.s32 5, %v1751
    %v1753 = vrot.slane %v62, %v1752
    %v1754 = vadd.f32 %v1748, %v1753
    %v1755 = vadd.f32 %v1749, %v1753
    %v1756 = vld [vmem:[%s2] sm:$0xff]
    %v1757 = vld [vmem:[%s2 + $0x8] sm:$0xff]
    %v1758 = vld [vmem:[%s2 + $0x10] sm:$0xff]
    %v1759 = vld [vmem:[%s2 + $0x18] sm:$0xff]
    %v1761 = vlaneseq
    %v1762 = vshrl.u32 %v1761, 7
    %v1763 = vsub.s32 0, %v1762
    %v1764 = vrot.slane %v64, %v1763
    %v1767 = vsel %vm69, %v1754, 0
    %v1770 = vsel %vm69, %v1755, 0
    %1772 = vmatprep.subr.mxu0 0.0
    %1773 = vmatpush1.msra.mxu0 %v1756
    %1774 = vmatprep.subr.mxu0 0.0
    %1775 = vmatpush1.msra.mxu0 %v1757
    %1776 = vmatprep.subr.mxu0 0.0
    %1777 = vmatpush1.msra.mxu0 %v1758
    %1778 = vmatprep.subr.mxu0 0.0
    %1779 = vmatpush1.msra.mxu0 %v1759
    %1780 = vmatprep.subr.mxu0 0.0
    %1781 = vmatpush1.msra.mxu0 0.0
    %1782 = vmatprep.subr.mxu0 0.0
    %1783 = vmatpush1.msra.mxu0 0.0
    %1784 = vmatprep.subr.mxu0 0.0
    %1785 = vmatpush1.msra.mxu0 0.0
    %1786 = vmatprep.subr.mxu0 0.0
    %1787 = vmatpush1.msra.mxu0 0.0
    %1788 = vmatprep.subr.mxu0 0.0
    %1789 = vmatpush1.msra.mxu0 0.0
    %1790 = vmatprep.subr.mxu0 0.0
    %1791 = vmatpush1.msra.mxu0 0.0
    %1792 = vmatprep.subr.mxu0 0.0
    %1793 = vmatpush1.msra.mxu0 0.0
    %1794 = vmatprep.subr.mxu0 0.0
    %1795 = vmatpush1.msra.mxu0 0.0
    %1796 = vmatprep.subr.mxu0 0.0
    %1797 = vmatpush1.msra.mxu0 0.0
    %1798 = vmatprep.subr.mxu0 0.0
    %1799 = vmatpush1.msra.mxu0 0.0
    %1800 = vmatprep.subr.mxu0 0.0
    %1801 = vmatpush1.msra.mxu0 0.0
    %1802 = vmatprep.subr.mxu0 0.0
    %1803 = vmatpush1.msra.mxu0 0.0
    %1804 = vmatprep.subr.mxu0 0.0
    %1805 = vmatpush1.msra.mxu0 0.0
    %1806 = vmatprep.subr.mxu0 0.0
    %1807 = vmatpush1.msra.mxu0 0.0
    %1808 = vmatprep.subr.mxu0 0.0
    %1809 = vmatpush1.msra.mxu0 0.0
    %1810 = vmatprep.subr.mxu0 0.0
    %1811 = vmatpush1.msra.mxu0 0.0
    %1812 = vmatprep.subr.mxu0 0.0
    %1813 = vmatpush1.msra.mxu0 0.0
    %1814 = vmatprep.subr.mxu0 0.0
    %1815 = vmatpush1.msra.mxu0 0.0
    %1816 = vmatprep.subr.mxu0 0.0
    %1817 = vmatpush1.msra.mxu0 0.0
    %1818 = vmatprep.subr.mxu0 0.0
    %1819 = vmatpush1.msra.mxu0 0.0
    %1820 = vmatprep.subr.mxu0 0.0
    %1821 = vmatpush1.msra.mxu0 0.0
    %1822 = vmatprep.subr.mxu0 0.0
    %1823 = vmatpush1.msra.mxu0 0.0
    %1824 = vmatprep.subr.mxu0 0.0
    %1825 = vmatpush1.msra.mxu0 0.0
    %1826 = vmatprep.subr.mxu0 0.0
    %1827 = vmatpush1.msra.mxu0 0.0
    %1828 = vmatprep.subr.mxu0 0.0
    %1829 = vmatpush1.msra.mxu0 0.0
    %1830 = vmatprep.subr.mxu0 0.0
    %1831 = vmatpush1.msra.mxu0 0.0
    %1832 = vmatprep.subr.mxu0 0.0
    %1833 = vmatpush1.msra.mxu0 0.0
    %1834 = vmatprep.subr.mxu0 0.0
    %1835 = vmatpush1.msra.mxu0 0.0
    %1836 = vmatprep.mubr.f32.mxu0 0.0
    %1837 = vmatmul.mubr.f32.gmra.mrb[0].mxu0 %v1767
    %v1838 = vpop.f32.mrb[0].mxu0
    %v1839 = vadd.f32 %v1764, %v1838
    %v1840 = vpop.f32.mrb[0].mxu0
    %1841 = vmatprep.mubr.f32.mxu0 0.0
    %1842 = vmatmul.mubr.f32.gmra.mrb[0].mxu0 %v1770
    %v1843 = vpop.f32.mrb[0].mxu0
    %v1844 = vadd.f32 %v1764, %v1843
    %v1845 = vpop.f32.mrb[0].mxu0
    %1846 = vdwg.mxu0
    %v1847 = vmax.f32 %v1839, 0.0
    %v1848 = vmax.f32 %v1844, 0.0
    %v1849 = vld [vmem:[%s3] sm:$0xff]
    %v1850 = vld [vmem:[%s3 + $0x8] sm:$0xff]
    %v1851 = vld [vmem:[%s3 + $0x10] sm:$0xff]
    %v1852 = vld [vmem:[%s3 + $0x18] sm:$0xff]
    %v1853 = vld [vmem:[%s3 + $0x20] sm:$0xff]
    %v1854 = vld [vmem:[%s3 + $0x28] sm:$0xff]
    %v1855 = vld [vmem:[%s3 + $0x30] sm:$0xff]
    %v1856 = vld [vmem:[%s3 + $0x38] sm:$0xff]
    %v1857 = vlaneseq
    %v1858 = vshrl.u32 %v1857, 7
    %v1859 = vsub.s32 6, %v1858
    %v1860 = vrot.slane %v62, %v1859
    %vm1861 = vcmask 523264
    %v1863 = vsel %vm1861, %v1847, 0
    %v1866 = vsel %vm1861, %v1848, 0
    %1868 = vmatprep.subr.mxu0 0.0
    %1869 = vmatpush1.msra.mxu0 %v1849
    %1870 = vmatprep.subr.mxu0 0.0
    %1871 = vmatpush1.msra.mxu0 %v1850
    %1872 = vmatprep.subr.mxu0 0.0
    %1873 = vmatpush1.msra.mxu0 %v1851
    %1874 = vmatprep.subr.mxu0 0.0
    %1875 = vmatpush1.msra.mxu0 %v1852
    %1876 = vmatprep.subr.mxu0 0.0
    %1877 = vmatpush1.msra.mxu0 %v1853
    %1878 = vmatprep.subr.mxu0 0.0
    %1879 = vmatpush1.msra.mxu0 %v1854
    %1880 = vmatprep.subr.mxu0 0.0
    %1881 = vmatpush1.msra.mxu0 %v1855
    %1882 = vmatprep.subr.mxu0 0.0
    %1883 = vmatpush1.msra.mxu0 %v1856
    %1884 = vmatprep.subr.mxu0 0.0
    %1885 = vmatpush1.msra.mxu0 0.0
    %1886 = vmatprep.subr.mxu0 0.0
    %1887 = vmatpush1.msra.mxu0 0.0
    %1888 = vmatprep.subr.mxu0 0.0
    %1889 = vmatpush1.msra.mxu0 0.0
    %1890 = vmatprep.subr.mxu0 0.0
    %1891 = vmatpush1.msra.mxu0 0.0
    %1892 = vmatprep.subr.mxu0 0.0
    %1893 = vmatpush1.msra.mxu0 0.0
    %1894 = vmatprep.subr.mxu0 0.0
    %1895 = vmatpush1.msra.mxu0 0.0
    %1896 = vmatprep.subr.mxu0 0.0
    %1897 = vmatpush1.msra.mxu0 0.0
    %1898 = vmatprep.subr.mxu0 0.0
    %1899 = vmatpush1.msra.mxu0 0.0
    %1900 = vmatprep.subr.mxu0 0.0
    %1901 = vmatpush1.msra.mxu0 0.0
    %1902 = vmatprep.subr.mxu0 0.0
    %1903 = vmatpush1.msra.mxu0 0.0
    %1904 = vmatprep.subr.mxu0 0.0
    %1905 = vmatpush1.msra.mxu0 0.0
    %1906 = vmatprep.subr.mxu0 0.0
    %1907 = vmatpush1.msra.mxu0 0.0
    %1908 = vmatprep.subr.mxu0 0.0
    %1909 = vmatpush1.msra.mxu0 0.0
    %1910 = vmatprep.subr.mxu0 0.0
    %1911 = vmatpush1.msra.mxu0 0.0
    %1912 = vmatprep.subr.mxu0 0.0
    %1913 = vmatpush1.msra.mxu0 0.0
    %1914 = vmatprep.subr.mxu0 0.0
    %1915 = vmatpush1.msra.mxu0 0.0
    %1916 = vmatprep.subr.mxu0 0.0
    %1917 = vmatpush1.msra.mxu0 0.0
    %1918 = vmatprep.subr.mxu0 0.0
    %1919 = vmatpush1.msra.mxu0 0.0
    %1920 = vmatprep.subr.mxu0 0.0
    %1921 = vmatpush1.msra.mxu0 0.0
    %1922 = vmatprep.subr.mxu0 0.0
    %1923 = vmatpush1.msra.mxu0 0.0
    %1924 = vmatprep.subr.mxu0 0.0
    %1925 = vmatpush1.msra.mxu0 0.0
    %1926 = vmatprep.subr.mxu0 0.0
    %1927 = vmatpush1.msra.mxu0 0.0
    %1928 = vmatprep.subr.mxu0 0.0
    %1929 = vmatpush1.msra.mxu0 0.0
    %1930 = vmatprep.subr.mxu0 0.0
    %1931 = vmatpush1.msra.mxu0 0.0
    %1932 = vmatprep.mubr.f32.mxu0 0.0
    %1933 = vmatmul.mubr.f32.gmra.mrb[0].mxu0 %v1863
    %v1934 = vpop.f32.mrb[0].mxu0
    %v1935 = vadd.f32 %v1860, %v1934
    %v1936 = vpop.f32.mrb[0].mxu0
    %1937 = vmatprep.mubr.f32.mxu0 0.0
    %1938 = vmatmul.mubr.f32.gmra.mrb[0].mxu0 %v1866
    %v1939 = vpop.f32.mrb[0].mxu0
    %v1940 = vadd.f32 %v1860, %v1939
    %v1941 = vpop.f32.mrb[0].mxu0
    %1942 = vdwg.mxu0
    %v1943 = vadd.f32 %v1935, %v1754
    %v1944 = vadd.f32 %v1940, %v1755
    %v1945 = vsel %vm69, %v1943, 0.0
    %1946 = vadd.xlane.f32.xlu0 %v1945
    %v1947 = vpop.xlane.xlu0 %1946
    %v1948 = vsel %vm69, %v1944, 0.0
    %1949 = vadd.xlane.f32.xlu0 %v1948
    %v1950 = vpop.xlane.xlu0 %1949
    %v1951 = vmul.f32 %v1947, %v1723
    %v1952 = vmul.f32 %v1950, %v1723
    %v1953 = vsub.f32 %v1943, %v1951
    %v1954 = vsub.f32 %v1944, %v1952
    %v1955 = vmul.f32 %v1953, %v1953
    %v1956 = vmul.f32 %v1954, %v1954
    %v1957 = vsel %vm69, %v1955, 0.0
    %1958 = vadd.xlane.f32.xlu0 %v1957
    %v1959 = vpop.xlane.xlu0 %1958
    %v1960 = vsel %vm69, %v1956, 0.0
    %1961 = vadd.xlane.f32.xlu0 %v1960
    %v1962 = vpop.xlane.xlu0 %1961
    %v1963 = vmul.f32 %v1959, %v1723
    %v1964 = vmul.f32 %v1962, %v1723
    %v1965 = vadd.f32 %v1963, 1e-05
    %v1966 = vadd.f32 %v1964, 1e-05
    %v1967 = vrsqrt.pop %v1965
    %v1968 = vrsqrt.pop %v1966
    %v1969 = vmul.f32 %v1953, %v1967
    %v1970 = vmul.f32 %v1954, %v1968
    %v1971 = vlaneseq
    %v1972 = vshrl.u32 %v1971, 7
    %v1973 = vsub.s32 7, %v1972
    %v1974 = vrot.slane %v62, %v1973
    %v1975 = vmul.f32 %v1969, %v1974
    %v1976 = vmul.f32 %v1970, %v1974
    %v1977 = vlaneseq
    %v1978 = vshrl.u32 %v1977, 7
    %v1979 = vsub.s32 0, %v1978
    %v1980 = vrot.slane %v63, %v1979
    %v1981 = vadd.f32 %v1975, %v1980
    %v1982 = vadd.f32 %v1976, %v1980
    %v1983 = vadd.f32 %v1981, %v41
    %v1984 = vadd.f32 %v1982, %v42
    %s1985 = scalar_lea.vmem [#allocation2], 128
    %v1986 = vld [vmem:[%s1985] sm:$0xff]
    %v1987 = vld [vmem:[%s1985 + $0x8] sm:$0xff]
    %v1988 = vld [vmem:[%s1985 + $0x10] sm:$0xff]
    %v1989 = vld [vmem:[%s1985 + $0x18] sm:$0xff]
    %s1990 = scalar_lea.vmem [#allocation2], 160
    %v1991 = vld [vmem:[%s1990] sm:$0xff]
    %v1992 = vld [vmem:[%s1990 + $0x8] sm:$0xff]
    %v1993 = vld [vmem:[%s1990 + $0x10] sm:$0xff]
    %v1994 = vld [vmem:[%s1990 + $0x18] sm:$0xff]
    %s1995 = scalar_lea.vmem [#allocation2], 192
    %v1996 = vld [vmem:[%s1995] sm:$0xff]
    %v1997 = vld [vmem:[%s1995 + $0x8] sm:$0xff]
    %v1998 = vld [vmem:[%s1995 + $0x10] sm:$0xff]
    %v1999 = vld [vmem:[%s1995 + $0x18] sm:$0xff]
    %s2000 = scalar_lea.vmem [#allocation2], 224
    %v2001 = vld [vmem:[%s2000] sm:$0xff]
    %v2002 = vld [vmem:[%s2000 + $0x8] sm:$0xff]
    %v2003 = vld [vmem:[%s2000 + $0x10] sm:$0xff]
    %v2004 = vld [vmem:[%s2000 + $0x18] sm:$0xff]
    %s2005 = scalar_lea.vmem %s4, 16
    %v2006 = vld [vmem:[%s2005] sm:$0xff]
    %v2007 = vld [vmem:[%s2005 + $0x8] sm:$0x1]
    %s2008 = scalar_lea.vmem %s5, 1
    %v2009 = vld [vmem:[%s2008] sm:$0x1]
    %v2010 = vlaneseq
    %v2011 = vshrl.u32 %v2010, 7
    %v2012 = vsub.s32 0, %v2011
    %v2013 = vrot.slane %v2006, %v2012
    %v2015 = vsel %vm69, %v1983, 0
    %v2018 = vsel %vm69, %v1984, 0
    %2020 = vmatprep.subr.mxu0 0.0
    %2021 = vmatpush1.msra.mxu0 %v1986
    %2022 = vmatprep.subr.mxu0 0.0
    %2023 = vmatpush1.msra.mxu0 %v1987
    %2024 = vmatprep.subr.mxu0 0.0
    %2025 = vmatpush1.msra.mxu0 %v1988
    %2026 = vmatprep.subr.mxu0 0.0
    %2027 = vmatpush1.msra.mxu0 %v1989
    %2028 = vmatprep.subr.mxu0 0.0
    %2029 = vmatpush1.msra.mxu0 0.0
    %2030 = vmatprep.subr.mxu0 0.0
    %2031 = vmatpush1.msra.mxu0 0.0
    %2032 = vmatprep.subr.mxu0 0.0
    %2033 = vmatpush1.msra.mxu0 0.0
    %2034 = vmatprep.subr.mxu0 0.0
    %2035 = vmatpush1.msra.mxu0 0.0
    %2036 = vmatprep.subr.mxu0 0.0
    %2037 = vmatpush1.msra.mxu0 0.0
    %2038 = vmatprep.subr.mxu0 0.0
    %2039 = vmatpush1.msra.mxu0 0.0
    %2040 = vmatprep.subr.mxu0 0.0
    %2041 = vmatpush1.msra.mxu0 0.0
    %2042 = vmatprep.subr.mxu0 0.0
    %2043 = vmatpush1.msra.mxu0 0.0
    %2044 = vmatprep.subr.mxu0 0.0
    %2045 = vmatpush1.msra.mxu0 0.0
    %2046 = vmatprep.subr.mxu0 0.0
    %2047 = vmatpush1.msra.mxu0 0.0
    %2048 = vmatprep.subr.mxu0 0.0
    %2049 = vmatpush1.msra.mxu0 0.0
    %2050 = vmatprep.subr.mxu0 0.0
    %2051 = vmatpush1.msra.mxu0 0.0
    %2052 = vmatprep.subr.mxu0 0.0
    %2053 = vmatpush1.msra.mxu0 0.0
    %2054 = vmatprep.subr.mxu0 0.0
    %2055 = vmatpush1.msra.mxu0 0.0
    %2056 = vmatprep.subr.mxu0 0.0
    %2057 = vmatpush1.msra.mxu0 0.0
    %2058 = vmatprep.subr.mxu0 0.0
    %2059 = vmatpush1.msra.mxu0 0.0
    %2060 = vmatprep.subr.mxu0 0.0
    %2061 = vmatpush1.msra.mxu0 0.0
    %2062 = vmatprep.subr.mxu0 0.0
    %2063 = vmatpush1.msra.mxu0 0.0
    %2064 = vmatprep.subr.mxu0 0.0
    %2065 = vmatpush1.msra.mxu0 0.0
    %2066 = vmatprep.subr.mxu0 0.0
    %2067 = vmatpush1.msra.mxu0 0.0
    %2068 = vmatprep.subr.mxu0 0.0
    %2069 = vmatpush1.msra.mxu0 0.0
    %2070 = vmatprep.subr.mxu0 0.0
    %2071 = vmatpush1.msra.mxu0 0.0
    %2072 = vmatprep.subr.mxu0 0.0
    %2073 = vmatpush1.msra.mxu0 0.0
    %2074 = vmatprep.subr.mxu0 0.0
    %2075 = vmatpush1.msra.mxu0 0.0
    %2076 = vmatprep.subr.mxu0 0.0
    %2077 = vmatpush1.msra.mxu0 0.0
    %2078 = vmatprep.subr.mxu0 0.0
    %2079 = vmatpush1.msra.mxu0 0.0
    %2080 = vmatprep.subr.mxu0 0.0
    %2081 = vmatpush1.msra.mxu0 0.0
    %2082 = vmatprep.subr.mxu0 0.0
    %2083 = vmatpush1.msra.mxu0 0.0
    %2084 = vmatprep.mubr.f32.mxu0 0.0
    %2085 = vmatmul.mubr.f32.gmra.mrb[0].mxu0 %v2015
    %v2086 = vpop.f32.mrb[0].mxu0
    %v2087 = vadd.f32 %v2013, %v2086
    %v2088 = vpop.f32.mrb[0].mxu0
    %2089 = vmatprep.mubr.f32.mxu0 0.0
    %2090 = vmatmul.mubr.f32.gmra.mrb[0].mxu0 %v2018
    %v2091 = vpop.f32.mrb[0].mxu0
    %v2092 = vadd.f32 %v2013, %v2091
    %v2093 = vpop.f32.mrb[0].mxu0
    %2094 = vdwg.mxu0
    %v2095 = vmul.f32 %v2087, 0.35355338
    %v2096 = vmul.f32 %v2092, 0.35355338
    %v2097 = vlaneseq
    %v2098 = vshrl.u32 %v2097, 7
    %v2099 = vsub.s32 1, %v2098
    %v2100 = vrot.slane %v2006, %v2099
    %2101 = vmatprep.subr.mxu0 0.0
    %2102 = vmatpush1.msra.mxu0 %v1991
    %2103 = vmatprep.subr.mxu0 0.0
    %2104 = vmatpush1.msra.mxu0 %v1992
    %2105 = vmatprep.subr.mxu0 0.0
    %2106 = vmatpush1.msra.mxu0 %v1993
    %2107 = vmatprep.subr.mxu0 0.0
    %2108 = vmatpush1.msra.mxu0 %v1994
    %2109 = vmatprep.subr.mxu0 0.0
    %2110 = vmatpush1.msra.mxu0 0.0
    %2111 = vmatprep.subr.mxu0 0.0
    %2112 = vmatpush1.msra.mxu0 0.0
    %2113 = vmatprep.subr.mxu0 0.0
    %2114 = vmatpush1.msra.mxu0 0.0
    %2115 = vmatprep.subr.mxu0 0.0
    %2116 = vmatpush1.msra.mxu0 0.0
    %2117 = vmatprep.subr.mxu0 0.0
    %2118 = vmatpush1.msra.mxu0 0.0
    %2119 = vmatprep.subr.mxu0 0.0
    %2120 = vmatpush1.msra.mxu0 0.0
    %2121 = vmatprep.subr.mxu0 0.0
    %2122 = vmatpush1.msra.mxu0 0.0
    %2123 = vmatprep.subr.mxu0 0.0
    %2124 = vmatpush1.msra.mxu0 0.0
    %2125 = vmatprep.subr.mxu0 0.0
    %2126 = vmatpush1.msra.mxu0 0.0
    %2127 = vmatprep.subr.mxu0 0.0
    %2128 = vmatpush1.msra.mxu0 0.0
    %2129 = vmatprep.subr.mxu0 0.0
    %2130 = vmatpush1.msra.mxu0 0.0
    %2131 = vmatprep.subr.mxu0 0.0
    %2132 = vmatpush1.msra.mxu0 0.0
    %2133 = vmatprep.subr.mxu0 0.0
    %2134 = vmatpush1.msra.mxu0 0.0
    %2135 = vmatprep.subr.mxu0 0.0
    %2136 = vmatpush1.msra.mxu0 0.0
    %2137 = vmatprep.subr.mxu0 0.0
    %2138 = vmatpush1.msra.mxu0 0.0
    %2139 = vmatprep.subr.mxu0 0.0
    %2140 = vmatpush1.msra.mxu0 0.0
    %2141 = vmatprep.subr.mxu0 0.0
    %2142 = vmatpush1.msra.mxu0 0.0
    %2143 = vmatprep.subr.mxu0 0.0
    %2144 = vmatpush1.msra.mxu0 0.0
    %2145 = vmatprep.subr.mxu0 0.0
    %2146 = vmatpush1.msra.mxu0 0.0
    %2147 = vmatprep.subr.mxu0 0.0
    %2148 = vmatpush1.msra.mxu0 0.0
    %2149 = vmatprep.subr.mxu0 0.0
    %2150 = vmatpush1.msra.mxu0 0.0
    %2151 = vmatprep.subr.mxu0 0.0
    %2152 = vmatpush1.msra.mxu0 0.0
    %2153 = vmatprep.subr.mxu0 0.0
    %2154 = vmatpush1.msra.mxu0 0.0
    %2155 = vmatprep.subr.mxu0 0.0
    %2156 = vmatpush1.msra.mxu0 0.0
    %2157 = vmatprep.subr.mxu0 0.0
    %2158 = vmatpush1.msra.mxu0 0.0
    %2159 = vmatprep.subr.mxu0 0.0
    %2160 = vmatpush1.msra.mxu0 0.0
    %2161 = vmatprep.subr.mxu0 0.0
    %2162 = vmatpush1.msra.mxu0 0.0
    %2163 = vmatprep.subr.mxu0 0.0
    %2164 = vmatpush1.msra.mxu0 0.0
    %2165 = vmatprep.mubr.f32.mxu0 0.0
    %2166 = vmatmul.mubr.f32.gmra.mrb[0].mxu0 %v2015
    %v2167 = vpop.f32.mrb[0].mxu0
    %v2168 = vadd.f32 %v2100, %v2167
    %v2169 = vpop.f32.mrb[0].mxu0
    %2170 = vmatprep.mubr.f32.mxu0 0.0
    %2171 = vmatmul.mubr.f32.gmra.mrb[0].mxu0 %v2018
    %v2172 = vpop.f32.mrb[0].mxu0
    %v2173 = vadd.f32 %v2100, %v2172
    %v2174 = vpop.f32.mrb[0].mxu0
    %2175 = vdwg.mxu0
    %v2176 = vlaneseq
    %v2177 = vshrl.u32 %v2176, 7
    %v2178 = vsub.s32 2, %v2177
    %v2179 = vrot.slane %v2006, %v2178
    %2180 = vmatprep.subr.mxu0 0.0
    %2181 = vmatpush1.msra.mxu0 %v1996
    %2182 = vmatprep.subr.mxu0 0.0
    %2183 = vmatpush1.msra.mxu0 %v1997
    %2184 = vmatprep.subr.mxu0 0.0
    %2185 = vmatpush1.msra.mxu0 %v1998
    %2186 = vmatprep.subr.mxu0 0.0
    %2187 = vmatpush1.msra.mxu0 %v1999
    %2188 = vmatprep.subr.mxu0 0.0
    %2189 = vmatpush1.msra.mxu0 0.0
    %2190 = vmatprep.subr.mxu0 0.0
    %2191 = vmatpush1.msra.mxu0 0.0
    %2192 = vmatprep.subr.mxu0 0.0
    %2193 = vmatpush1.msra.mxu0 0.0
    %2194 = vmatprep.subr.mxu0 0.0
    %2195 = vmatpush1.msra.mxu0 0.0
    %2196 = vmatprep.subr.mxu0 0.0
    %2197 = vmatpush1.msra.mxu0 0.0
    %2198 = vmatprep.subr.mxu0 0.0
    %2199 = vmatpush1.msra.mxu0 0.0
    %2200 = vmatprep.subr.mxu0 0.0
    %2201 = vmatpush1.msra.mxu0 0.0
    %2202 = vmatprep.subr.mxu0 0.0
    %2203 = vmatpush1.msra.mxu0 0.0
    %2204 = vmatprep.subr.mxu0 0.0
    %2205 = vmatpush1.msra.mxu0 0.0
    %2206 = vmatprep.subr.mxu0 0.0
    %2207 = vmatpush1.msra.mxu0 0.0
    %2208 = vmatprep.subr.mxu0 0.0
    %2209 = vmatpush1.msra.mxu0 0.0
    %2210 = vmatprep.subr.mxu0 0.0
    %2211 = vmatpush1.msra.mxu0 0.0
    %2212 = vmatprep.subr.mxu0 0.0
    %2213 = vmatpush1.msra.mxu0 0.0
    %2214 = vmatprep.subr.mxu0 0.0
    %2215 = vmatpush1.msra.mxu0 0.0
    %2216 = vmatprep.subr.mxu0 0.0
    %2217 = vmatpush1.msra.mxu0 0.0
    %2218 = vmatprep.subr.mxu0 0.0
    %2219 = vmatpush1.msra.mxu0 0.0
    %2220 = vmatprep.subr.mxu0 0.0
    %2221 = vmatpush1.msra.mxu0 0.0
    %2222 = vmatprep.subr.mxu0 0.0
    %2223 = vmatpush1.msra.mxu0 0.0
    %2224 = vmatprep.subr.mxu0 0.0
    %2225 = vmatpush1.msra.mxu0 0.0
    %2226 = vmatprep.subr.mxu0 0.0
    %2227 = vmatpush1.msra.mxu0 0.0
    %2228 = vmatprep.subr.mxu0 0.0
    %2229 = vmatpush1.msra.mxu0 0.0
    %2230 = vmatprep.subr.mxu0 0.0
    %2231 = vmatpush1.msra.mxu0 0.0
    %2232 = vmatprep.subr.mxu0 0.0
    %2233 = vmatpush1.msra.mxu0 0.0
    %2234 = vmatprep.subr.mxu0 0.0
    %2235 = vmatpush1.msra.mxu0 0.0
    %2236 = vmatprep.subr.mxu0 0.0
    %2237 = vmatpush1.msra.mxu0 0.0
    %2238 = vmatprep.subr.mxu0 0.0
    %2239 = vmatpush1.msra.mxu0 0.0
    %2240 = vmatprep.subr.mxu0 0.0
    %2241 = vmatpush1.msra.mxu0 0.0
    %2242 = vmatprep.subr.mxu0 0.0
    %2243 = vmatpush1.msra.mxu0 0.0
    %2244 = vmatprep.mubr.f32.mxu0 0.0
    %2245 = vmatmul.mubr.f32.gmra.mrb[0].mxu0 %v2015
    %v2246 = vpop.f32.mrb[0].mxu0
    %v2247 = vadd.f32 %v2179, %v2246
    %v2248 = vpop.f32.mrb[0].mxu0
    %2249 = vmatprep.mubr.f32.mxu0 0.0
    %2250 = vmatmul.mubr.f32.gmra.mrb[0].mxu0 %v2018
    %v2251 = vpop.f32.mrb[0].mxu0
    %v2252 = vadd.f32 %v2179, %v2251
    %v2253 = vpop.f32.mrb[0].mxu0
    %2254 = vdwg.mxu0
    %2256 = vrot.lane.b32.xlu0 %v2095, 120
    %v2257 = vpop.permute.xlu0 %2256
    %2258 = vrot.lane.b32.xlu0 %v2095, 112
    %v2259 = vpop.permute.xlu0 %2258
    %2260 = vrot.lane.b32.xlu0 %v2095, 104
    %v2261 = vpop.permute.xlu0 %2260
    %2263 = vrot.lane.b32.xlu0 %v2168, 120
    %v2264 = vpop.permute.xlu0 %2263
    %2265 = vrot.lane.b32.xlu0 %v2168, 112
    %v2266 = vpop.permute.xlu0 %2265
    %2267 = vrot.lane.b32.xlu0 %v2168, 104
    %v2268 = vpop.permute.xlu0 %2267
    %2270 = vrot.lane.b32.xlu0 %v2247, 120
    %v2271 = vpop.permute.xlu0 %2270
    %2273 = vrot.lane.b32.xlu0 %v2247, 112
    %v2274 = vpop.permute.xlu0 %2273
    %2276 = vrot.lane.b32.xlu0 %v2247, 104
    %v2277 = vpop.permute.xlu0 %2276
    %v2279 = vsel %vm335, %v2095, 0
    %v2281 = vsel %vm335, %v2168, 0
    %2283 = vmatprep.subr.mxu0 0.0
    %2284 = vmatpush1.xpose.msra.mxu0 %v2281
    %2285 = vmatprep.subr.mxu0 0.0
    %2286 = vmatpush1.xpose.msra.mxu0 0.0
    %2287 = vmatprep.subr.mxu0 0.0
    %2288 = vmatpush1.xpose.msra.mxu0 0.0
    %2289 = vmatprep.subr.mxu0 0.0
    %2290 = vmatpush1.xpose.msra.mxu0 0.0
    %2291 = vmatprep.subr.mxu0 0.0
    %2292 = vmatpush1.xpose.msra.mxu0 0.0
    %2293 = vmatprep.subr.mxu0 0.0
    %2294 = vmatpush1.xpose.msra.mxu0 0.0
    %2295 = vmatprep.subr.mxu0 0.0
    %2296 = vmatpush1.xpose.msra.mxu0 0.0
    %2297 = vmatprep.subr.mxu0 0.0
    %2298 = vmatpush1.xpose.msra.mxu0 0.0
    %2299 = vmatprep.subr.mxu0 0.0
    %2300 = vmatpush1.xpose.msra.mxu0 0.0
    %2301 = vmatprep.subr.mxu0 0.0
    %2302 = vmatpush1.xpose.msra.mxu0 0.0
    %2303 = vmatprep.subr.mxu0 0.0
    %2304 = vmatpush1.xpose.msra.mxu0 0.0
    %2305 = vmatprep.subr.mxu0 0.0
    %2306 = vmatpush1.xpose.msra.mxu0 0.0
    %2307 = vmatprep.subr.mxu0 0.0
    %2308 = vmatpush1.xpose.msra.mxu0 0.0
    %2309 = vmatprep.subr.mxu0 0.0
    %2310 = vmatpush1.xpose.msra.mxu0 0.0
    %2311 = vmatprep.subr.mxu0 0.0
    %2312 = vmatpush1.xpose.msra.mxu0 0.0
    %2313 = vmatprep.subr.mxu0 0.0
    %2314 = vmatpush1.xpose.msra.mxu0 0.0
    %2315 = vmatprep.subr.mxu0 0.0
    %2316 = vmatpush1.xpose.msra.mxu0 0.0
    %2317 = vmatprep.subr.mxu0 0.0
    %2318 = vmatpush1.xpose.msra.mxu0 0.0
    %2319 = vmatprep.subr.mxu0 0.0
    %2320 = vmatpush1.xpose.msra.mxu0 0.0
    %2321 = vmatprep.subr.mxu0 0.0
    %2322 = vmatpush1.xpose.msra.mxu0 0.0
    %2323 = vmatprep.subr.mxu0 0.0
    %2324 = vmatpush1.xpose.msra.mxu0 0.0
    %2325 = vmatprep.subr.mxu0 0.0
    %2326 = vmatpush1.xpose.msra.mxu0 0.0
    %2327 = vmatprep.subr.mxu0 0.0
    %2328 = vmatpush1.xpose.msra.mxu0 0.0
    %2329 = vmatprep.subr.mxu0 0.0
    %2330 = vmatpush1.xpose.msra.mxu0 0.0
    %2331 = vmatprep.subr.mxu0 0.0
    %2332 = vmatpush1.xpose.msra.mxu0 0.0
    %2333 = vmatprep.subr.mxu0 0.0
    %2334 = vmatpush1.xpose.msra.mxu0 0.0
    %2335 = vmatprep.subr.mxu0 0.0
    %2336 = vmatpush1.xpose.msra.mxu0 0.0
    %2337 = vmatprep.subr.mxu0 0.0
    %2338 = vmatpush1.xpose.msra.mxu0 0.0
    %2339 = vmatprep.subr.mxu0 0.0
    %2340 = vmatpush1.xpose.msra.mxu0 0.0
    %2341 = vmatprep.subr.mxu0 0.0
    %2342 = vmatpush1.xpose.msra.mxu0 0.0
    %2343 = vmatprep.subr.mxu0 0.0
    %2344 = vmatpush1.xpose.msra.mxu0 0.0
    %2345 = vmatprep.subr.mxu0 0.0
    %2346 = vmatpush1.xpose.msra.mxu0 0.0
    %2347 = vmatprep.mubr.f32.mxu0 0.0
    %2348 = vmatmul.mubr.f32.gmra.mrb[0].mxu0 %v2279
    %v2349 = vpop.f32.mrb[0].mxu0
    %v2350 = vadd.f32 0.0, %v2349
    %v2351 = vpop.f32.mrb[0].mxu0
    %2352 = vdwg.mxu0
    %v2353 = vsel %vm335, %v2257, 0
    %v2355 = vsel %vm335, %v2264, 0
    %2357 = vmatprep.subr.mxu0 0.0
    %2358 = vmatpush1.xpose.msra.mxu0 %v2355
    %2359 = vmatprep.subr.mxu0 0.0
    %2360 = vmatpush1.xpose.msra.mxu0 0.0
    %2361 = vmatprep.subr.mxu0 0.0
    %2362 = vmatpush1.xpose.msra.mxu0 0.0
    %2363 = vmatprep.subr.mxu0 0.0
    %2364 = vmatpush1.xpose.msra.mxu0 0.0
    %2365 = vmatprep.subr.mxu0 0.0
    %2366 = vmatpush1.xpose.msra.mxu0 0.0
    %2367 = vmatprep.subr.mxu0 0.0
    %2368 = vmatpush1.xpose.msra.mxu0 0.0
    %2369 = vmatprep.subr.mxu0 0.0
    %2370 = vmatpush1.xpose.msra.mxu0 0.0
    %2371 = vmatprep.subr.mxu0 0.0
    %2372 = vmatpush1.xpose.msra.mxu0 0.0
    %2373 = vmatprep.subr.mxu0 0.0
    %2374 = vmatpush1.xpose.msra.mxu0 0.0
    %2375 = vmatprep.subr.mxu0 0.0
    %2376 = vmatpush1.xpose.msra.mxu0 0.0
    %2377 = vmatprep.subr.mxu0 0.0
    %2378 = vmatpush1.xpose.msra.mxu0 0.0
    %2379 = vmatprep.subr.mxu0 0.0
    %2380 = vmatpush1.xpose.msra.mxu0 0.0
    %2381 = vmatprep.subr.mxu0 0.0
    %2382 = vmatpush1.xpose.msra.mxu0 0.0
    %2383 = vmatprep.subr.mxu0 0.0
    %2384 = vmatpush1.xpose.msra.mxu0 0.0
    %2385 = vmatprep.subr.mxu0 0.0
    %2386 = vmatpush1.xpose.msra.mxu0 0.0
    %2387 = vmatprep.subr.mxu0 0.0
    %2388 = vmatpush1.xpose.msra.mxu0 0.0
    %2389 = vmatprep.subr.mxu0 0.0
    %2390 = vmatpush1.xpose.msra.mxu0 0.0
    %2391 = vmatprep.subr.mxu0 0.0
    %2392 = vmatpush1.xpose.msra.mxu0 0.0
    %2393 = vmatprep.subr.mxu0 0.0
    %2394 = vmatpush1.xpose.msra.mxu0 0.0
    %2395 = vmatprep.subr.mxu0 0.0
    %2396 = vmatpush1.xpose.msra.mxu0 0.0
    %2397 = vmatprep.subr.mxu0 0.0
    %2398 = vmatpush1.xpose.msra.mxu0 0.0
    %2399 = vmatprep.subr.mxu0 0.0
    %2400 = vmatpush1.xpose.msra.mxu0 0.0
    %2401 = vmatprep.subr.mxu0 0.0
    %2402 = vmatpush1.xpose.msra.mxu0 0.0
    %2403 = vmatprep.subr.mxu0 0.0
    %2404 = vmatpush1.xpose.msra.mxu0 0.0
    %2405 = vmatprep.subr.mxu0 0.0
    %2406 = vmatpush1.xpose.msra.mxu0 0.0
    %2407 = vmatprep.subr.mxu0 0.0
    %2408 = vmatpush1.xpose.msra.mxu0 0.0
    %2409 = vmatprep.subr.mxu0 0.0
    %2410 = vmatpush1.xpose.msra.mxu0 0.0
    %2411 = vmatprep.subr.mxu0 0.0
    %2412 = vmatpush1.xpose.msra.mxu0 0.0
    %2413 = vmatprep.subr.mxu0 0.0
    %2414 = vmatpush1.xpose.msra.mxu0 0.0
    %2415 = vmatprep.subr.mxu0 0.0
    %2416 = vmatpush1.xpose.msra.mxu0 0.0
    %2417 = vmatprep.subr.mxu0 0.0
    %2418 = vmatpush1.xpose.msra.mxu0 0.0
    %2419 = vmatprep.subr.mxu0 0.0
    %2420 = vmatpush1.xpose.msra.mxu0 0.0
    %2421 = vmatprep.mubr.f32.mxu0 0.0
    %2422 = vmatmul.mubr.f32.gmra.mrb[0].mxu0 %v2353
    %v2423 = vpop.f32.mrb[0].mxu0
    %v2424 = vadd.f32 0.0, %v2423
    %v2425 = vpop.f32.mrb[0].mxu0
    %2426 = vdwg.mxu0
    %v2427 = vsel %vm335, %v2259, 0
    %v2429 = vsel %vm335, %v2266, 0
    %2431 = vmatprep.subr.mxu0 0.0
    %2432 = vmatpush1.xpose.msra.mxu0 %v2429
    %2433 = vmatprep.subr.mxu0 0.0
    %2434 = vmatpush1.xpose.msra.mxu0 0.0
    %2435 = vmatprep.subr.mxu0 0.0
    %2436 = vmatpush1.xpose.msra.mxu0 0.0
    %2437 = vmatprep.subr.mxu0 0.0
    %2438 = vmatpush1.xpose.msra.mxu0 0.0
    %2439 = vmatprep.subr.mxu0 0.0
    %2440 = vmatpush1.xpose.msra.mxu0 0.0
    %2441 = vmatprep.subr.mxu0 0.0
    %2442 = vmatpush1.xpose.msra.mxu0 0.0
    %2443 = vmatprep.subr.mxu0 0.0
    %2444 = vmatpush1.xpose.msra.mxu0 0.0
    %2445 = vmatprep.subr.mxu0 0.0
    %2446 = vmatpush1.xpose.msra.mxu0 0.0
    %2447 = vmatprep.subr.mxu0 0.0
    %2448 = vmatpush1.xpose.msra.mxu0 0.0
    %2449 = vmatprep.subr.mxu0 0.0
    %2450 = vmatpush1.xpose.msra.mxu0 0.0
    %2451 = vmatprep.subr.mxu0 0.0
    %2452 = vmatpush1.xpose.msra.mxu0 0.0
    %2453 = vmatprep.subr.mxu0 0.0
    %2454 = vmatpush1.xpose.msra.mxu0 0.0
    %2455 = vmatprep.subr.mxu0 0.0
    %2456 = vmatpush1.xpose.msra.mxu0 0.0
    %2457 = vmatprep.subr.mxu0 0.0
    %2458 = vmatpush1.xpose.msra.mxu0 0.0
    %2459 = vmatprep.subr.mxu0 0.0
    %2460 = vmatpush1.xpose.msra.mxu0 0.0
    %2461 = vmatprep.subr.mxu0 0.0
    %2462 = vmatpush1.xpose.msra.mxu0 0.0
    %2463 = vmatprep.subr.mxu0 0.0
    %2464 = vmatpush1.xpose.msra.mxu0 0.0
    %2465 = vmatprep.subr.mxu0 0.0
    %2466 = vmatpush1.xpose.msra.mxu0 0.0
    %2467 = vmatprep.subr.mxu0 0.0
    %2468 = vmatpush1.xpose.msra.mxu0 0.0
    %2469 = vmatprep.subr.mxu0 0.0
    %2470 = vmatpush1.xpose.msra.mxu0 0.0
    %2471 = vmatprep.subr.mxu0 0.0
    %2472 = vmatpush1.xpose.msra.mxu0 0.0
    %2473 = vmatprep.subr.mxu0 0.0
    %2474 = vmatpush1.xpose.msra.mxu0 0.0
    %2475 = vmatprep.subr.mxu0 0.0
    %2476 = vmatpush1.xpose.msra.mxu0 0.0
    %2477 = vmatprep.subr.mxu0 0.0
    %2478 = vmatpush1.xpose.msra.mxu0 0.0
    %2479 = vmatprep.subr.mxu0 0.0
    %2480 = vmatpush1.xpose.msra.mxu0 0.0
    %2481 = vmatprep.subr.mxu0 0.0
    %2482 = vmatpush1.xpose.msra.mxu0 0.0
    %2483 = vmatprep.subr.mxu0 0.0
    %2484 = vmatpush1.xpose.msra.mxu0 0.0
    %2485 = vmatprep.subr.mxu0 0.0
    %2486 = vmatpush1.xpose.msra.mxu0 0.0
    %2487 = vmatprep.subr.mxu0 0.0
    %2488 = vmatpush1.xpose.msra.mxu0 0.0
    %2489 = vmatprep.subr.mxu0 0.0
    %2490 = vmatpush1.xpose.msra.mxu0 0.0
    %2491 = vmatprep.subr.mxu0 0.0
    %2492 = vmatpush1.xpose.msra.mxu0 0.0
    %2493 = vmatprep.subr.mxu0 0.0
    %2494 = vmatpush1.xpose.msra.mxu0 0.0
    %2495 = vmatprep.mubr.f32.mxu0 0.0
    %2496 = vmatmul.mubr.f32.gmra.mrb[0].mxu0 %v2427
    %v2497 = vpop.f32.mrb[0].mxu0
    %v2498 = vadd.f32 0.0, %v2497
    %v2499 = vpop.f32.mrb[0].mxu0
    %2500 = vdwg.mxu0
    %v2501 = vsel %vm335, %v2261, 0
    %v2503 = vsel %vm335, %v2268, 0
    %2505 = vmatprep.subr.mxu0 0.0
    %2506 = vmatpush1.xpose.msra.mxu0 %v2503
    %2507 = vmatprep.subr.mxu0 0.0
    %2508 = vmatpush1.xpose.msra.mxu0 0.0
    %2509 = vmatprep.subr.mxu0 0.0
    %2510 = vmatpush1.xpose.msra.mxu0 0.0
    %2511 = vmatprep.subr.mxu0 0.0
    %2512 = vmatpush1.xpose.msra.mxu0 0.0
    %2513 = vmatprep.subr.mxu0 0.0
    %2514 = vmatpush1.xpose.msra.mxu0 0.0
    %2515 = vmatprep.subr.mxu0 0.0
    %2516 = vmatpush1.xpose.msra.mxu0 0.0
    %2517 = vmatprep.subr.mxu0 0.0
    %2518 = vmatpush1.xpose.msra.mxu0 0.0
    %2519 = vmatprep.subr.mxu0 0.0
    %2520 = vmatpush1.xpose.msra.mxu0 0.0
    %2521 = vmatprep.subr.mxu0 0.0
    %2522 = vmatpush1.xpose.msra.mxu0 0.0
    %2523 = vmatprep.subr.mxu0 0.0
    %2524 = vmatpush1.xpose.msra.mxu0 0.0
    %2525 = vmatprep.subr.mxu0 0.0
    %2526 = vmatpush1.xpose.msra.mxu0 0.0
    %2527 = vmatprep.subr.mxu0 0.0
    %2528 = vmatpush1.xpose.msra.mxu0 0.0
    %2529 = vmatprep.subr.mxu0 0.0
    %2530 = vmatpush1.xpose.msra.mxu0 0.0
    %2531 = vmatprep.subr.mxu0 0.0
    %2532 = vmatpush1.xpose.msra.mxu0 0.0
    %2533 = vmatprep.subr.mxu0 0.0
    %2534 = vmatpush1.xpose.msra.mxu0 0.0
    %2535 = vmatprep.subr.mxu0 0.0
    %2536 = vmatpush1.xpose.msra.mxu0 0.0
    %2537 = vmatprep.subr.mxu0 0.0
    %2538 = vmatpush1.xpose.msra.mxu0 0.0
    %2539 = vmatprep.subr.mxu0 0.0
    %2540 = vmatpush1.xpose.msra.mxu0 0.0
    %2541 = vmatprep.subr.mxu0 0.0
    %2542 = vmatpush1.xpose.msra.mxu0 0.0
    %2543 = vmatprep.subr.mxu0 0.0
    %2544 = vmatpush1.xpose.msra.mxu0 0.0
    %2545 = vmatprep.subr.mxu0 0.0
    %2546 = vmatpush1.xpose.msra.mxu0 0.0
    %2547 = vmatprep.subr.mxu0 0.0
    %2548 = vmatpush1.xpose.msra.mxu0 0.0
    %2549 = vmatprep.subr.mxu0 0.0
    %2550 = vmatpush1.xpose.msra.mxu0 0.0
    %2551 = vmatprep.subr.mxu0 0.0
    %2552 = vmatpush1.xpose.msra.mxu0 0.0
    %2553 = vmatprep.subr.mxu0 0.0
    %2554 = vmatpush1.xpose.msra.mxu0 0.0
    %2555 = vmatprep.subr.mxu0 0.0
    %2556 = vmatpush1.xpose.msra.mxu0 0.0
    %2557 = vmatprep.subr.mxu0 0.0
    %2558 = vmatpush1.xpose.msra.mxu0 0.0
    %2559 = vmatprep.subr.mxu0 0.0
    %2560 = vmatpush1.xpose.msra.mxu0 0.0
    %2561 = vmatprep.subr.mxu0 0.0
    %2562 = vmatpush1.xpose.msra.mxu0 0.0
    %2563 = vmatprep.subr.mxu0 0.0
    %2564 = vmatpush1.xpose.msra.mxu0 0.0
    %2565 = vmatprep.subr.mxu0 0.0
    %2566 = vmatpush1.xpose.msra.mxu0 0.0
    %2567 = vmatprep.subr.mxu0 0.0
    %2568 = vmatpush1.xpose.msra.mxu0 0.0
    %2569 = vmatprep.mubr.f32.mxu0 0.0
    %2570 = vmatmul.mubr.f32.gmra.mrb[0].mxu0 %v2501
    %v2571 = vpop.f32.mrb[0].mxu0
    %v2572 = vadd.f32 0.0, %v2571
    %v2573 = vpop.f32.mrb[0].mxu0
    %2574 = vdwg.mxu0
    %v2575 = vsel %vm335, %v2350, -inf
    %v2576 = vsel %vm335, %v2424, -inf
    %v2577 = vsel %vm335, %v2498, -inf
    %v2578 = vsel %vm335, %v2572, -inf
    %v2579 = vmax.f32 %v2575, %v2576
    %v2580 = vmax.f32 %v2577, %v2578
    %v2581 = vmax.f32 %v2579, %v2580
    %v2582 = vsub.f32 %v2350, %v2581
    %v2583 = vsub.f32 %v2424, %v2581
    %v2584 = vsub.f32 %v2498, %v2581
    %v2585 = vsub.f32 %v2572, %v2581
    %v2586 = vmul.f32 %v2582, 1.442695
    %v2587 = vpow.pop %v2586
    %v2588 = vmul.f32 %v2583, 1.442695
    %v2589 = vpow.pop %v2588
    %v2590 = vmul.f32 %v2584, 1.442695
    %v2591 = vpow.pop %v2590
    %v2592 = vmul.f32 %v2585, 1.442695
    %v2593 = vpow.pop %v2592
    %v2594 = vsel %vm335, %v2587, 0.0
    %v2595 = vsel %vm335, %v2589, 0.0
    %v2596 = vadd.f32 %v2594, %v2595
    %v2597 = vsel %vm335, %v2591, 0.0
    %v2598 = vadd.f32 %v2596, %v2597
    %v2599 = vsel %vm335, %v2593, 0.0
    %v2600 = vadd.f32 %v2598, %v2599
    %v2601 = vrcp.pop %v2600
    %v2602 = vmul.f32 %v2587, %v2601
    %v2603 = vmul.f32 %v2589, %v2601
    %v2604 = vmul.f32 %v2591, %v2601
    %v2605 = vmul.f32 %v2593, %v2601
    %v2607 = vsel %vm335, %v2602, 0
    %2609 = vmatprep.subr.mxu0 0.0
    %2610 = vmatpush1.msra.mxu0 %v2247
    %2611 = vmatprep.subr.mxu0 0.0
    %2612 = vmatpush1.msra.mxu0 0.0
    %2613 = vmatprep.subr.mxu0 0.0
    %2614 = vmatpush1.msra.mxu0 0.0
    %2615 = vmatprep.subr.mxu0 0.0
    %2616 = vmatpush1.msra.mxu0 0.0
    %2617 = vmatprep.subr.mxu0 0.0
    %2618 = vmatpush1.msra.mxu0 0.0
    %2619 = vmatprep.subr.mxu0 0.0
    %2620 = vmatpush1.msra.mxu0 0.0
    %2621 = vmatprep.subr.mxu0 0.0
    %2622 = vmatpush1.msra.mxu0 0.0
    %2623 = vmatprep.subr.mxu0 0.0
    %2624 = vmatpush1.msra.mxu0 0.0
    %2625 = vmatprep.subr.mxu0 0.0
    %2626 = vmatpush1.msra.mxu0 0.0
    %2627 = vmatprep.subr.mxu0 0.0
    %2628 = vmatpush1.msra.mxu0 0.0
    %2629 = vmatprep.subr.mxu0 0.0
    %2630 = vmatpush1.msra.mxu0 0.0
    %2631 = vmatprep.subr.mxu0 0.0
    %2632 = vmatpush1.msra.mxu0 0.0
    %2633 = vmatprep.subr.mxu0 0.0
    %2634 = vmatpush1.msra.mxu0 0.0
    %2635 = vmatprep.subr.mxu0 0.0
    %2636 = vmatpush1.msra.mxu0 0.0
    %2637 = vmatprep.subr.mxu0 0.0
    %2638 = vmatpush1.msra.mxu0 0.0
    %2639 = vmatprep.subr.mxu0 0.0
    %2640 = vmatpush1.msra.mxu0 0.0
    %2641 = vmatprep.subr.mxu0 0.0
    %2642 = vmatpush1.msra.mxu0 0.0
    %2643 = vmatprep.subr.mxu0 0.0
    %2644 = vmatpush1.msra.mxu0 0.0
    %2645 = vmatprep.subr.mxu0 0.0
    %2646 = vmatpush1.msra.mxu0 0.0
    %2647 = vmatprep.subr.mxu0 0.0
    %2648 = vmatpush1.msra.mxu0 0.0
    %2649 = vmatprep.subr.mxu0 0.0
    %2650 = vmatpush1.msra.mxu0 0.0
    %2651 = vmatprep.subr.mxu0 0.0
    %2652 = vmatpush1.msra.mxu0 0.0
    %2653 = vmatprep.subr.mxu0 0.0
    %2654 = vmatpush1.msra.mxu0 0.0
    %2655 = vmatprep.subr.mxu0 0.0
    %2656 = vmatpush1.msra.mxu0 0.0
    %2657 = vmatprep.subr.mxu0 0.0
    %2658 = vmatpush1.msra.mxu0 0.0
    %2659 = vmatprep.subr.mxu0 0.0
    %2660 = vmatpush1.msra.mxu0 0.0
    %2661 = vmatprep.subr.mxu0 0.0
    %2662 = vmatpush1.msra.mxu0 0.0
    %2663 = vmatprep.subr.mxu0 0.0
    %2664 = vmatpush1.msra.mxu0 0.0
    %2665 = vmatprep.subr.mxu0 0.0
    %2666 = vmatpush1.msra.mxu0 0.0
    %2667 = vmatprep.subr.mxu0 0.0
    %2668 = vmatpush1.msra.mxu0 0.0
    %2669 = vmatprep.subr.mxu0 0.0
    %2670 = vmatpush1.msra.mxu0 0.0
    %2671 = vmatprep.subr.mxu0 0.0
    %2672 = vmatpush1.msra.mxu0 0.0
    %2673 = vmatprep.mubr.f32.mxu0 0.0
    %2674 = vmatmul.mubr.f32.gmra.mrb[0].mxu0 %v2607
    %v2675 = vpop.f32.mrb[0].mxu0
    %v2676 = vadd.f32 0.0, %v2675
    %v2677 = vpop.f32.mrb[0].mxu0
    %2678 = vdwg.mxu0
    %v2680 = vsel %vm335, %v2603, 0
    %2682 = vmatprep.subr.mxu0 0.0
    %2683 = vmatpush1.msra.mxu0 %v2271
    %2684 = vmatprep.subr.mxu0 0.0
    %2685 = vmatpush1.msra.mxu0 0.0
    %2686 = vmatprep.subr.mxu0 0.0
    %2687 = vmatpush1.msra.mxu0 0.0
    %2688 = vmatprep.subr.mxu0 0.0
    %2689 = vmatpush1.msra.mxu0 0.0
    %2690 = vmatprep.subr.mxu0 0.0
    %2691 = vmatpush1.msra.mxu0 0.0
    %2692 = vmatprep.subr.mxu0 0.0
    %2693 = vmatpush1.msra.mxu0 0.0
    %2694 = vmatprep.subr.mxu0 0.0
    %2695 = vmatpush1.msra.mxu0 0.0
    %2696 = vmatprep.subr.mxu0 0.0
    %2697 = vmatpush1.msra.mxu0 0.0
    %2698 = vmatprep.subr.mxu0 0.0
    %2699 = vmatpush1.msra.mxu0 0.0
    %2700 = vmatprep.subr.mxu0 0.0
    %2701 = vmatpush1.msra.mxu0 0.0
    %2702 = vmatprep.subr.mxu0 0.0
    %2703 = vmatpush1.msra.mxu0 0.0
    %2704 = vmatprep.subr.mxu0 0.0
    %2705 = vmatpush1.msra.mxu0 0.0
    %2706 = vmatprep.subr.mxu0 0.0
    %2707 = vmatpush1.msra.mxu0 0.0
    %2708 = vmatprep.subr.mxu0 0.0
    %2709 = vmatpush1.msra.mxu0 0.0
    %2710 = vmatprep.subr.mxu0 0.0
    %2711 = vmatpush1.msra.mxu0 0.0
    %2712 = vmatprep.subr.mxu0 0.0
    %2713 = vmatpush1.msra.mxu0 0.0
    %2714 = vmatprep.subr.mxu0 0.0
    %2715 = vmatpush1.msra.mxu0 0.0
    %2716 = vmatprep.subr.mxu0 0.0
    %2717 = vmatpush1.msra.mxu0 0.0
    %2718 = vmatprep.subr.mxu0 0.0
    %2719 = vmatpush1.msra.mxu0 0.0
    %2720 = vmatprep.subr.mxu0 0.0
    %2721 = vmatpush1.msra.mxu0 0.0
    %2722 = vmatprep.subr.mxu0 0.0
    %2723 = vmatpush1.msra.mxu0 0.0
    %2724 = vmatprep.subr.mxu0 0.0
    %2725 = vmatpush1.msra.mxu0 0.0
    %2726 = vmatprep.subr.mxu0 0.0
    %2727 = vmatpush1.msra.mxu0 0.0
    %2728 = vmatprep.subr.mxu0 0.0
    %2729 = vmatpush1.msra.mxu0 0.0
    %2730 = vmatprep.subr.mxu0 0.0
    %2731 = vmatpush1.msra.mxu0 0.0
    %2732 = vmatprep.subr.mxu0 0.0
    %2733 = vmatpush1.msra.mxu0 0.0
    %2734 = vmatprep.subr.mxu0 0.0
    %2735 = vmatpush1.msra.mxu0 0.0
    %2736 = vmatprep.subr.mxu0 0.0
    %2737 = vmatpush1.msra.mxu0 0.0
    %2738 = vmatprep.subr.mxu0 0.0
    %2739 = vmatpush1.msra.mxu0 0.0
    %2740 = vmatprep.subr.mxu0 0.0
    %2741 = vmatpush1.msra.mxu0 0.0
    %2742 = vmatprep.subr.mxu0 0.0
    %2743 = vmatpush1.msra.mxu0 0.0
    %2744 = vmatprep.subr.mxu0 0.0
    %2745 = vmatpush1.msra.mxu0 0.0
    %2746 = vmatprep.mubr.f32.mxu0 0.0
    %2747 = vmatmul.mubr.f32.gmra.mrb[0].mxu0 %v2680
    %v2748 = vpop.f32.mrb[0].mxu0
    %v2749 = vadd.f32 0.0, %v2748
    %v2750 = vpop.f32.mrb[0].mxu0
    %2751 = vdwg.mxu0
    %v2753 = vsel %vm335, %v2604, 0
    %2755 = vmatprep.subr.mxu0 0.0
    %2756 = vmatpush1.msra.mxu0 %v2274
    %2757 = vmatprep.subr.mxu0 0.0
    %2758 = vmatpush1.msra.mxu0 0.0
    %2759 = vmatprep.subr.mxu0 0.0
    %2760 = vmatpush1.msra.mxu0 0.0
    %2761 = vmatprep.subr.mxu0 0.0
    %2762 = vmatpush1.msra.mxu0 0.0
    %2763 = vmatprep.subr.mxu0 0.0
    %2764 = vmatpush1.msra.mxu0 0.0
    %2765 = vmatprep.subr.mxu0 0.0
    %2766 = vmatpush1.msra.mxu0 0.0
    %2767 = vmatprep.subr.mxu0 0.0
    %2768 = vmatpush1.msra.mxu0 0.0
    %2769 = vmatprep.subr.mxu0 0.0
    %2770 = vmatpush1.msra.mxu0 0.0
    %2771 = vmatprep.subr.mxu0 0.0
    %2772 = vmatpush1.msra.mxu0 0.0
    %2773 = vmatprep.subr.mxu0 0.0
    %2774 = vmatpush1.msra.mxu0 0.0
    %2775 = vmatprep.subr.mxu0 0.0
    %2776 = vmatpush1.msra.mxu0 0.0
    %2777 = vmatprep.subr.mxu0 0.0
    %2778 = vmatpush1.msra.mxu0 0.0
    %2779 = vmatprep.subr.mxu0 0.0
    %2780 = vmatpush1.msra.mxu0 0.0
    %2781 = vmatprep.subr.mxu0 0.0
    %2782 = vmatpush1.msra.mxu0 0.0
    %2783 = vmatprep.subr.mxu0 0.0
    %2784 = vmatpush1.msra.mxu0 0.0
    %2785 = vmatprep.subr.mxu0 0.0
    %2786 = vmatpush1.msra.mxu0 0.0
    %2787 = vmatprep.subr.mxu0 0.0
    %2788 = vmatpush1.msra.mxu0 0.0
    %2789 = vmatprep.subr.mxu0 0.0
    %2790 = vmatpush1.msra.mxu0 0.0
    %2791 = vmatprep.subr.mxu0 0.0
    %2792 = vmatpush1.msra.mxu0 0.0
    %2793 = vmatprep.subr.mxu0 0.0
    %2794 = vmatpush1.msra.mxu0 0.0
    %2795 = vmatprep.subr.mxu0 0.0
    %2796 = vmatpush1.msra.mxu0 0.0
    %2797 = vmatprep.subr.mxu0 0.0
    %2798 = vmatpush1.msra.mxu0 0.0
    %2799 = vmatprep.subr.mxu0 0.0
    %2800 = vmatpush1.msra.mxu0 0.0
    %2801 = vmatprep.subr.mxu0 0.0
    %2802 = vmatpush1.msra.mxu0 0.0
    %2803 = vmatprep.subr.mxu0 0.0
    %2804 = vmatpush1.msra.mxu0 0.0
    %2805 = vmatprep.subr.mxu0 0.0
    %2806 = vmatpush1.msra.mxu0 0.0
    %2807 = vmatprep.subr.mxu0 0.0
    %2808 = vmatpush1.msra.mxu0 0.0
    %2809 = vmatprep.subr.mxu0 0.0
    %2810 = vmatpush1.msra.mxu0 0.0
    %2811 = vmatprep.subr.mxu0 0.0
    %2812 = vmatpush1.msra.mxu0 0.0
    %2813 = vmatprep.subr.mxu0 0.0
    %2814 = vmatpush1.msra.mxu0 0.0
    %2815 = vmatprep.subr.mxu0 0.0
    %2816 = vmatpush1.msra.mxu0 0.0
    %2817 = vmatprep.subr.mxu0 0.0
    %2818 = vmatpush1.msra.mxu0 0.0
    %2819 = vmatprep.mubr.f32.mxu0 0.0
    %2820 = vmatmul.mubr.f32.gmra.mrb[0].mxu0 %v2753
    %v2821 = vpop.f32.mrb[0].mxu0
    %v2822 = vadd.f32 0.0, %v2821
    %v2823 = vpop.f32.mrb[0].mxu0
    %2824 = vdwg.mxu0
    %v2826 = vsel %vm335, %v2605, 0
    %2828 = vmatprep.subr.mxu0 0.0
    %2829 = vmatpush1.msra.mxu0 %v2277
    %2830 = vmatprep.subr.mxu0 0.0
    %2831 = vmatpush1.msra.mxu0 0.0
    %2832 = vmatprep.subr.mxu0 0.0
    %2833 = vmatpush1.msra.mxu0 0.0
    %2834 = vmatprep.subr.mxu0 0.0
    %2835 = vmatpush1.msra.mxu0 0.0
    %2836 = vmatprep.subr.mxu0 0.0
    %2837 = vmatpush1.msra.mxu0 0.0
    %2838 = vmatprep.subr.mxu0 0.0
    %2839 = vmatpush1.msra.mxu0 0.0
    %2840 = vmatprep.subr.mxu0 0.0
    %2841 = vmatpush1.msra.mxu0 0.0
    %2842 = vmatprep.subr.mxu0 0.0
    %2843 = vmatpush1.msra.mxu0 0.0
    %2844 = vmatprep.subr.mxu0 0.0
    %2845 = vmatpush1.msra.mxu0 0.0
    %2846 = vmatprep.subr.mxu0 0.0
    %2847 = vmatpush1.msra.mxu0 0.0
    %2848 = vmatprep.subr.mxu0 0.0
    %2849 = vmatpush1.msra.mxu0 0.0
    %2850 = vmatprep.subr.mxu0 0.0
    %2851 = vmatpush1.msra.mxu0 0.0
    %2852 = vmatprep.subr.mxu0 0.0
    %2853 = vmatpush1.msra.mxu0 0.0
    %2854 = vmatprep.subr.mxu0 0.0
    %2855 = vmatpush1.msra.mxu0 0.0
    %2856 = vmatprep.subr.mxu0 0.0
    %2857 = vmatpush1.msra.mxu0 0.0
    %2858 = vmatprep.subr.mxu0 0.0
    %2859 = vmatpush1.msra.mxu0 0.0
    %2860 = vmatprep.subr.mxu0 0.0
    %2861 = vmatpush1.msra.mxu0 0.0
    %2862 = vmatprep.subr.mxu0 0.0
    %2863 = vmatpush1.msra.mxu0 0.0
    %2864 = vmatprep.subr.mxu0 0.0
    %2865 = vmatpush1.msra.mxu0 0.0
    %2866 = vmatprep.subr.mxu0 0.0
    %2867 = vmatpush1.msra.mxu0 0.0
    %2868 = vmatprep.subr.mxu0 0.0
    %2869 = vmatpush1.msra.mxu0 0.0
    %2870 = vmatprep.subr.mxu0 0.0
    %2871 = vmatpush1.msra.mxu0 0.0
    %2872 = vmatprep.subr.mxu0 0.0
    %2873 = vmatpush1.msra.mxu0 0.0
    %2874 = vmatprep.subr.mxu0 0.0
    %2875 = vmatpush1.msra.mxu0 0.0
    %2876 = vmatprep.subr.mxu0 0.0
    %2877 = vmatpush1.msra.mxu0 0.0
    %2878 = vmatprep.subr.mxu0 0.0
    %2879 = vmatpush1.msra.mxu0 0.0
    %2880 = vmatprep.subr.mxu0 0.0
    %2881 = vmatpush1.msra.mxu0 0.0
    %2882 = vmatprep.subr.mxu0 0.0
    %2883 = vmatpush1.msra.mxu0 0.0
    %2884 = vmatprep.subr.mxu0 0.0
    %2885 = vmatpush1.msra.mxu0 0.0
    %2886 = vmatprep.subr.mxu0 0.0
    %2887 = vmatpush1.msra.mxu0 0.0
    %2888 = vmatprep.subr.mxu0 0.0
    %2889 = vmatpush1.msra.mxu0 0.0
    %2890 = vmatprep.subr.mxu0 0.0
    %2891 = vmatpush1.msra.mxu0 0.0
    %2892 = vmatprep.mubr.f32.mxu0 0.0
    %2893 = vmatmul.mubr.f32.gmra.mrb[0].mxu0 %v2826
    %v2894 = vpop.f32.mrb[0].mxu0
    %v2895 = vadd.f32 0.0, %v2894
    %v2896 = vpop.f32.mrb[0].mxu0
    %2897 = vdwg.mxu0
    %2899 = vrot.lane.b32.xlu0 %v2749, 8
    %v2900 = vpop.permute.xlu0 %2899
    %2903 = vrot.lane.b32.xlu0 %v2822, 16
    %v2904 = vpop.permute.xlu0 %2903
    %2907 = vrot.lane.b32.xlu0 %v2895, 24
    %v2908 = vpop.permute.xlu0 %2907
    %v2910 = vsel %vm335, %v2676, %v2900
    %v2911 = vsel %vm968, %v2910, %v2904
    %v2912 = vsel %vm970, %v2911, %v2908
    %2914 = vrot.lane.b32.xlu0 %v2096, 120
    %v2915 = vpop.permute.xlu0 %2914
    %2916 = vrot.lane.b32.xlu0 %v2096, 112
    %v2917 = vpop.permute.xlu0 %2916
    %2918 = vrot.lane.b32.xlu0 %v2096, 104
    %v2919 = vpop.permute.xlu0 %2918
    %2921 = vrot.lane.b32.xlu0 %v2173, 120
    %v2922 = vpop.permute.xlu0 %2921
    %2923 = vrot.lane.b32.xlu0 %v2173, 112
    %v2924 = vpop.permute.xlu0 %2923
    %2925 = vrot.lane.b32.xlu0 %v2173, 104
    %v2926 = vpop.permute.xlu0 %2925
    %2928 = vrot.lane.b32.xlu0 %v2252, 120
    %v2929 = vpop.permute.xlu0 %2928
    %2931 = vrot.lane.b32.xlu0 %v2252, 112
    %v2932 = vpop.permute.xlu0 %2931
    %2934 = vrot.lane.b32.xlu0 %v2252, 104
    %v2935 = vpop.permute.xlu0 %2934
    %v2937 = vsel %vm335, %v2096, 0
    %v2939 = vsel %vm335, %v2173, 0
    %2941 = vmatprep.subr.mxu0 0.0
    %2942 = vmatpush1.xpose.msra.mxu0 %v2939
    %2943 = vmatprep.subr.mxu0 0.0
    %2944 = vmatpush1.xpose.msra.mxu0 0.0
    %2945 = vmatprep.subr.mxu0 0.0
    %2946 = vmatpush1.xpose.msra.mxu0 0.0
    %2947 = vmatprep.subr.mxu0 0.0
    %2948 = vmatpush1.xpose.msra.mxu0 0.0
    %2949 = vmatprep.subr.mxu0 0.0
    %2950 = vmatpush1.xpose.msra.mxu0 0.0
    %2951 = vmatprep.subr.mxu0 0.0
    %2952 = vmatpush1.xpose.msra.mxu0 0.0
    %2953 = vmatprep.subr.mxu0 0.0
    %2954 = vmatpush1.xpose.msra.mxu0 0.0
    %2955 = vmatprep.subr.mxu0 0.0
    %2956 = vmatpush1.xpose.msra.mxu0 0.0
    %2957 = vmatprep.subr.mxu0 0.0
    %2958 = vmatpush1.xpose.msra.mxu0 0.0
    %2959 = vmatprep.subr.mxu0 0.0
    %2960 = vmatpush1.xpose.msra.mxu0 0.0
    %2961 = vmatprep.subr.mxu0 0.0
    %2962 = vmatpush1.xpose.msra.mxu0 0.0
    %2963 = vmatprep.subr.mxu0 0.0
    %2964 = vmatpush1.xpose.msra.mxu0 0.0
    %2965 = vmatprep.subr.mxu0 0.0
    %2966 = vmatpush1.xpose.msra.mxu0 0.0
    %2967 = vmatprep.subr.mxu0 0.0
    %2968 = vmatpush1.xpose.msra.mxu0 0.0
    %2969 = vmatprep.subr.mxu0 0.0
    %2970 = vmatpush1.xpose.msra.mxu0 0.0
    %2971 = vmatprep.subr.mxu0 0.0
    %2972 = vmatpush1.xpose.msra.mxu0 0.0
    %2973 = vmatprep.subr.mxu0 0.0
    %2974 = vmatpush1.xpose.msra.mxu0 0.0
    %2975 = vmatprep.subr.mxu0 0.0
    %2976 = vmatpush1.xpose.msra.mxu0 0.0
    %2977 = vmatprep.subr.mxu0 0.0
    %2978 = vmatpush1.xpose.msra.mxu0 0.0
    %2979 = vmatprep.subr.mxu0 0.0
    %2980 = vmatpush1.xpose.msra.mxu0 0.0
    %2981 = vmatprep.subr.mxu0 0.0
    %2982 = vmatpush1.xpose.msra.mxu0 0.0
    %2983 = vmatprep.subr.mxu0 0.0
    %2984 = vmatpush1.xpose.msra.mxu0 0.0
    %2985 = vmatprep.subr.mxu0 0.0
    %2986 = vmatpush1.xpose.msra.mxu0 0.0
    %2987 = vmatprep.subr.mxu0 0.0
    %2988 = vmatpush1.xpose.msra.mxu0 0.0
    %2989 = vmatprep.subr.mxu0 0.0
    %2990 = vmatpush1.xpose.msra.mxu0 0.0
    %2991 = vmatprep.subr.mxu0 0.0
    %2992 = vmatpush1.xpose.msra.mxu0 0.0
    %2993 = vmatprep.subr.mxu0 0.0
    %2994 = vmatpush1.xpose.msra.mxu0 0.0
    %2995 = vmatprep.subr.mxu0 0.0
    %2996 = vmatpush1.xpose.msra.mxu0 0.0
    %2997 = vmatprep.subr.mxu0 0.0
    %2998 = vmatpush1.xpose.msra.mxu0 0.0
    %2999 = vmatprep.subr.mxu0 0.0
    %3000 = vmatpush1.xpose.msra.mxu0 0.0
    %3001 = vmatprep.subr.mxu0 0.0
    %3002 = vmatpush1.xpose.msra.mxu0 0.0
    %3003 = vmatprep.subr.mxu0 0.0
    %3004 = vmatpush1.xpose.msra.mxu0 0.0
    %3005 = vmatprep.mubr.f32.mxu0 0.0
    %3006 = vmatmul.mubr.f32.gmra.mrb[0].mxu0 %v2937
    %v3007 = vpop.f32.mrb[0].mxu0
    %v3008 = vadd.f32 0.0, %v3007
    %v3009 = vpop.f32.mrb[0].mxu0
    %3010 = vdwg.mxu0
    %v3011 = vsel %vm335, %v2915, 0
    %v3013 = vsel %vm335, %v2922, 0
    %3015 = vmatprep.subr.mxu0 0.0
    %3016 = vmatpush1.xpose.msra.mxu0 %v3013
    %3017 = vmatprep.subr.mxu0 0.0
    %3018 = vmatpush1.xpose.msra.mxu0 0.0
    %3019 = vmatprep.subr.mxu0 0.0
    %3020 = vmatpush1.xpose.msra.mxu0 0.0
    %3021 = vmatprep.subr.mxu0 0.0
    %3022 = vmatpush1.xpose.msra.mxu0 0.0
    %3023 = vmatprep.subr.mxu0 0.0
    %3024 = vmatpush1.xpose.msra.mxu0 0.0
    %3025 = vmatprep.subr.mxu0 0.0
    %3026 = vmatpush1.xpose.msra.mxu0 0.0
    %3027 = vmatprep.subr.mxu0 0.0
    %3028 = vmatpush1.xpose.msra.mxu0 0.0
    %3029 = vmatprep.subr.mxu0 0.0
    %3030 = vmatpush1.xpose.msra.mxu0 0.0
    %3031 = vmatprep.subr.mxu0 0.0
    %3032 = vmatpush1.xpose.msra.mxu0 0.0
    %3033 = vmatprep.subr.mxu0 0.0
    %3034 = vmatpush1.xpose.msra.mxu0 0.0
    %3035 = vmatprep.subr.mxu0 0.0
    %3036 = vmatpush1.xpose.msra.mxu0 0.0
    %3037 = vmatprep.subr.mxu0 0.0
    %3038 = vmatpush1.xpose.msra.mxu0 0.0
    %3039 = vmatprep.subr.mxu0 0.0
    %3040 = vmatpush1.xpose.msra.mxu0 0.0
    %3041 = vmatprep.subr.mxu0 0.0
    %3042 = vmatpush1.xpose.msra.mxu0 0.0
    %3043 = vmatprep.subr.mxu0 0.0
    %3044 = vmatpush1.xpose.msra.mxu0 0.0
    %3045 = vmatprep.subr.mxu0 0.0
    %3046 = vmatpush1.xpose.msra.mxu0 0.0
    %3047 = vmatprep.subr.mxu0 0.0
    %3048 = vmatpush1.xpose.msra.mxu0 0.0
    %3049 = vmatprep.subr.mxu0 0.0
    %3050 = vmatpush1.xpose.msra.mxu0 0.0
    %3051 = vmatprep.subr.mxu0 0.0
    %3052 = vmatpush1.xpose.msra.mxu0 0.0
    %3053 = vmatprep.subr.mxu0 0.0
    %3054 = vmatpush1.xpose.msra.mxu0 0.0
    %3055 = vmatprep.subr.mxu0 0.0
    %3056 = vmatpush1.xpose.msra.mxu0 0.0
    %3057 = vmatprep.subr.mxu0 0.0
    %3058 = vmatpush1.xpose.msra.mxu0 0.0
    %3059 = vmatprep.subr.mxu0 0.0
    %3060 = vmatpush1.xpose.msra.mxu0 0.0
    %3061 = vmatprep.subr.mxu0 0.0
    %3062 = vmatpush1.xpose.msra.mxu0 0.0
    %3063 = vmatprep.subr.mxu0 0.0
    %3064 = vmatpush1.xpose.msra.mxu0 0.0
    %3065 = vmatprep.subr.mxu0 0.0
    %3066 = vmatpush1.xpose.msra.mxu0 0.0
    %3067 = vmatprep.subr.mxu0 0.0
    %3068 = vmatpush1.xpose.msra.mxu0 0.0
    %3069 = vmatprep.subr.mxu0 0.0
    %3070 = vmatpush1.xpose.msra.mxu0 0.0
    %3071 = vmatprep.subr.mxu0 0.0
    %3072 = vmatpush1.xpose.msra.mxu0 0.0
    %3073 = vmatprep.subr.mxu0 0.0
    %3074 = vmatpush1.xpose.msra.mxu0 0.0
    %3075 = vmatprep.subr.mxu0 0.0
    %3076 = vmatpush1.xpose.msra.mxu0 0.0
    %3077 = vmatprep.subr.mxu0 0.0
    %3078 = vmatpush1.xpose.msra.mxu0 0.0
    %3079 = vmatprep.mubr.f32.mxu0 0.0
    %3080 = vmatmul.mubr.f32.gmra.mrb[0].mxu0 %v3011
    %v3081 = vpop.f32.mrb[0].mxu0
    %v3082 = vadd.f32 0.0, %v3081
    %v3083 = vpop.f32.mrb[0].mxu0
    %3084 = vdwg.mxu0
    %v3085 = vsel %vm335, %v2917, 0
    %v3087 = vsel %vm335, %v2924, 0
    %3089 = vmatprep.subr.mxu0 0.0
    %3090 = vmatpush1.xpose.msra.mxu0 %v3087
    %3091 = vmatprep.subr.mxu0 0.0
    %3092 = vmatpush1.xpose.msra.mxu0 0.0
    %3093 = vmatprep.subr.mxu0 0.0
    %3094 = vmatpush1.xpose.msra.mxu0 0.0
    %3095 = vmatprep.subr.mxu0 0.0
    %3096 = vmatpush1.xpose.msra.mxu0 0.0
    %3097 = vmatprep.subr.mxu0 0.0
    %3098 = vmatpush1.xpose.msra.mxu0 0.0
    %3099 = vmatprep.subr.mxu0 0.0
    %3100 = vmatpush1.xpose.msra.mxu0 0.0
    %3101 = vmatprep.subr.mxu0 0.0
    %3102 = vmatpush1.xpose.msra.mxu0 0.0
    %3103 = vmatprep.subr.mxu0 0.0
    %3104 = vmatpush1.xpose.msra.mxu0 0.0
    %3105 = vmatprep.subr.mxu0 0.0
    %3106 = vmatpush1.xpose.msra.mxu0 0.0
    %3107 = vmatprep.subr.mxu0 0.0
    %3108 = vmatpush1.xpose.msra.mxu0 0.0
    %3109 = vmatprep.subr.mxu0 0.0
    %3110 = vmatpush1.xpose.msra.mxu0 0.0
    %3111 = vmatprep.subr.mxu0 0.0
    %3112 = vmatpush1.xpose.msra.mxu0 0.0
    %3113 = vmatprep.subr.mxu0 0.0
    %3114 = vmatpush1.xpose.msra.mxu0 0.0
    %3115 = vmatprep.subr.mxu0 0.0
    %3116 = vmatpush1.xpose.msra.mxu0 0.0
    %3117 = vmatprep.subr.mxu0 0.0
    %3118 = vmatpush1.xpose.msra.mxu0 0.0
    %3119 = vmatprep.subr.mxu0 0.0
    %3120 = vmatpush1.xpose.msra.mxu0 0.0
    %3121 = vmatprep.subr.mxu0 0.0
    %3122 = vmatpush1.xpose.msra.mxu0 0.0
    %3123 = vmatprep.subr.mxu0 0.0
    %3124 = vmatpush1.xpose.msra.mxu0 0.0
    %3125 = vmatprep.subr.mxu0 0.0
    %3126 = vmatpush1.xpose.msra.mxu0 0.0
    %3127 = vmatprep.subr.mxu0 0.0
    %3128 = vmatpush1.xpose.msra.mxu0 0.0
    %3129 = vmatprep.subr.mxu0 0.0
    %3130 = vmatpush1.xpose.msra.mxu0 0.0
    %3131 = vmatprep.subr.mxu0 0.0
    %3132 = vmatpush1.xpose.msra.mxu0 0.0
    %3133 = vmatprep.subr.mxu0 0.0
    %3134 = vmatpush1.xpose.msra.mxu0 0.0
    %3135 = vmatprep.subr.mxu0 0.0
    %3136 = vmatpush1.xpose.msra.mxu0 0.0
    %3137 = vmatprep.subr.mxu0 0.0
    %3138 = vmatpush1.xpose.msra.mxu0 0.0
    %3139 = vmatprep.subr.mxu0 0.0
    %3140 = vmatpush1.xpose.msra.mxu0 0.0
    %3141 = vmatprep.subr.mxu0 0.0
    %3142 = vmatpush1.xpose.msra.mxu0 0.0
    %3143 = vmatprep.subr.mxu0 0.0
    %3144 = vmatpush1.xpose.msra.mxu0 0.0
    %3145 = vmatprep.subr.mxu0 0.0
    %3146 = vmatpush1.xpose.msra.mxu0 0.0
    %3147 = vmatprep.subr.mxu0 0.0
    %3148 = vmatpush1.xpose.msra.mxu0 0.0
    %3149 = vmatprep.subr.mxu0 0.0
    %3150 = vmatpush1.xpose.msra.mxu0 0.0
    %3151 = vmatprep.subr.mxu0 0.0
    %3152 = vmatpush1.xpose.msra.mxu0 0.0
    %3153 = vmatprep.mubr.f32.mxu0 0.0
    %3154 = vmatmul.mubr.f32.gmra.mrb[0].mxu0 %v3085
    %v3155 = vpop.f32.mrb[0].mxu0
    %v3156 = vadd.f32 0.0, %v3155
    %v3157 = vpop.f32.mrb[0].mxu0
    %3158 = vdwg.mxu0
    %v3159 = vsel %vm335, %v2919, 0
    %v3161 = vsel %vm335, %v2926, 0
    %3163 = vmatprep.subr.mxu0 0.0
    %3164 = vmatpush1.xpose.msra.mxu0 %v3161
    %3165 = vmatprep.subr.mxu0 0.0
    %3166 = vmatpush1.xpose.msra.mxu0 0.0
    %3167 = vmatprep.subr.mxu0 0.0
    %3168 = vmatpush1.xpose.msra.mxu0 0.0
    %3169 = vmatprep.subr.mxu0 0.0
    %3170 = vmatpush1.xpose.msra.mxu0 0.0
    %3171 = vmatprep.subr.mxu0 0.0
    %3172 = vmatpush1.xpose.msra.mxu0 0.0
    %3173 = vmatprep.subr.mxu0 0.0
    %3174 = vmatpush1.xpose.msra.mxu0 0.0
    %3175 = vmatprep.subr.mxu0 0.0
    %3176 = vmatpush1.xpose.msra.mxu0 0.0
    %3177 = vmatprep.subr.mxu0 0.0
    %3178 = vmatpush1.xpose.msra.mxu0 0.0
    %3179 = vmatprep.subr.mxu0 0.0
    %3180 = vmatpush1.xpose.msra.mxu0 0.0
    %3181 = vmatprep.subr.mxu0 0.0
    %3182 = vmatpush1.xpose.msra.mxu0 0.0
    %3183 = vmatprep.subr.mxu0 0.0
    %3184 = vmatpush1.xpose.msra.mxu0 0.0
    %3185 = vmatprep.subr.mxu0 0.0
    %3186 = vmatpush1.xpose.msra.mxu0 0.0
    %3187 = vmatprep.subr.mxu0 0.0
    %3188 = vmatpush1.xpose.msra.mxu0 0.0
    %3189 = vmatprep.subr.mxu0 0.0
    %3190 = vmatpush1.xpose.msra.mxu0 0.0
    %3191 = vmatprep.subr.mxu0 0.0
    %3192 = vmatpush1.xpose.msra.mxu0 0.0
    %3193 = vmatprep.subr.mxu0 0.0
    %3194 = vmatpush1.xpose.msra.mxu0 0.0
    %3195 = vmatprep.subr.mxu0 0.0
    %3196 = vmatpush1.xpose.msra.mxu0 0.0
    %3197 = vmatprep.subr.mxu0 0.0
    %3198 = vmatpush1.xpose.msra.mxu0 0.0
    %3199 = vmatprep.subr.mxu0 0.0
    %3200 = vmatpush1.xpose.msra.mxu0 0.0
    %3201 = vmatprep.subr.mxu0 0.0
    %3202 = vmatpush1.xpose.msra.mxu0 0.0
    %3203 = vmatprep.subr.mxu0 0.0
    %3204 = vmatpush1.xpose.msra.mxu0 0.0
    %3205 = vmatprep.subr.mxu0 0.0
    %3206 = vmatpush1.xpose.msra.mxu0 0.0
    %3207 = vmatprep.subr.mxu0 0.0
    %3208 = vmatpush1.xpose.msra.mxu0 0.0
    %3209 = vmatprep.subr.mxu0 0.0
    %3210 = vmatpush1.xpose.msra.mxu0 0.0
    %3211 = vmatprep.subr.mxu0 0.0
    %3212 = vmatpush1.xpose.msra.mxu0 0.0
    %3213 = vmatprep.subr.mxu0 0.0
    %3214 = vmatpush1.xpose.msra.mxu0 0.0
    %3215 = vmatprep.subr.mxu0 0.0
    %3216 = vmatpush1.xpose.msra.mxu0 0.0
    %3217 = vmatprep.subr.mxu0 0.0
    %3218 = vmatpush1.xpose.msra.mxu0 0.0
    %3219 = vmatprep.subr.mxu0 0.0
    %3220 = vmatpush1.xpose.msra.mxu0 0.0
    %3221 = vmatprep.subr.mxu0 0.0
    %3222 = vmatpush1.xpose.msra.mxu0 0.0
    %3223 = vmatprep.subr.mxu0 0.0
    %3224 = vmatpush1.xpose.msra.mxu0 0.0
    %3225 = vmatprep.subr.mxu0 0.0
    %3226 = vmatpush1.xpose.msra.mxu0 0.0
    %3227 = vmatprep.mubr.f32.mxu0 0.0
    %3228 = vmatmul.mubr.f32.gmra.mrb[0].mxu0 %v3159
    %v3229 = vpop.f32.mrb[0].mxu0
    %v3230 = vadd.f32 0.0, %v3229
    %v3231 = vpop.f32.mrb[0].mxu0
    %3232 = vdwg.mxu0
    %v3233 = vsel %vm335, %v3008, -inf
    %v3234 = vsel %vm335, %v3082, -inf
    %v3235 = vsel %vm335, %v3156, -inf
    %v3236 = vsel %vm335, %v3230, -inf
    %v3237 = vmax.f32 %v3233, %v3234
    %v3238 = vmax.f32 %v3235, %v3236
    %v3239 = vmax.f32 %v3237, %v3238
    %v3240 = vsub.f32 %v3008, %v3239
    %v3241 = vsub.f32 %v3082, %v3239
    %v3242 = vsub.f32 %v3156, %v3239
    %v3243 = vsub.f32 %v3230, %v3239
    %v3244 = vmul.f32 %v3240, 1.442695
    %v3245 = vpow.pop %v3244
    %v3246 = vmul.f32 %v3241, 1.442695
    %v3247 = vpow.pop %v3246
    %v3248 = vmul.f32 %v3242, 1.442695
    %v3249 = vpow.pop %v3248
    %v3250 = vmul.f32 %v3243, 1.442695
    %v3251 = vpow.pop %v3250
    %v3252 = vsel %vm335, %v3245, 0.0
    %v3253 = vsel %vm335, %v3247, 0.0
    %v3254 = vadd.f32 %v3252, %v3253
    %v3255 = vsel %vm335, %v3249, 0.0
    %v3256 = vadd.f32 %v3254, %v3255
    %v3257 = vsel %vm335, %v3251, 0.0
    %v3258 = vadd.f32 %v3256, %v3257
    %v3259 = vrcp.pop %v3258
    %v3260 = vmul.f32 %v3245, %v3259
    %v3261 = vmul.f32 %v3247, %v3259
    %v3262 = vmul.f32 %v3249, %v3259
    %v3263 = vmul.f32 %v3251, %v3259
    %v3265 = vsel %vm335, %v3260, 0
    %3267 = vmatprep.subr.mxu0 0.0
    %3268 = vmatpush1.msra.mxu0 %v2252
    %3269 = vmatprep.subr.mxu0 0.0
    %3270 = vmatpush1.msra.mxu0 0.0
    %3271 = vmatprep.subr.mxu0 0.0
    %3272 = vmatpush1.msra.mxu0 0.0
    %3273 = vmatprep.subr.mxu0 0.0
    %3274 = vmatpush1.msra.mxu0 0.0
    %3275 = vmatprep.subr.mxu0 0.0
    %3276 = vmatpush1.msra.mxu0 0.0
    %3277 = vmatprep.subr.mxu0 0.0
    %3278 = vmatpush1.msra.mxu0 0.0
    %3279 = vmatprep.subr.mxu0 0.0
    %3280 = vmatpush1.msra.mxu0 0.0
    %3281 = vmatprep.subr.mxu0 0.0
    %3282 = vmatpush1.msra.mxu0 0.0
    %3283 = vmatprep.subr.mxu0 0.0
    %3284 = vmatpush1.msra.mxu0 0.0
    %3285 = vmatprep.subr.mxu0 0.0
    %3286 = vmatpush1.msra.mxu0 0.0
    %3287 = vmatprep.subr.mxu0 0.0
    %3288 = vmatpush1.msra.mxu0 0.0
    %3289 = vmatprep.subr.mxu0 0.0
    %3290 = vmatpush1.msra.mxu0 0.0
    %3291 = vmatprep.subr.mxu0 0.0
    %3292 = vmatpush1.msra.mxu0 0.0
    %3293 = vmatprep.subr.mxu0 0.0
    %3294 = vmatpush1.msra.mxu0 0.0
    %3295 = vmatprep.subr.mxu0 0.0
    %3296 = vmatpush1.msra.mxu0 0.0
    %3297 = vmatprep.subr.mxu0 0.0
    %3298 = vmatpush1.msra.mxu0 0.0
    %3299 = vmatprep.subr.mxu0 0.0
    %3300 = vmatpush1.msra.mxu0 0.0
    %3301 = vmatprep.subr.mxu0 0.0
    %3302 = vmatpush1.msra.mxu0 0.0
    %3303 = vmatprep.subr.mxu0 0.0
    %3304 = vmatpush1.msra.mxu0 0.0
    %3305 = vmatprep.subr.mxu0 0.0
    %3306 = vmatpush1.msra.mxu0 0.0
    %3307 = vmatprep.subr.mxu0 0.0
    %3308 = vmatpush1.msra.mxu0 0.0
    %3309 = vmatprep.subr.mxu0 0.0
    %3310 = vmatpush1.msra.mxu0 0.0
    %3311 = vmatprep.subr.mxu0 0.0
    %3312 = vmatpush1.msra.mxu0 0.0
    %3313 = vmatprep.subr.mxu0 0.0
    %3314 = vmatpush1.msra.mxu0 0.0
    %3315 = vmatprep.subr.mxu0 0.0
    %3316 = vmatpush1.msra.mxu0 0.0
    %3317 = vmatprep.subr.mxu0 0.0
    %3318 = vmatpush1.msra.mxu0 0.0
    %3319 = vmatprep.subr.mxu0 0.0
    %3320 = vmatpush1.msra.mxu0 0.0
    %3321 = vmatprep.subr.mxu0 0.0
    %3322 = vmatpush1.msra.mxu0 0.0
    %3323 = vmatprep.subr.mxu0 0.0
    %3324 = vmatpush1.msra.mxu0 0.0
    %3325 = vmatprep.subr.mxu0 0.0
    %3326 = vmatpush1.msra.mxu0 0.0
    %3327 = vmatprep.subr.mxu0 0.0
    %3328 = vmatpush1.msra.mxu0 0.0
    %3329 = vmatprep.subr.mxu0 0.0
    %3330 = vmatpush1.msra.mxu0 0.0
    %3331 = vmatprep.mubr.f32.mxu0 0.0
    %3332 = vmatmul.mubr.f32.gmra.mrb[0].mxu0 %v3265
    %v3333 = vpop.f32.mrb[0].mxu0
    %v3334 = vadd.f32 0.0, %v3333
    %v3335 = vpop.f32.mrb[0].mxu0
    %3336 = vdwg.mxu0
    %v3338 = vsel %vm335, %v3261, 0
    %3340 = vmatprep.subr.mxu0 0.0
    %3341 = vmatpush1.msra.mxu0 %v2929
    %3342 = vmatprep.subr.mxu0 0.0
    %3343 = vmatpush1.msra.mxu0 0.0
    %3344 = vmatprep.subr.mxu0 0.0
    %3345 = vmatpush1.msra.mxu0 0.0
    %3346 = vmatprep.subr.mxu0 0.0
    %3347 = vmatpush1.msra.mxu0 0.0
    %3348 = vmatprep.subr.mxu0 0.0
    %3349 = vmatpush1.msra.mxu0 0.0
    %3350 = vmatprep.subr.mxu0 0.0
    %3351 = vmatpush1.msra.mxu0 0.0
    %3352 = vmatprep.subr.mxu0 0.0
    %3353 = vmatpush1.msra.mxu0 0.0
    %3354 = vmatprep.subr.mxu0 0.0
    %3355 = vmatpush1.msra.mxu0 0.0
    %3356 = vmatprep.subr.mxu0 0.0
    %3357 = vmatpush1.msra.mxu0 0.0
    %3358 = vmatprep.subr.mxu0 0.0
    %3359 = vmatpush1.msra.mxu0 0.0
    %3360 = vmatprep.subr.mxu0 0.0
    %3361 = vmatpush1.msra.mxu0 0.0
    %3362 = vmatprep.subr.mxu0 0.0
    %3363 = vmatpush1.msra.mxu0 0.0
    %3364 = vmatprep.subr.mxu0 0.0
    %3365 = vmatpush1.msra.mxu0 0.0
    %3366 = vmatprep.subr.mxu0 0.0
    %3367 = vmatpush1.msra.mxu0 0.0
    %3368 = vmatprep.subr.mxu0 0.0
    %3369 = vmatpush1.msra.mxu0 0.0
    %3370 = vmatprep.subr.mxu0 0.0
    %3371 = vmatpush1.msra.mxu0 0.0
    %3372 = vmatprep.subr.mxu0 0.0
    %3373 = vmatpush1.msra.mxu0 0.0
    %3374 = vmatprep.subr.mxu0 0.0
    %3375 = vmatpush1.msra.mxu0 0.0
    %3376 = vmatprep.subr.mxu0 0.0
    %3377 = vmatpush1.msra.mxu0 0.0
    %3378 = vmatprep.subr.mxu0 0.0
    %3379 = vmatpush1.msra.mxu0 0.0
    %3380 = vmatprep.subr.mxu0 0.0
    %3381 = vmatpush1.msra.mxu0 0.0
    %3382 = vmatprep.subr.mxu0 0.0
    %3383 = vmatpush1.msra.mxu0 0.0
    %3384 = vmatprep.subr.mxu0 0.0
    %3385 = vmatpush1.msra.mxu0 0.0
    %3386 = vmatprep.subr.mxu0 0.0
    %3387 = vmatpush1.msra.mxu0 0.0
    %3388 = vmatprep.subr.mxu0 0.0
    %3389 = vmatpush1.msra.mxu0 0.0
    %3390 = vmatprep.subr.mxu0 0.0
    %3391 = vmatpush1.msra.mxu0 0.0
    %3392 = vmatprep.subr.mxu0 0.0
    %3393 = vmatpush1.msra.mxu0 0.0
    %3394 = vmatprep.subr.mxu0 0.0
    %3395 = vmatpush1.msra.mxu0 0.0
    %3396 = vmatprep.subr.mxu0 0.0
    %3397 = vmatpush1.msra.mxu0 0.0
    %3398 = vmatprep.subr.mxu0 0.0
    %3399 = vmatpush1.msra.mxu0 0.0
    %3400 = vmatprep.subr.mxu0 0.0
    %3401 = vmatpush1.msra.mxu0 0.0
    %3402 = vmatprep.subr.mxu0 0.0
    %3403 = vmatpush1.msra.mxu0 0.0
    %3404 = vmatprep.mubr.f32.mxu0 0.0
    %3405 = vmatmul.mubr.f32.gmra.mrb[0].mxu0 %v3338
    %v3406 = vpop.f32.mrb[0].mxu0
    %v3407 = vadd.f32 0.0, %v3406
    %v3408 = vpop.f32.mrb[0].mxu0
    %3409 = vdwg.mxu0
    %v3411 = vsel %vm335, %v3262, 0
    %3413 = vmatprep.subr.mxu0 0.0
    %3414 = vmatpush1.msra.mxu0 %v2932
    %3415 = vmatprep.subr.mxu0 0.0
    %3416 = vmatpush1.msra.mxu0 0.0
    %3417 = vmatprep.subr.mxu0 0.0
    %3418 = vmatpush1.msra.mxu0 0.0
    %3419 = vmatprep.subr.mxu0 0.0
    %3420 = vmatpush1.msra.mxu0 0.0
    %3421 = vmatprep.subr.mxu0 0.0
    %3422 = vmatpush1.msra.mxu0 0.0
    %3423 = vmatprep.subr.mxu0 0.0
    %3424 = vmatpush1.msra.mxu0 0.0
    %3425 = vmatprep.subr.mxu0 0.0
    %3426 = vmatpush1.msra.mxu0 0.0
    %3427 = vmatprep.subr.mxu0 0.0
    %3428 = vmatpush1.msra.mxu0 0.0
    %3429 = vmatprep.subr.mxu0 0.0
    %3430 = vmatpush1.msra.mxu0 0.0
    %3431 = vmatprep.subr.mxu0 0.0
    %3432 = vmatpush1.msra.mxu0 0.0
    %3433 = vmatprep.subr.mxu0 0.0
    %3434 = vmatpush1.msra.mxu0 0.0
    %3435 = vmatprep.subr.mxu0 0.0
    %3436 = vmatpush1.msra.mxu0 0.0
    %3437 = vmatprep.subr.mxu0 0.0
    %3438 = vmatpush1.msra.mxu0 0.0
    %3439 = vmatprep.subr.mxu0 0.0
    %3440 = vmatpush1.msra.mxu0 0.0
    %3441 = vmatprep.subr.mxu0 0.0
    %3442 = vmatpush1.msra.mxu0 0.0
    %3443 = vmatprep.subr.mxu0 0.0
    %3444 = vmatpush1.msra.mxu0 0.0
    %3445 = vmatprep.subr.mxu0 0.0
    %3446 = vmatpush1.msra.mxu0 0.0
    %3447 = vmatprep.subr.mxu0 0.0
    %3448 = vmatpush1.msra.mxu0 0.0
    %3449 = vmatprep.subr.mxu0 0.0
    %3450 = vmatpush1.msra.mxu0 0.0
    %3451 = vmatprep.subr.mxu0 0.0
    %3452 = vmatpush1.msra.mxu0 0.0
    %3453 = vmatprep.subr.mxu0 0.0
    %3454 = vmatpush1.msra.mxu0 0.0
    %3455 = vmatprep.subr.mxu0 0.0
    %3456 = vmatpush1.msra.mxu0 0.0
    %3457 = vmatprep.subr.mxu0 0.0
    %3458 = vmatpush1.msra.mxu0 0.0
    %3459 = vmatprep.subr.mxu0 0.0
    %3460 = vmatpush1.msra.mxu0 0.0
    %3461 = vmatprep.subr.mxu0 0.0
    %3462 = vmatpush1.msra.mxu0 0.0
    %3463 = vmatprep.subr.mxu0 0.0
    %3464 = vmatpush1.msra.mxu0 0.0
    %3465 = vmatprep.subr.mxu0 0.0
    %3466 = vmatpush1.msra.mxu0 0.0
    %3467 = vmatprep.subr.mxu0 0.0
    %3468 = vmatpush1.msra.mxu0 0.0
    %3469 = vmatprep.subr.mxu0 0.0
    %3470 = vmatpush1.msra.mxu0 0.0
    %3471 = vmatprep.subr.mxu0 0.0
    %3472 = vmatpush1.msra.mxu0 0.0
    %3473 = vmatprep.subr.mxu0 0.0
    %3474 = vmatpush1.msra.mxu0 0.0
    %3475 = vmatprep.subr.mxu0 0.0
    %3476 = vmatpush1.msra.mxu0 0.0
    %3477 = vmatprep.mubr.f32.mxu0 0.0
    %3478 = vmatmul.mubr.f32.gmra.mrb[0].mxu0 %v3411
    %v3479 = vpop.f32.mrb[0].mxu0
    %v3480 = vadd.f32 0.0, %v3479
    %v3481 = vpop.f32.mrb[0].mxu0
    %3482 = vdwg.mxu0
    %v3484 = vsel %vm335, %v3263, 0
    %3486 = vmatprep.subr.mxu0 0.0
    %3487 = vmatpush1.msra.mxu0 %v2935
    %3488 = vmatprep.subr.mxu0 0.0
    %3489 = vmatpush1.msra.mxu0 0.0
    %3490 = vmatprep.subr.mxu0 0.0
    %3491 = vmatpush1.msra.mxu0 0.0
    %3492 = vmatprep.subr.mxu0 0.0
    %3493 = vmatpush1.msra.mxu0 0.0
    %3494 = vmatprep.subr.mxu0 0.0
    %3495 = vmatpush1.msra.mxu0 0.0
    %3496 = vmatprep.subr.mxu0 0.0
    %3497 = vmatpush1.msra.mxu0 0.0
    %3498 = vmatprep.subr.mxu0 0.0
    %3499 = vmatpush1.msra.mxu0 0.0
    %3500 = vmatprep.subr.mxu0 0.0
    %3501 = vmatpush1.msra.mxu0 0.0
    %3502 = vmatprep.subr.mxu0 0.0
    %3503 = vmatpush1.msra.mxu0 0.0
    %3504 = vmatprep.subr.mxu0 0.0
    %3505 = vmatpush1.msra.mxu0 0.0
    %3506 = vmatprep.subr.mxu0 0.0
    %3507 = vmatpush1.msra.mxu0 0.0
    %3508 = vmatprep.subr.mxu0 0.0
    %3509 = vmatpush1.msra.mxu0 0.0
    %3510 = vmatprep.subr.mxu0 0.0
    %3511 = vmatpush1.msra.mxu0 0.0
    %3512 = vmatprep.subr.mxu0 0.0
    %3513 = vmatpush1.msra.mxu0 0.0
    %3514 = vmatprep.subr.mxu0 0.0
    %3515 = vmatpush1.msra.mxu0 0.0
    %3516 = vmatprep.subr.mxu0 0.0
    %3517 = vmatpush1.msra.mxu0 0.0
    %3518 = vmatprep.subr.mxu0 0.0
    %3519 = vmatpush1.msra.mxu0 0.0
    %3520 = vmatprep.subr.mxu0 0.0
    %3521 = vmatpush1.msra.mxu0 0.0
    %3522 = vmatprep.subr.mxu0 0.0
    %3523 = vmatpush1.msra.mxu0 0.0
    %3524 = vmatprep.subr.mxu0 0.0
    %3525 = vmatpush1.msra.mxu0 0.0
    %3526 = vmatprep.subr.mxu0 0.0
    %3527 = vmatpush1.msra.mxu0 0.0
    %3528 = vmatprep.subr.mxu0 0.0
    %3529 = vmatpush1.msra.mxu0 0.0
    %3530 = vmatprep.subr.mxu0 0.0
    %3531 = vmatpush1.msra.mxu0 0.0
    %3532 = vmatprep.subr.mxu0 0.0
    %3533 = vmatpush1.msra.mxu0 0.0
    %3534 = vmatprep.subr.mxu0 0.0
    %3535 = vmatpush1.msra.mxu0 0.0
    %3536 = vmatprep.subr.mxu0 0.0
    %3537 = vmatpush1.msra.mxu0 0.0
    %3538 = vmatprep.subr.mxu0 0.0
    %3539 = vmatpush1.msra.mxu0 0.0
    %3540 = vmatprep.subr.mxu0 0.0
    %3541 = vmatpush1.msra.mxu0 0.0
    %3542 = vmatprep.subr.mxu0 0.0
    %3543 = vmatpush1.msra.mxu0 0.0
    %3544 = vmatprep.subr.mxu0 0.0
    %3545 = vmatpush1.msra.mxu0 0.0
    %3546 = vmatprep.subr.mxu0 0.0
    %3547 = vmatpush1.msra.mxu0 0.0
    %3548 = vmatprep.subr.mxu0 0.0
    %3549 = vmatpush1.msra.mxu0 0.0
    %3550 = vmatprep.mubr.f32.mxu0 0.0
    %3551 = vmatmul.mubr.f32.gmra.mrb[0].mxu0 %v3484
    %v3552 = vpop.f32.mrb[0].mxu0
    %v3553 = vadd.f32 0.0, %v3552
    %v3554 = vpop.f32.mrb[0].mxu0
    %3555 = vdwg.mxu0
    %3557 = vrot.lane.b32.xlu0 %v3407, 8
    %v3558 = vpop.permute.xlu0 %3557
    %3561 = vrot.lane.b32.xlu0 %v3480, 16
    %v3562 = vpop.permute.xlu0 %3561
    %3565 = vrot.lane.b32.xlu0 %v3553, 24
    %v3566 = vpop.permute.xlu0 %3565
    %v3568 = vsel %vm335, %v3334, %v3558
    %v3569 = vsel %vm968, %v3568, %v3562
    %v3570 = vsel %vm970, %v3569, %v3566
    %v3571 = vlaneseq
    %v3572 = vshrl.u32 %v3571, 7
    %v3573 = vsub.s32 3, %v3572
    %v3574 = vrot.slane %v2006, %v3573
    %v3576 = vsel %vm69, %v2912, 0
    %v3579 = vsel %vm69, %v3570, 0
    %3581 = vmatprep.subr.mxu0 0.0
    %3582 = vmatpush1.msra.mxu0 %v2001
    %3583 = vmatprep.subr.mxu0 0.0
    %3584 = vmatpush1.msra.mxu0 %v2002
    %3585 = vmatprep.subr.mxu0 0.0
    %3586 = vmatpush1.msra.mxu0 %v2003
    %3587 = vmatprep.subr.mxu0 0.0
    %3588 = vmatpush1.msra.mxu0 %v2004
    %3589 = vmatprep.subr.mxu0 0.0
    %3590 = vmatpush1.msra.mxu0 0.0
    %3591 = vmatprep.subr.mxu0 0.0
    %3592 = vmatpush1.msra.mxu0 0.0
    %3593 = vmatprep.subr.mxu0 0.0
    %3594 = vmatpush1.msra.mxu0 0.0
    %3595 = vmatprep.subr.mxu0 0.0
    %3596 = vmatpush1.msra.mxu0 0.0
    %3597 = vmatprep.subr.mxu0 0.0
    %3598 = vmatpush1.msra.mxu0 0.0
    %3599 = vmatprep.subr.mxu0 0.0
    %3600 = vmatpush1.msra.mxu0 0.0
    %3601 = vmatprep.subr.mxu0 0.0
    %3602 = vmatpush1.msra.mxu0 0.0
    %3603 = vmatprep.subr.mxu0 0.0
    %3604 = vmatpush1.msra.mxu0 0.0
    %3605 = vmatprep.subr.mxu0 0.0
    %3606 = vmatpush1.msra.mxu0 0.0
    %3607 = vmatprep.subr.mxu0 0.0
    %3608 = vmatpush1.msra.mxu0 0.0
    %3609 = vmatprep.subr.mxu0 0.0
    %3610 = vmatpush1.msra.mxu0 0.0
    %3611 = vmatprep.subr.mxu0 0.0
    %3612 = vmatpush1.msra.mxu0 0.0
    %3613 = vmatprep.subr.mxu0 0.0
    %3614 = vmatpush1.msra.mxu0 0.0
    %3615 = vmatprep.subr.mxu0 0.0
    %3616 = vmatpush1.msra.mxu0 0.0
    %3617 = vmatprep.subr.mxu0 0.0
    %3618 = vmatpush1.msra.mxu0 0.0
    %3619 = vmatprep.subr.mxu0 0.0
    %3620 = vmatpush1.msra.mxu0 0.0
    %3621 = vmatprep.subr.mxu0 0.0
    %3622 = vmatpush1.msra.mxu0 0.0
    %3623 = vmatprep.subr.mxu0 0.0
    %3624 = vmatpush1.msra.mxu0 0.0
    %3625 = vmatprep.subr.mxu0 0.0
    %3626 = vmatpush1.msra.mxu0 0.0
    %3627 = vmatprep.subr.mxu0 0.0
    %3628 = vmatpush1.msra.mxu0 0.0
    %3629 = vmatprep.subr.mxu0 0.0
    %3630 = vmatpush1.msra.mxu0 0.0
    %3631 = vmatprep.subr.mxu0 0.0
    %3632 = vmatpush1.msra.mxu0 0.0
    %3633 = vmatprep.subr.mxu0 0.0
    %3634 = vmatpush1.msra.mxu0 0.0
    %3635 = vmatprep.subr.mxu0 0.0
    %3636 = vmatpush1.msra.mxu0 0.0
    %3637 = vmatprep.subr.mxu0 0.0
    %3638 = vmatpush1.msra.mxu0 0.0
    %3639 = vmatprep.subr.mxu0 0.0
    %3640 = vmatpush1.msra.mxu0 0.0
    %3641 = vmatprep.subr.mxu0 0.0
    %3642 = vmatpush1.msra.mxu0 0.0
    %3643 = vmatprep.subr.mxu0 0.0
    %3644 = vmatpush1.msra.mxu0 0.0
    %3645 = vmatprep.mubr.f32.mxu0 0.0
    %3646 = vmatmul.mubr.f32.gmra.mrb[0].mxu0 %v3576
    %v3647 = vpop.f32.mrb[0].mxu0
    %v3648 = vadd.f32 %v3574, %v3647
    %v3649 = vpop.f32.mrb[0].mxu0
    %3650 = vmatprep.mubr.f32.mxu0 0.0
    %3651 = vmatmul.mubr.f32.gmra.mrb[0].mxu0 %v3579
    %v3652 = vpop.f32.mrb[0].mxu0
    %v3653 = vadd.f32 %v3574, %v3652
    %v3654 = vpop.f32.mrb[0].mxu0
    %3655 = vdwg.mxu0
    %v3656 = vadd.f32 %v3648, %v1983
    %v3657 = vadd.f32 %v3653, %v1984
    %v3658 = vsel %vm69, %v3656, 0.0
    %3659 = vadd.xlane.f32.xlu0 %v3658
    %v3660 = vpop.xlane.xlu0 %3659
    %v3661 = vsel %vm69, %v3657, 0.0
    %3662 = vadd.xlane.f32.xlu0 %v3661
    %v3663 = vpop.xlane.xlu0 %3662
    %v3664 = vmul.f32 %v3660, %v1723
    %v3665 = vmul.f32 %v3663, %v1723
    %v3666 = vsub.f32 %v3656, %v3664
    %v3667 = vsub.f32 %v3657, %v3665
    %v3668 = vmul.f32 %v3666, %v3666
    %v3669 = vmul.f32 %v3667, %v3667
    %v3670 = vsel %vm69, %v3668, 0.0
    %3671 = vadd.xlane.f32.xlu0 %v3670
    %v3672 = vpop.xlane.xlu0 %3671
    %v3673 = vsel %vm69, %v3669, 0.0
    %3674 = vadd.xlane.f32.xlu0 %v3673
    %v3675 = vpop.xlane.xlu0 %3674
    %v3676 = vmul.f32 %v3672, %v1723
    %v3677 = vmul.f32 %v3675, %v1723
    %v3678 = vadd.f32 %v3676, 1e-05
    %v3679 = vadd.f32 %v3677, 1e-05
    %v3680 = vrsqrt.pop %v3678
    %v3681 = vrsqrt.pop %v3679
    %v3682 = vmul.f32 %v3666, %v3680
    %v3683 = vmul.f32 %v3667, %v3681
    %v3684 = vlaneseq
    %v3685 = vshrl.u32 %v3684, 7
    %v3686 = vsub.s32 4, %v3685
    %v3687 = vrot.slane %v2006, %v3686
    %v3688 = vmul.f32 %v3682, %v3687
    %v3689 = vmul.f32 %v3683, %v3687
    %v3690 = vlaneseq
    %v3691 = vshrl.u32 %v3690, 7
    %v3692 = vsub.s32 5, %v3691
    %v3693 = vrot.slane %v2006, %v3692
    %v3694 = vadd.f32 %v3688, %v3693
    %v3695 = vadd.f32 %v3689, %v3693
    %s3696 = scalar_lea.vmem %s2, 32
    %v3697 = vld [vmem:[%s3696] sm:$0xff]
    %v3698 = vld [vmem:[%s3696 + $0x8] sm:$0xff]
    %v3699 = vld [vmem:[%s3696 + $0x10] sm:$0xff]
    %v3700 = vld [vmem:[%s3696 + $0x18] sm:$0xff]
    %v3702 = vlaneseq
    %v3703 = vshrl.u32 %v3702, 7
    %v3704 = vsub.s32 0, %v3703
    %v3705 = vrot.slane %v2009, %v3704
    %v3708 = vsel %vm69, %v3694, 0
    %v3711 = vsel %vm69, %v3695, 0
    %3713 = vmatprep.subr.mxu0 0.0
    %3714 = vmatpush1.msra.mxu0 %v3697
    %3715 = vmatprep.subr.mxu0 0.0
    %3716 = vmatpush1.msra.mxu0 %v3698
    %3717 = vmatprep.subr.mxu0 0.0
    %3718 = vmatpush1.msra.mxu0 %v3699
    %3719 = vmatprep.subr.mxu0 0.0
    %3720 = vmatpush1.msra.mxu0 %v3700
    %3721 = vmatprep.subr.mxu0 0.0
    %3722 = vmatpush1.msra.mxu0 0.0
    %3723 = vmatprep.subr.mxu0 0.0
    %3724 = vmatpush1.msra.mxu0 0.0
    %3725 = vmatprep.subr.mxu0 0.0
    %3726 = vmatpush1.msra.mxu0 0.0
    %3727 = vmatprep.subr.mxu0 0.0
    %3728 = vmatpush1.msra.mxu0 0.0
    %3729 = vmatprep.subr.mxu0 0.0
    %3730 = vmatpush1.msra.mxu0 0.0
    %3731 = vmatprep.subr.mxu0 0.0
    %3732 = vmatpush1.msra.mxu0 0.0
    %3733 = vmatprep.subr.mxu0 0.0
    %3734 = vmatpush1.msra.mxu0 0.0
    %3735 = vmatprep.subr.mxu0 0.0
    %3736 = vmatpush1.msra.mxu0 0.0
    %3737 = vmatprep.subr.mxu0 0.0
    %3738 = vmatpush1.msra.mxu0 0.0
    %3739 = vmatprep.subr.mxu0 0.0
    %3740 = vmatpush1.msra.mxu0 0.0
    %3741 = vmatprep.subr.mxu0 0.0
    %3742 = vmatpush1.msra.mxu0 0.0
    %3743 = vmatprep.subr.mxu0 0.0
    %3744 = vmatpush1.msra.mxu0 0.0
    %3745 = vmatprep.subr.mxu0 0.0
    %3746 = vmatpush1.msra.mxu0 0.0
    %3747 = vmatprep.subr.mxu0 0.0
    %3748 = vmatpush1.msra.mxu0 0.0
    %3749 = vmatprep.subr.mxu0 0.0
    %3750 = vmatpush1.msra.mxu0 0.0
    %3751 = vmatprep.subr.mxu0 0.0
    %3752 = vmatpush1.msra.mxu0 0.0
    %3753 = vmatprep.subr.mxu0 0.0
    %3754 = vmatpush1.msra.mxu0 0.0
    %3755 = vmatprep.subr.mxu0 0.0
    %3756 = vmatpush1.msra.mxu0 0.0
    %3757 = vmatprep.subr.mxu0 0.0
    %3758 = vmatpush1.msra.mxu0 0.0
    %3759 = vmatprep.subr.mxu0 0.0
    %3760 = vmatpush1.msra.mxu0 0.0
    %3761 = vmatprep.subr.mxu0 0.0
    %3762 = vmatpush1.msra.mxu0 0.0
    %3763 = vmatprep.subr.mxu0 0.0
    %3764 = vmatpush1.msra.mxu0 0.0
    %3765 = vmatprep.subr.mxu0 0.0
    %3766 = vmatpush1.msra.mxu0 0.0
    %3767 = vmatprep.subr.mxu0 0.0
    %3768 = vmatpush1.msra.mxu0 0.0
    %3769 = vmatprep.subr.mxu0 0.0
    %3770 = vmatpush1.msra.mxu0 0.0
    %3771 = vmatprep.subr.mxu0 0.0
    %3772 = vmatpush1.msra.mxu0 0.0
    %3773 = vmatprep.subr.mxu0 0.0
    %3774 = vmatpush1.msra.mxu0 0.0
    %3775 = vmatprep.subr.mxu0 0.0
    %3776 = vmatpush1.msra.mxu0 0.0
    %3777 = vmatprep.mubr.f32.mxu0 0.0
    %3778 = vmatmul.mubr.f32.gmra.mrb[0].mxu0 %v3708
    %v3779 = vpop.f32.mrb[0].mxu0
    %v3780 = vadd.f32 %v3705, %v3779
    %v3781 = vpop.f32.mrb[0].mxu0
    %3782 = vmatprep.mubr.f32.mxu0 0.0
    %3783 = vmatmul.mubr.f32.gmra.mrb[0].mxu0 %v3711
    %v3784 = vpop.f32.mrb[0].mxu0
    %v3785 = vadd.f32 %v3705, %v3784
    %v3786 = vpop.f32.mrb[0].mxu0
    %3787 = vdwg.mxu0
    %v3788 = vmax.f32 %v3780, 0.0
    %v3789 = vmax.f32 %v3785, 0.0
    %s3790 = scalar_lea.vmem %s3, 64
    %v3791 = vld [vmem:[%s3790] sm:$0xff]
    %v3792 = vld [vmem:[%s3790 + $0x8] sm:$0xff]
    %v3793 = vld [vmem:[%s3790 + $0x10] sm:$0xff]
    %v3794 = vld [vmem:[%s3790 + $0x18] sm:$0xff]
    %v3795 = vld [vmem:[%s3790 + $0x20] sm:$0xff]
    %v3796 = vld [vmem:[%s3790 + $0x28] sm:$0xff]
    %v3797 = vld [vmem:[%s3790 + $0x30] sm:$0xff]
    %v3798 = vld [vmem:[%s3790 + $0x38] sm:$0xff]
    %v3799 = vlaneseq
    %v3800 = vshrl.u32 %v3799, 7
    %v3801 = vsub.s32 6, %v3800
    %v3802 = vrot.slane %v2006, %v3801
    %v3804 = vsel %vm1861, %v3788, 0
    %v3807 = vsel %vm1861, %v3789, 0
    %3809 = vmatprep.subr.mxu0 0.0
    %3810 = vmatpush1.msra.mxu0 %v3791
    %3811 = vmatprep.subr.mxu0 0.0
    %3812 = vmatpush1.msra.mxu0 %v3792
    %3813 = vmatprep.subr.mxu0 0.0
    %3814 = vmatpush1.msra.mxu0 %v3793
    %3815 = vmatprep.subr.mxu0 0.0
    %3816 = vmatpush1.msra.mxu0 %v3794
    %3817 = vmatprep.subr.mxu0 0.0
    %3818 = vmatpush1.msra.mxu0 %v3795
    %3819 = vmatprep.subr.mxu0 0.0
    %3820 = vmatpush1.msra.mxu0 %v3796
    %3821 = vmatprep.subr.mxu0 0.0
    %3822 = vmatpush1.msra.mxu0 %v3797
    %3823 = vmatprep.subr.mxu0 0.0
    %3824 = vmatpush1.msra.mxu0 %v3798
    %3825 = vmatprep.subr.mxu0 0.0
    %3826 = vmatpush1.msra.mxu0 0.0
    %3827 = vmatprep.subr.mxu0 0.0
    %3828 = vmatpush1.msra.mxu0 0.0
    %3829 = vmatprep.subr.mxu0 0.0
    %3830 = vmatpush1.msra.mxu0 0.0
    %3831 = vmatprep.subr.mxu0 0.0
    %3832 = vmatpush1.msra.mxu0 0.0
    %3833 = vmatprep.subr.mxu0 0.0
    %3834 = vmatpush1.msra.mxu0 0.0
    %3835 = vmatprep.subr.mxu0 0.0
    %3836 = vmatpush1.msra.mxu0 0.0
    %3837 = vmatprep.subr.mxu0 0.0
    %3838 = vmatpush1.msra.mxu0 0.0
    %3839 = vmatprep.subr.mxu0 0.0
    %3840 = vmatpush1.msra.mxu0 0.0
    %3841 = vmatprep.subr.mxu0 0.0
    %3842 = vmatpush1.msra.mxu0 0.0
    %3843 = vmatprep.subr.mxu0 0.0
    %3844 = vmatpush1.msra.mxu0 0.0
    %3845 = vmatprep.subr.mxu0 0.0
    %3846 = vmatpush1.msra.mxu0 0.0
    %3847 = vmatprep.subr.mxu0 0.0
    %3848 = vmatpush1.msra.mxu0 0.0
    %3849 = vmatprep.subr.mxu0 0.0
    %3850 = vmatpush1.msra.mxu0 0.0
    %3851 = vmatprep.subr.mxu0 0.0
    %3852 = vmatpush1.msra.mxu0 0.0
    %3853 = vmatprep.subr.mxu0 0.0
    %3854 = vmatpush1.msra.mxu0 0.0
    %3855 = vmatprep.subr.mxu0 0.0
    %3856 = vmatpush1.msra.mxu0 0.0
    %3857 = vmatprep.subr.mxu0 0.0
    %3858 = vmatpush1.msra.mxu0 0.0
    %3859 = vmatprep.subr.mxu0 0.0
    %3860 = vmatpush1.msra.mxu0 0.0
    %3861 = vmatprep.subr.mxu0 0.0
    %3862 = vmatpush1.msra.mxu0 0.0
    %3863 = vmatprep.subr.mxu0 0.0
    %3864 = vmatpush1.msra.mxu0 0.0
    %3865 = vmatprep.subr.mxu0 0.0
    %3866 = vmatpush1.msra.mxu0 0.0
    %3867 = vmatprep.subr.mxu0 0.0
    %3868 = vmatpush1.msra.mxu0 0.0
    %3869 = vmatprep.subr.mxu0 0.0
    %3870 = vmatpush1.msra.mxu0 0.0
    %3871 = vmatprep.subr.mxu0 0.0
    %3872 = vmatpush1.msra.mxu0 0.0
    %3873 = vmatprep.mubr.f32.mxu0 0.0
    %3874 = vmatmul.mubr.f32.gmra.mrb[0].mxu0 %v3804
    %v3875 = vpop.f32.mrb[0].mxu0
    %v3876 = vadd.f32 %v3802, %v3875
    %v3877 = vpop.f32.mrb[0].mxu0
    %3878 = vmatprep.mubr.f32.mxu0 0.0
    %3879 = vmatmul.mubr.f32.gmra.mrb[0].mxu0 %v3807
    %v3880 = vpop.f32.mrb[0].mxu0
    %v3881 = vadd.f32 %v3802, %v3880
    %v3882 = vpop.f32.mrb[0].mxu0
    %3883 = vdwg.mxu0
    %v3884 = vadd.f32 %v3876, %v3694
    %v3885 = vadd.f32 %v3881, %v3695
    %v3886 = vsel %vm69, %v3884, 0.0
    %3887 = vadd.xlane.f32.xlu0 %v3886
    %v3888 = vpop.xlane.xlu0 %3887
    %v3889 = vsel %vm69, %v3885, 0.0
    %3890 = vadd.xlane.f32.xlu0 %v3889
    %v3891 = vpop.xlane.xlu0 %3890
    %v3892 = vmul.f32 %v3888, %v1723
    %v3893 = vmul.f32 %v3891, %v1723
    %v3894 = vsub.f32 %v3884, %v3892
    %v3895 = vsub.f32 %v3885, %v3893
    %v3896 = vmul.f32 %v3894, %v3894
    %v3897 = vmul.f32 %v3895, %v3895
    %v3898 = vsel %vm69, %v3896, 0.0
    %3899 = vadd.xlane.f32.xlu0 %v3898
    %v3900 = vpop.xlane.xlu0 %3899
    %v3901 = vsel %vm69, %v3897, 0.0
    %3902 = vadd.xlane.f32.xlu0 %v3901
    %v3903 = vpop.xlane.xlu0 %3902
    %v3904 = vmul.f32 %v3900, %v1723
    %v3905 = vmul.f32 %v3903, %v1723
    %v3906 = vadd.f32 %v3904, 1e-05
    %v3907 = vadd.f32 %v3905, 1e-05
    %v3908 = vrsqrt.pop %v3906
    %v3909 = vrsqrt.pop %v3907
    %v3910 = vmul.f32 %v3894, %v3908
    %v3911 = vmul.f32 %v3895, %v3909
    %v3912 = vlaneseq
    %v3913 = vshrl.u32 %v3912, 7
    %v3914 = vsub.s32 7, %v3913
    %v3915 = vrot.slane %v2006, %v3914
    %v3916 = vmul.f32 %v3910, %v3915
    %v3917 = vmul.f32 %v3911, %v3915
    %v3918 = vlaneseq
    %v3919 = vshrl.u32 %v3918, 7
    %v3920 = vsub.s32 0, %v3919
    %v3921 = vrot.slane %v2007, %v3920
    %v3922 = vadd.f32 %v3916, %v3921
    %v3923 = vadd.f32 %v3917, %v3921
    %v3924 = vadd.f32 %v3922, %v1983
    %v3925 = vadd.f32 %v3923, %v1984
    %v3926 = vld [vmem:[%s6] sm:$0x3]
    %v3927 = vsel %vm69, %v3924, 0.0
    %3928 = vadd.xlane.f32.xlu0 %v3927
    %v3929 = vpop.xlane.xlu0 %3928
    %v3930 = vsel %vm69, %v3925, 0.0
    %3931 = vadd.xlane.f32.xlu0 %v3930
    %v3932 = vpop.xlane.xlu0 %3931
    %v3933 = vmul.f32 %v3929, %v1723
    %v3934 = vmul.f32 %v3932, %v1723
    %v3935 = vsub.f32 %v3924, %v3933
    %v3936 = vsub.f32 %v3925, %v3934
    %v3937 = vmul.f32 %v3935, %v3935
    %v3938 = vmul.f32 %v3936, %v3936
    %v3939 = vsel %vm69, %v3937, 0.0
    %3940 = vadd.xlane.f32.xlu0 %v3939
    %v3941 = vpop.xlane.xlu0 %3940
    %v3942 = vsel %vm69, %v3938, 0.0
    %3943 = vadd.xlane.f32.xlu0 %v3942
    %v3944 = vpop.xlane.xlu0 %3943
    %v3945 = vmul.f32 %v3941, %v1723
    %v3946 = vmul.f32 %v3944, %v1723
    %v3947 = vadd.f32 %v3945, 1e-05
    %v3948 = vadd.f32 %v3946, 1e-05
    %v3949 = vrsqrt.pop %v3947
    %v3950 = vrsqrt.pop %v3948
    %v3951 = vmul.f32 %v3935, %v3949
    %v3952 = vmul.f32 %v3936, %v3950
    %v3953 = vlaneseq
    %v3954 = vshrl.u32 %v3953, 7
    %v3955 = vsub.s32 0, %v3954
    %v3956 = vrot.slane %v3926, %v3955
    %v3957 = vmul.f32 %v3951, %v3956
    %v3958 = vmul.f32 %v3952, %v3956
    %v3959 = vlaneseq
    %v3960 = vshrl.u32 %v3959, 7
    %v3961 = vsub.s32 1, %v3960
    %v3962 = vrot.slane %v3926, %v3961
    %v3963 = vadd.f32 %v3957, %v3962
    %v3964 = vadd.f32 %v3958, %v3962
    %3965 = vst.msk [vmem:[#allocation5] sm:$0xff] %vm69, %v3963
    %3966 = vst.msk [vmem:[#allocation5 + $0x8] sm:$0xff] %vm69, %v3964
    // Predicated region
    $region34: #{tpu_custom_call.1} parent=1 // pred_check
      _
    $region35: #{tpu_custom_call.1} parent=1 // pred_check_branch
      %3968 = sbr.rel (0) target = $region37
    $region36: #{tpu_custom_call.1} parent=1 // pred_region
      %s3970 = ssub.s32 256, 256
      %3971 = vsyncadd [#allocation4], %s3970
      %s3972 = sshll.u32 [#allocation5], 4
      %s3973 = int_to_ptr.vmem [resolvable:$true] %s3972
      %3978 = dma.vmem_to_hbm [thread:$0]  %s3973, 256, %s7, [#allocation4], 128, 128, 8
    $region37: #{tpu_custom_call.1} parent=1 // pred_fallthru
      _
    // Predicated region
    $region38: #{tpu_custom_call.1} parent=1 // pred_check
      _
    $region39: #{tpu_custom_call.1} parent=1 // pred_check_branch
      %3980 = sbr.rel (0) target = $region41
    $region40: #{tpu_custom_call.1} parent=1 // pred_region
      %3981 = dma.done [#allocation4], 256
    $region41: #{tpu_custom_call.1} parent=1 // pred_fallthru
      _
    %3982 = vsyncpa [#allocation3], 1
    %3983 = vsyncpa [#allocation4], 1

</llo_original>
